<compile_context>
chip_gen: v7x
topology: tpu7x:2x2x1
jax: 0.10.0
libtpu: 0.0.40
codegen_flags: <defaults>
</compile_context>

<pallas_src>
import math

import jax
import jax.numpy as jnp
from jax.experimental import pallas as pl
from jax.experimental.pallas import tpu as pltpu

# ---------------- small synthetic BERT config ----------------
VOCAB = 100
TYPE_VOCAB = 2
MAX_POS = 32
HIDDEN = 32
NUM_HEADS = 4
HEAD_DIM = HIDDEN // NUM_HEADS
INTERMEDIATE = 64
NUM_LAYERS = 2
N_CLASSES = 3
LN_EPS = 1e-12
LOGIT_PAD = 128                      # lane-dense classifier output width

MM_DTYPE = jnp.bfloat16              # MXU operand dtype (accumulate in f32)


def _ln(x, g, b):
    mu = jnp.mean(x, axis=-1, keepdims=True)
    var = jnp.mean((x - mu) ** 2, axis=-1, keepdims=True)
    return (x - mu) * jax.lax.rsqrt(var + LN_EPS) * g + b


def _mm(a, b):
    # 2-D matmul, bf16 operands, f32 accumulation.
    return jnp.dot(a.astype(MM_DTYPE), b.astype(MM_DTYPE),
                   preferred_element_type=jnp.float32)


def _bmm(eq, a, b):
    # batched (leading-dim) matmul via einsum, bf16 operands, f32 accumulation.
    return jnp.einsum(eq, a.astype(MM_DTYPE), b.astype(MM_DTYPE),
                      preferred_element_type=jnp.float32)


# ---------------- the fused kernel (one grid step == one sequence) ----------------
def fused_bert_kernel(x_ref, mask_ref, emb_g_ref, emb_b_ref,
                      wq_ref, bq_ref, wk_ref, bk_ref, wv_ref, bv_ref,
                      wo_ref, bo_ref, ln1g_ref, ln1b_ref,
                      wi_ref, bi_ref, wf_ref, bf_ref, ln2g_ref, ln2b_ref,
                      wp_ref, bp_ref, wc_ref, bc_ref,
                      out_ref):
    S = x_ref.shape[1]

    x = x_ref[0].astype(jnp.float32)                       # [S, H]
    x = _ln(x, emb_g_ref[...], emb_b_ref[...])             # embedding LayerNorm

    # HF-style additive attention mask, built in-kernel: 0 keep, -10000 masked.
    bias = (1.0 - mask_ref[0].astype(jnp.float32)) * -10000.0   # [1, S]

    scale = 1.0 / math.sqrt(HEAD_DIM)

    for l in range(NUM_LAYERS):                            # static unroll (L=2)
        # ---- self-attention, all heads batched on the leading axis ----
        x_b = jnp.broadcast_to(x, (NUM_HEADS, S, HIDDEN))  # cheap leading-dim bcast
        q = _bmm('nsh,nhd->nsd', x_b, wq_ref[l]) + bq_ref[l]   # [NH, S, HD]
        k = _bmm('nsh,nhd->nsd', x_b, wk_ref[l]) + bk_ref[l]
        v = _bmm('nsh,nhd->nsd', x_b, wv_ref[l]) + bv_ref[l]

        s = _bmm('nqd,nkd->nqk', q, k) * scale             # [NH, S, S]
        s = s + bias                                       # mask over keys
        s = s - jnp.max(s, axis=-1, keepdims=True)
        p = jnp.exp(s)
        p = p * pl.reciprocal(jnp.sum(p, axis=-1, keepdims=True), approx=True)

        ctx = _bmm('nqk,nkd->nqd', p, v)                   # [NH, S, HD]
        proj = _bmm('nqd,ndh->nqh', ctx, wo_ref[l])        # [NH, S, H]
        attn = proj[0]                                     # sum heads (3 adds)
        for h in range(1, NUM_HEADS):
            attn = attn + proj[h]
        attn = attn + bo_ref[l]

        x = _ln(x + attn, ln1g_ref[l], ln1b_ref[l])

        # ---- feed-forward ----
        hmid = _mm(x, wi_ref[l]) + bi_ref[l]
        # TODO(synk): HF BERT uses exact (erf) GELU; tanh approximation used here.
        hmid = jax.nn.gelu(hmid, approximate=True)
        ffn = _mm(hmid, wf_ref[l]) + bf_ref[l]
        x = _ln(x + ffn, ln2g_ref[l], ln2b_ref[l])

    # ---- pooler (token 0) + classifier, lane-dense padded logits ----
    cls = x[0:1, :]                                        # [1, H]
    pooled = jnp.tanh(_mm(cls, wp_ref[...]) + bp_ref[...]) # [1, H]
    logits = _mm(pooled, wc_ref[...]) + bc_ref[...]        # [1, LOGIT_PAD]
    out_ref[0] = logits.astype(out_ref.dtype)


# ---------------- pallas_call wrapper / forward ----------------
def _full_spec(a):
    nd = a.ndim
    return pl.BlockSpec(a.shape, lambda i, _nd=nd: (0,) * _nd)


def covid_twitter_bert_classifier_forward(params, input_ids, token_type_ids, input_mask):
    B, S = input_ids.shape
    positions = jnp.arange(S, dtype=jnp.int32)
    # Embedding gathers stay in plain JAX (no efficient Pallas gather needed here).
    x = (params["word_emb"][input_ids]
         + params["pos_emb"][positions][None, :, :]
         + params["type_emb"][token_type_ids])             # [B, S, H]
    mask = input_mask.astype(jnp.float32).reshape(B, 1, S)

    L = NUM_LAYERS

    def stack(key):
        return jnp.stack([lp[key] for lp in params["layers"]], axis=0)

    # Head-major weight layouts built once in the wrapper (trace-time, no kernel cost).
    wq = stack("wq").reshape(L, HIDDEN, NUM_HEADS, HEAD_DIM).transpose(0, 2, 1, 3)
    wk = stack("wk").reshape(L, HIDDEN, NUM_HEADS, HEAD_DIM).transpose(0, 2, 1, 3)
    wv = stack("wv").reshape(L, HIDDEN, NUM_HEADS, HEAD_DIM).transpose(0, 2, 1, 3)
    wo = stack("wo").reshape(L, NUM_HEADS, HEAD_DIM, HIDDEN)
    bq = stack("bq").reshape(L, NUM_HEADS, 1, HEAD_DIM)
    bk = stack("bk").reshape(L, NUM_HEADS, 1, HEAD_DIM)
    bv = stack("bv").reshape(L, NUM_HEADS, 1, HEAD_DIM)
    bo = stack("bo")
    ln1g, ln1b = stack("ln1_g"), stack("ln1_b")
    wi, bi = stack("wi"), stack("bi")
    wf, bf = stack("wf"), stack("bf")
    ln2g, ln2b = stack("ln2_g"), stack("ln2_b")

    # Lane-dense classifier weights: pad out-features to 128.
    wc_pad = jnp.zeros((HIDDEN, LOGIT_PAD), jnp.float32).at[:, :N_CLASSES].set(params["cls_w"])
    bc_pad = jnp.zeros((1, LOGIT_PAD), jnp.float32).at[:, :N_CLASSES].set(params["cls_b"])

    operands = [x, mask, params["emb_ln_g"], params["emb_ln_b"],
                wq, bq, wk, bk, wv, bv, wo, bo, ln1g, ln1b,
                wi, bi, wf, bf, ln2g, ln2b,
                params["pool_w"], params["pool_b"], wc_pad, bc_pad]

    in_specs = ([pl.BlockSpec((1, S, HIDDEN), lambda i: (i, 0, 0)),
                 pl.BlockSpec((1, 1, S), lambda i: (i, 0, 0))]
                + [_full_spec(w) for w in operands[2:]])

    out = pl.pallas_call(
        fused_bert_kernel,
        out_shape=jax.ShapeDtypeStruct((B, 1, LOGIT_PAD), jnp.float32),
        grid=(B,),
        in_specs=in_specs,
        out_specs=pl.BlockSpec((1, 1, LOGIT_PAD), lambda i: (i, 0, 0)),
        compiler_params=pltpu.CompilerParams(dimension_semantics=("parallel",)),
    )(*operands)
    return out[:, 0, :N_CLASSES]


# ---------------- deterministic synthetic parameters ----------------
def init_params(key):
    def dense(k, shape, scale=0.02):
        return (scale * jax.random.normal(k, shape)).astype(jnp.float32)

    keys = jax.random.split(key, 8 + NUM_LAYERS)
    params = {
        "word_emb": dense(keys[0], (VOCAB, HIDDEN)),
        "pos_emb": dense(keys[1], (MAX_POS, HIDDEN)),
        "type_emb": dense(keys[2], (TYPE_VOCAB, HIDDEN)),
        "emb_ln_g": jnp.ones((1, HIDDEN), jnp.float32),
        "emb_ln_b": jnp.zeros((1, HIDDEN), jnp.float32),
        "pool_w": dense(keys[3], (HIDDEN, HIDDEN)),
        "pool_b": jnp.zeros((1, HIDDEN), jnp.float32),
        "cls_w": dense(keys[4], (HIDDEN, N_CLASSES)),
        "cls_b": jnp.zeros((1, N_CLASSES), jnp.float32),
        "layers": [],
    }
    for l in range(NUM_LAYERS):
        ks = jax.random.split(keys[8 + l], 6)
        params["layers"].append({
            "wq": dense(ks[0], (HIDDEN, HIDDEN)), "bq": jnp.zeros((1, HIDDEN), jnp.float32),
            "wk": dense(ks[1], (HIDDEN, HIDDEN)), "bk": jnp.zeros((1, HIDDEN), jnp.float32),
            "wv": dense(ks[2], (HIDDEN, HIDDEN)), "bv": jnp.zeros((1, HIDDEN), jnp.float32),
            "wo": dense(ks[3], (HIDDEN, HIDDEN)), "bo": jnp.zeros((1, HIDDEN), jnp.float32),
            "ln1_g": jnp.ones((1, HIDDEN), jnp.float32),
            "ln1_b": jnp.zeros((1, HIDDEN), jnp.float32),
            "wi": dense(ks[4], (HIDDEN, INTERMEDIATE)),
            "bi": jnp.zeros((1, INTERMEDIATE), jnp.float32),
            "wf": dense(ks[5], (INTERMEDIATE, HIDDEN)),
            "bf": jnp.zeros((1, HIDDEN), jnp.float32),
            "ln2_g": jnp.ones((1, HIDDEN), jnp.float32),
            "ln2_b": jnp.zeros((1, HIDDEN), jnp.float32),
        })
    return params


if __name__ == "__main__":
    B, S = 2, 8
    key = jax.random.PRNGKey(0)
    pkey, ikey = jax.random.split(key)
    params = init_params(pkey)

    input_ids = jax.random.randint(ikey, (B, S), 0, VOCAB, dtype=jnp.int32)
    token_type_ids = jnp.zeros((B, S), jnp.int32)
    input_mask = jnp.ones((B, S), jnp.int32)

    fwd = jax.jit(covid_twitter_bert_classifier_forward)
    logits = fwd(params, input_ids, token_type_ids, input_mask)
    jax.block_until_ready(logits)
    assert logits.shape == (B, N_CLASSES), logits.shape
    print("KERNEL_OK")
</pallas_src>

<mosaic_0001>
module attributes {stable_mosaic.version = 11 : i64} {
  func.func @fused_bert_kernel(%arg0: i32, %arg1: memref<1x8x32xf32, #tpu.memory_space<vmem>>, %arg2: memref<1x1x8xf32, #tpu.memory_space<vmem>>, %arg3: memref<1x32xf32, #tpu.memory_space<vmem>>, %arg4: memref<1x32xf32, #tpu.memory_space<vmem>>, %arg5: memref<2x4x32x8xf32, #tpu.memory_space<vmem>>, %arg6: memref<2x4x1x8xf32, #tpu.memory_space<vmem>>, %arg7: memref<2x4x32x8xf32, #tpu.memory_space<vmem>>, %arg8: memref<2x4x1x8xf32, #tpu.memory_space<vmem>>, %arg9: memref<2x4x32x8xf32, #tpu.memory_space<vmem>>, %arg10: memref<2x4x1x8xf32, #tpu.memory_space<vmem>>, %arg11: memref<2x4x8x32xf32, #tpu.memory_space<vmem>>, %arg12: memref<2x1x32xf32, #tpu.memory_space<vmem>>, %arg13: memref<2x1x32xf32, #tpu.memory_space<vmem>>, %arg14: memref<2x1x32xf32, #tpu.memory_space<vmem>>, %arg15: memref<2x32x64xf32, #tpu.memory_space<vmem>>, %arg16: memref<2x1x64xf32, #tpu.memory_space<vmem>>, %arg17: memref<2x64x32xf32, #tpu.memory_space<vmem>>, %arg18: memref<2x1x32xf32, #tpu.memory_space<vmem>>, %arg19: memref<2x1x32xf32, #tpu.memory_space<vmem>>, %arg20: memref<2x1x32xf32, #tpu.memory_space<vmem>>, %arg21: memref<32x32xf32, #tpu.memory_space<vmem>>, %arg22: memref<1x32xf32, #tpu.memory_space<vmem>>, %arg23: memref<32x128xf32, #tpu.memory_space<vmem>>, %arg24: memref<1x128xf32, #tpu.memory_space<vmem>>, %arg25: memref<1x1x128xf32, #tpu.memory_space<vmem>>) attributes {dimension_semantics = [#tpu.dimension_semantics<parallel>], iteration_bounds = array<i64: 2>, scalar_prefetch = 0 : i64, scratch_operands = 0 : i64, tpu.core_type = #tpu.core_type<tc>, window_params = [{transform_indices = @transform_0, window_bounds = array<i64: 1, 8, 32>}, {transform_indices = @transform_1, window_bounds = array<i64: 1, 1, 8>}, {pipeline_mode = #tpu.pipeline_mode<synchronous>, transform_indices = @transform_2, window_bounds = array<i64: 1, 32>}, {pipeline_mode = #tpu.pipeline_mode<synchronous>, transform_indices = @transform_3, window_bounds = array<i64: 1, 32>}, {pipeline_mode = #tpu.pipeline_mode<synchronous>, transform_indices = @transform_4, window_bounds = array<i64: 2, 4, 32, 8>}, {pipeline_mode = #tpu.pipeline_mode<synchronous>, transform_indices = @transform_5, window_bounds = array<i64: 2, 4, 1, 8>}, {pipeline_mode = #tpu.pipeline_mode<synchronous>, transform_indices = @transform_6, window_bounds = array<i64: 2, 4, 32, 8>}, {pipeline_mode = #tpu.pipeline_mode<synchronous>, transform_indices = @transform_7, window_bounds = array<i64: 2, 4, 1, 8>}, {pipeline_mode = #tpu.pipeline_mode<synchronous>, transform_indices = @transform_8, window_bounds = array<i64: 2, 4, 32, 8>}, {pipeline_mode = #tpu.pipeline_mode<synchronous>, transform_indices = @transform_9, window_bounds = array<i64: 2, 4, 1, 8>}, {pipeline_mode = #tpu.pipeline_mode<synchronous>, transform_indices = @transform_10, window_bounds = array<i64: 2, 4, 8, 32>}, {pipeline_mode = #tpu.pipeline_mode<synchronous>, transform_indices = @transform_11, window_bounds = array<i64: 2, 1, 32>}, {pipeline_mode = #tpu.pipeline_mode<synchronous>, transform_indices = @transform_12, window_bounds = array<i64: 2, 1, 32>}, {pipeline_mode = #tpu.pipeline_mode<synchronous>, transform_indices = @transform_13, window_bounds = array<i64: 2, 1, 32>}, {pipeline_mode = #tpu.pipeline_mode<synchronous>, transform_indices = @transform_14, window_bounds = array<i64: 2, 32, 64>}, {pipeline_mode = #tpu.pipeline_mode<synchronous>, transform_indices = @transform_15, window_bounds = array<i64: 2, 1, 64>}, {pipeline_mode = #tpu.pipeline_mode<synchronous>, transform_indices = @transform_16, window_bounds = array<i64: 2, 64, 32>}, {pipeline_mode = #tpu.pipeline_mode<synchronous>, transform_indices = @transform_17, window_bounds = array<i64: 2, 1, 32>}, {pipeline_mode = #tpu.pipeline_mode<synchronous>, transform_indices = @transform_18, window_bounds = array<i64: 2, 1, 32>}, {pipeline_mode = #tpu.pipeline_mode<synchronous>, transform_indices = @transform_19, window_bounds = array<i64: 2, 1, 32>}, {pipeline_mode = #tpu.pipeline_mode<synchronous>, transform_indices = @transform_20, window_bounds = array<i64: 32, 32>}, {pipeline_mode = #tpu.pipeline_mode<synchronous>, transform_indices = @transform_21, window_bounds = array<i64: 1, 32>}, {pipeline_mode = #tpu.pipeline_mode<synchronous>, transform_indices = @transform_22, window_bounds = array<i64: 32, 128>}, {pipeline_mode = #tpu.pipeline_mode<synchronous>, transform_indices = @transform_23, window_bounds = array<i64: 1, 128>}, {transform_indices = @transform_24, window_bounds = array<i64: 1, 1, 128>}]} {
    %c0 = arith.constant 0 : index
    %c0_0 = arith.constant 0 : index
    %c0_1 = arith.constant 0 : index
    %0 = vector.load %arg1[%c0, %c0_0, %c0_1] : memref<1x8x32xf32, #tpu.memory_space<vmem>>, vector<1x8x32xf32>
    %1 = vector.shape_cast %0 : vector<1x8x32xf32> to vector<8x32xf32>
    %c0_2 = arith.constant 0 : index
    %c0_3 = arith.constant 0 : index
    %2 = vector.load %arg3[%c0_2, %c0_3] : memref<1x32xf32, #tpu.memory_space<vmem>>, vector<1x32xf32>
    %c0_4 = arith.constant 0 : index
    %c0_5 = arith.constant 0 : index
    %3 = vector.load %arg4[%c0_4, %c0_5] : memref<1x32xf32, #tpu.memory_space<vmem>>, vector<1x32xf32>
    %cst = arith.constant dense<0.000000e+00> : vector<8xf32>
    %4 = vector.multi_reduction <add>, %1, %cst [1] : vector<8x32xf32> to vector<8xf32>
    %5 = vector.shape_cast %4 : vector<8xf32> to vector<8x1xf32>
    %cst_6 = arith.constant 3.200000e+01 : f32
    %6 = vector.broadcast %cst_6 : f32 to vector<8x1xf32>
    %7 = arith.divf %5, %6 : vector<8x1xf32>
    %8 = vector.broadcast %7 : vector<8x1xf32> to vector<8x32xf32>
    %9 = arith.subf %1, %8 : vector<8x32xf32>
    %10 = arith.mulf %9, %9 : vector<8x32xf32>
    %cst_7 = arith.constant dense<0.000000e+00> : vector<8xf32>
    %11 = vector.multi_reduction <add>, %10, %cst_7 [1] : vector<8x32xf32> to vector<8xf32>
    %12 = vector.shape_cast %11 : vector<8xf32> to vector<8x1xf32>
    %cst_8 = arith.constant 3.200000e+01 : f32
    %13 = vector.broadcast %cst_8 : f32 to vector<8x1xf32>
    %14 = arith.divf %12, %13 : vector<8x1xf32>
    %15 = vector.broadcast %7 : vector<8x1xf32> to vector<8x32xf32>
    %16 = arith.subf %1, %15 : vector<8x32xf32>
    %cst_9 = arith.constant 9.99999996E-13 : f32
    %17 = vector.broadcast %cst_9 : f32 to vector<8x1xf32>
    %18 = arith.addf %14, %17 : vector<8x1xf32>
    %19 = math.rsqrt %18 : vector<8x1xf32>
    %20 = vector.broadcast %19 : vector<8x1xf32> to vector<8x32xf32>
    %21 = arith.mulf %16, %20 : vector<8x32xf32>
    %22 = vector.broadcast %2 : vector<1x32xf32> to vector<8x32xf32>
    %23 = arith.mulf %21, %22 : vector<8x32xf32>
    %24 = vector.broadcast %3 : vector<1x32xf32> to vector<8x32xf32>
    %25 = arith.addf %23, %24 : vector<8x32xf32>
    %c0_10 = arith.constant 0 : index
    %c0_11 = arith.constant 0 : index
    %c0_12 = arith.constant 0 : index
    %26 = vector.load %arg2[%c0_10, %c0_11, %c0_12] : memref<1x1x8xf32, #tpu.memory_space<vmem>>, vector<1x1x8xf32>
    %27 = vector.shape_cast %26 : vector<1x1x8xf32> to vector<1x8xf32>
    %cst_13 = arith.constant 1.000000e+00 : f32
    %28 = vector.broadcast %cst_13 : f32 to vector<1x8xf32>
    %29 = arith.subf %28, %27 : vector<1x8xf32>
    %cst_14 = arith.constant -1.000000e+04 : f32
    %30 = vector.broadcast %cst_14 : f32 to vector<1x8xf32>
    %31 = arith.mulf %29, %30 : vector<1x8xf32>
    %32 = vector.shape_cast %25 : vector<8x32xf32> to vector<1x8x32xf32>
    %33 = vector.broadcast %32 : vector<1x8x32xf32> to vector<4x8x32xf32>
    %c0_15 = arith.constant 0 : index
    %c0_16 = arith.constant 0 : index
    %c0_17 = arith.constant 0 : index
    %c0_18 = arith.constant 0 : index
    %34 = vector.load %arg5[%c0_15, %c0_16, %c0_17, %c0_18] : memref<2x4x32x8xf32, #tpu.memory_space<vmem>>, vector<1x4x32x8xf32>
    %35 = vector.shape_cast %34 : vector<1x4x32x8xf32> to vector<4x32x8xf32>
    %36 = arith.truncf %33 : vector<4x8x32xf32> to vector<4x8x32xbf16>
    %37 = arith.truncf %35 : vector<4x32x8xf32> to vector<4x32x8xbf16>
    "tpu.trace_start"() <{level = 10 : i32, message = "nsh,nhd->nsd"}> : () -> ()
    %cst_19 = arith.constant dense<0.000000e+00> : vector<4x8x8xf32>
    %38 = tpu.matmul %36, %37, %cst_19 {dimension_numbers = #tpu.dot_dimension_numbers<[2], [1], [1], [2], [0, 0, 0, 1, 1, 2], [0], [0]>} : vector<4x8x32xbf16>, vector<4x32x8xbf16>, vector<4x8x8xf32> -> vector<4x8x8xf32>
    "tpu.trace_stop"() : () -> ()
    %c0_20 = arith.constant 0 : index
    %c0_21 = arith.constant 0 : index
    %c0_22 = arith.constant 0 : index
    %c0_23 = arith.constant 0 : index
    %39 = vector.load %arg6[%c0_20, %c0_21, %c0_22, %c0_23] : memref<2x4x1x8xf32, #tpu.memory_space<vmem>>, vector<1x4x1x8xf32>
    %40 = vector.shape_cast %39 : vector<1x4x1x8xf32> to vector<4x1x8xf32>
    %41 = vector.broadcast %40 : vector<4x1x8xf32> to vector<4x8x8xf32>
    %42 = arith.addf %38, %41 : vector<4x8x8xf32>
    %c0_24 = arith.constant 0 : index
    %c0_25 = arith.constant 0 : index
    %c0_26 = arith.constant 0 : index
    %c0_27 = arith.constant 0 : index
    %43 = vector.load %arg7[%c0_24, %c0_25, %c0_26, %c0_27] : memref<2x4x32x8xf32, #tpu.memory_space<vmem>>, vector<1x4x32x8xf32>
    %44 = vector.shape_cast %43 : vector<1x4x32x8xf32> to vector<4x32x8xf32>
    %45 = arith.truncf %33 : vector<4x8x32xf32> to vector<4x8x32xbf16>
    %46 = arith.truncf %44 : vector<4x32x8xf32> to vector<4x32x8xbf16>
    "tpu.trace_start"() <{level = 10 : i32, message = "nsh,nhd->nsd"}> : () -> ()
    %cst_28 = arith.constant dense<0.000000e+00> : vector<4x8x8xf32>
    %47 = tpu.matmul %45, %46, %cst_28 {dimension_numbers = #tpu.dot_dimension_numbers<[2], [1], [1], [2], [0, 0, 0, 1, 1, 2], [0], [0]>} : vector<4x8x32xbf16>, vector<4x32x8xbf16>, vector<4x8x8xf32> -> vector<4x8x8xf32>
    "tpu.trace_stop"() : () -> ()
    %c0_29 = arith.constant 0 : index
    %c0_30 = arith.constant 0 : index
    %c0_31 = arith.constant 0 : index
    %c0_32 = arith.constant 0 : index
    %48 = vector.load %arg8[%c0_29, %c0_30, %c0_31, %c0_32] : memref<2x4x1x8xf32, #tpu.memory_space<vmem>>, vector<1x4x1x8xf32>
    %49 = vector.shape_cast %48 : vector<1x4x1x8xf32> to vector<4x1x8xf32>
    %50 = vector.broadcast %49 : vector<4x1x8xf32> to vector<4x8x8xf32>
    %51 = arith.addf %47, %50 : vector<4x8x8xf32>
    %c0_33 = arith.constant 0 : index
    %c0_34 = arith.constant 0 : index
    %c0_35 = arith.constant 0 : index
    %c0_36 = arith.constant 0 : index
    %52 = vector.load %arg9[%c0_33, %c0_34, %c0_35, %c0_36] : memref<2x4x32x8xf32, #tpu.memory_space<vmem>>, vector<1x4x32x8xf32>
    %53 = vector.shape_cast %52 : vector<1x4x32x8xf32> to vector<4x32x8xf32>
    %54 = arith.truncf %33 : vector<4x8x32xf32> to vector<4x8x32xbf16>
    %55 = arith.truncf %53 : vector<4x32x8xf32> to vector<4x32x8xbf16>
    "tpu.trace_start"() <{level = 10 : i32, message = "nsh,nhd->nsd"}> : () -> ()
    %cst_37 = arith.constant dense<0.000000e+00> : vector<4x8x8xf32>
    %56 = tpu.matmul %54, %55, %cst_37 {dimension_numbers = #tpu.dot_dimension_numbers<[2], [1], [1], [2], [0, 0, 0, 1, 1, 2], [0], [0]>} : vector<4x8x32xbf16>, vector<4x32x8xbf16>, vector<4x8x8xf32> -> vector<4x8x8xf32>
    "tpu.trace_stop"() : () -> ()
    %c0_38 = arith.constant 0 : index
    %c0_39 = arith.constant 0 : index
    %c0_40 = arith.constant 0 : index
    %c0_41 = arith.constant 0 : index
    %57 = vector.load %arg10[%c0_38, %c0_39, %c0_40, %c0_41] : memref<2x4x1x8xf32, #tpu.memory_space<vmem>>, vector<1x4x1x8xf32>
    %58 = vector.shape_cast %57 : vector<1x4x1x8xf32> to vector<4x1x8xf32>
    %59 = vector.broadcast %58 : vector<4x1x8xf32> to vector<4x8x8xf32>
    %60 = arith.addf %56, %59 : vector<4x8x8xf32>
    %61 = arith.truncf %42 : vector<4x8x8xf32> to vector<4x8x8xbf16>
    %62 = arith.truncf %51 : vector<4x8x8xf32> to vector<4x8x8xbf16>
    "tpu.trace_start"() <{level = 10 : i32, message = "nqd,nkd->nqk"}> : () -> ()
    %cst_42 = arith.constant dense<0.000000e+00> : vector<4x8x8xf32>
    %63 = tpu.matmul %61, %62, %cst_42 {dimension_numbers = #tpu.dot_dimension_numbers<[2], [2], [1], [1], [0, 0, 0, 1, 1, 1], [0], [0]>} : vector<4x8x8xbf16>, vector<4x8x8xbf16>, vector<4x8x8xf32> -> vector<4x8x8xf32>
    "tpu.trace_stop"() : () -> ()
    %cst_43 = arith.constant 0.353553385 : f32
    %64 = vector.broadcast %cst_43 : f32 to vector<4x8x8xf32>
    %65 = arith.mulf %63, %64 : vector<4x8x8xf32>
    %66 = vector.shape_cast %31 : vector<1x8xf32> to vector<1x1x8xf32>
    %67 = vector.broadcast %66 : vector<1x1x8xf32> to vector<4x8x8xf32>
    %68 = arith.addf %65, %67 : vector<4x8x8xf32>
    %cst_44 = arith.constant dense<0xFF800000> : vector<4x8xf32>
    %69 = vector.multi_reduction <maximumf>, %68, %cst_44 [2] : vector<4x8x8xf32> to vector<4x8xf32>
    %70 = vector.shape_cast %69 : vector<4x8xf32> to vector<4x8x1xf32>
    %71 = vector.broadcast %70 : vector<4x8x1xf32> to vector<4x8x8xf32>
    %72 = arith.subf %68, %71 : vector<4x8x8xf32>
    %73 = math.exp %72 : vector<4x8x8xf32>
    %cst_45 = arith.constant dense<0.000000e+00> : vector<4x8xf32>
    %74 = vector.multi_reduction <add>, %73, %cst_45 [2] : vector<4x8x8xf32> to vector<4x8xf32>
    %75 = vector.shape_cast %74 : vector<4x8xf32> to vector<4x8x1xf32>
    %76 = tpu.reciprocal %75 {approx = true} : vector<4x8x1xf32> -> vector<4x8x1xf32>
    %77 = vector.broadcast %76 : vector<4x8x1xf32> to vector<4x8x8xf32>
    %78 = arith.mulf %73, %77 : vector<4x8x8xf32>
    %79 = arith.truncf %78 : vector<4x8x8xf32> to vector<4x8x8xbf16>
    %80 = arith.truncf %60 : vector<4x8x8xf32> to vector<4x8x8xbf16>
    "tpu.trace_start"() <{level = 10 : i32, message = "nqk,nkd->nqd"}> : () -> ()
    %cst_46 = arith.constant dense<0.000000e+00> : vector<4x8x8xf32>
    %81 = tpu.matmul %79, %80, %cst_46 {dimension_numbers = #tpu.dot_dimension_numbers<[2], [1], [1], [2], [0, 0, 0, 1, 1, 2], [0], [0]>} : vector<4x8x8xbf16>, vector<4x8x8xbf16>, vector<4x8x8xf32> -> vector<4x8x8xf32>
    "tpu.trace_stop"() : () -> ()
    %c0_47 = arith.constant 0 : index
    %c0_48 = arith.constant 0 : index
    %c0_49 = arith.constant 0 : index
    %c0_50 = arith.constant 0 : index
    %82 = vector.load %arg11[%c0_47, %c0_48, %c0_49, %c0_50] : memref<2x4x8x32xf32, #tpu.memory_space<vmem>>, vector<1x4x8x32xf32>
    %83 = vector.shape_cast %82 : vector<1x4x8x32xf32> to vector<4x8x32xf32>
    %84 = arith.truncf %81 : vector<4x8x8xf32> to vector<4x8x8xbf16>
    %85 = arith.truncf %83 : vector<4x8x32xf32> to vector<4x8x32xbf16>
    "tpu.trace_start"() <{level = 10 : i32, message = "nqd,ndh->nqh"}> : () -> ()
    %cst_51 = arith.constant dense<0.000000e+00> : vector<4x8x32xf32>
    %86 = tpu.matmul %84, %85, %cst_51 {dimension_numbers = #tpu.dot_dimension_numbers<[2], [1], [1], [2], [0, 0, 0, 1, 1, 2], [0], [0]>} : vector<4x8x8xbf16>, vector<4x8x32xbf16>, vector<4x8x32xf32> -> vector<4x8x32xf32>
    "tpu.trace_stop"() : () -> ()
    %87 = vector.extract_strided_slice %86 {offsets = [0, 0, 0], sizes = [1, 8, 32], strides = [1, 1, 1]} : vector<4x8x32xf32> to vector<1x8x32xf32>
    %88 = vector.shape_cast %87 : vector<1x8x32xf32> to vector<8x32xf32>
    %89 = vector.extract_strided_slice %86 {offsets = [1, 0, 0], sizes = [1, 8, 32], strides = [1, 1, 1]} : vector<4x8x32xf32> to vector<1x8x32xf32>
    %90 = vector.shape_cast %89 : vector<1x8x32xf32> to vector<8x32xf32>
    %91 = arith.addf %88, %90 : vector<8x32xf32>
    %92 = vector.extract_strided_slice %86 {offsets = [2, 0, 0], sizes = [1, 8, 32], strides = [1, 1, 1]} : vector<4x8x32xf32> to vector<1x8x32xf32>
    %93 = vector.shape_cast %92 : vector<1x8x32xf32> to vector<8x32xf32>
    %94 = arith.addf %91, %93 : vector<8x32xf32>
    %95 = vector.extract_strided_slice %86 {offsets = [3, 0, 0], sizes = [1, 8, 32], strides = [1, 1, 1]} : vector<4x8x32xf32> to vector<1x8x32xf32>
    %96 = vector.shape_cast %95 : vector<1x8x32xf32> to vector<8x32xf32>
    %97 = arith.addf %94, %96 : vector<8x32xf32>
    %c0_52 = arith.constant 0 : index
    %c0_53 = arith.constant 0 : index
    %c0_54 = arith.constant 0 : index
    %98 = vector.load %arg12[%c0_52, %c0_53, %c0_54] : memref<2x1x32xf32, #tpu.memory_space<vmem>>, vector<1x1x32xf32>
    %99 = vector.shape_cast %98 : vector<1x1x32xf32> to vector<1x32xf32>
    %100 = vector.broadcast %99 : vector<1x32xf32> to vector<8x32xf32>
    %101 = arith.addf %97, %100 : vector<8x32xf32>
    %102 = arith.addf %25, %101 : vector<8x32xf32>
    %c0_55 = arith.constant 0 : index
    %c0_56 = arith.constant 0 : index
    %c0_57 = arith.constant 0 : index
    %103 = vector.load %arg13[%c0_55, %c0_56, %c0_57] : memref<2x1x32xf32, #tpu.memory_space<vmem>>, vector<1x1x32xf32>
    %104 = vector.shape_cast %103 : vector<1x1x32xf32> to vector<1x32xf32>
    %c0_58 = arith.constant 0 : index
    %c0_59 = arith.constant 0 : index
    %c0_60 = arith.constant 0 : index
    %105 = vector.load %arg14[%c0_58, %c0_59, %c0_60] : memref<2x1x32xf32, #tpu.memory_space<vmem>>, vector<1x1x32xf32>
    %106 = vector.shape_cast %105 : vector<1x1x32xf32> to vector<1x32xf32>
    %cst_61 = arith.constant dense<0.000000e+00> : vector<8xf32>
    %107 = vector.multi_reduction <add>, %102, %cst_61 [1] : vector<8x32xf32> to vector<8xf32>
    %108 = vector.shape_cast %107 : vector<8xf32> to vector<8x1xf32>
    %cst_62 = arith.constant 3.200000e+01 : f32
    %109 = vector.broadcast %cst_62 : f32 to vector<8x1xf32>
    %110 = arith.divf %108, %109 : vector<8x1xf32>
    %111 = vector.broadcast %110 : vector<8x1xf32> to vector<8x32xf32>
    %112 = arith.subf %102, %111 : vector<8x32xf32>
    %113 = arith.mulf %112, %112 : vector<8x32xf32>
    %cst_63 = arith.constant dense<0.000000e+00> : vector<8xf32>
    %114 = vector.multi_reduction <add>, %113, %cst_63 [1] : vector<8x32xf32> to vector<8xf32>
    %115 = vector.shape_cast %114 : vector<8xf32> to vector<8x1xf32>
    %cst_64 = arith.constant 3.200000e+01 : f32
    %116 = vector.broadcast %cst_64 : f32 to vector<8x1xf32>
    %117 = arith.divf %115, %116 : vector<8x1xf32>
    %118 = vector.broadcast %110 : vector<8x1xf32> to vector<8x32xf32>
    %119 = arith.subf %102, %118 : vector<8x32xf32>
    %cst_65 = arith.constant 9.99999996E-13 : f32
    %120 = vector.broadcast %cst_65 : f32 to vector<8x1xf32>
    %121 = arith.addf %117, %120 : vector<8x1xf32>
    %122 = math.rsqrt %121 : vector<8x1xf32>
    %123 = vector.broadcast %122 : vector<8x1xf32> to vector<8x32xf32>
    %124 = arith.mulf %119, %123 : vector<8x32xf32>
    %125 = vector.broadcast %104 : vector<1x32xf32> to vector<8x32xf32>
    %126 = arith.mulf %124, %125 : vector<8x32xf32>
    %127 = vector.broadcast %106 : vector<1x32xf32> to vector<8x32xf32>
    %128 = arith.addf %126, %127 : vector<8x32xf32>
    %c0_66 = arith.constant 0 : index
    %c0_67 = arith.constant 0 : index
    %c0_68 = arith.constant 0 : index
    %129 = vector.load %arg15[%c0_66, %c0_67, %c0_68] : memref<2x32x64xf32, #tpu.memory_space<vmem>>, vector<1x32x64xf32>
    %130 = vector.shape_cast %129 : vector<1x32x64xf32> to vector<32x64xf32>
    %131 = arith.truncf %128 : vector<8x32xf32> to vector<8x32xbf16>
    %132 = arith.truncf %130 : vector<32x64xf32> to vector<32x64xbf16>
    %cst_69 = arith.constant dense<0.000000e+00> : vector<8x64xf32>
    %133 = tpu.matmul %131, %132, %cst_69 {dimension_numbers = #tpu.dot_dimension_numbers<[1], [0], [0], [1], [0, 0, 1, 1], [], []>} : vector<8x32xbf16>, vector<32x64xbf16>, vector<8x64xf32> -> vector<8x64xf32>
    %c0_70 = arith.constant 0 : index
    %c0_71 = arith.constant 0 : index
    %c0_72 = arith.constant 0 : index
    %134 = vector.load %arg16[%c0_70, %c0_71, %c0_72] : memref<2x1x64xf32, #tpu.memory_space<vmem>>, vector<1x1x64xf32>
    %135 = vector.shape_cast %134 : vector<1x1x64xf32> to vector<1x64xf32>
    %136 = vector.broadcast %135 : vector<1x64xf32> to vector<8x64xf32>
    %137 = arith.addf %133, %136 : vector<8x64xf32>
    %138 = arith.mulf %137, %137 : vector<8x64xf32>
    %139 = arith.mulf %137, %138 : vector<8x64xf32>
    %cst_73 = arith.constant 4.471500e-02 : f32
    %140 = vector.broadcast %cst_73 : f32 to vector<8x64xf32>
    %141 = arith.mulf %140, %139 : vector<8x64xf32>
    %142 = arith.addf %137, %141 : vector<8x64xf32>
    %cst_74 = arith.constant 0.797884583 : f32
    %143 = vector.broadcast %cst_74 : f32 to vector<8x64xf32>
    %144 = arith.mulf %143, %142 : vector<8x64xf32>
    %145 = math.tanh %144 : vector<8x64xf32>
    %cst_75 = arith.constant 1.000000e+00 : f32
    %146 = vector.broadcast %cst_75 : f32 to vector<8x64xf32>
    %147 = arith.addf %146, %145 : vector<8x64xf32>
    %cst_76 = arith.constant 5.000000e-01 : f32
    %148 = vector.broadcast %cst_76 : f32 to vector<8x64xf32>
    %149 = arith.mulf %148, %147 : vector<8x64xf32>
    %150 = arith.mulf %137, %149 : vector<8x64xf32>
    %c0_77 = arith.constant 0 : index
    %c0_78 = arith.constant 0 : index
    %c0_79 = arith.constant 0 : index
    %151 = vector.load %arg17[%c0_77, %c0_78, %c0_79] : memref<2x64x32xf32, #tpu.memory_space<vmem>>, vector<1x64x32xf32>
    %152 = vector.shape_cast %151 : vector<1x64x32xf32> to vector<64x32xf32>
    %153 = arith.truncf %150 : vector<8x64xf32> to vector<8x64xbf16>
    %154 = arith.truncf %152 : vector<64x32xf32> to vector<64x32xbf16>
    %cst_80 = arith.constant dense<0.000000e+00> : vector<8x32xf32>
    %155 = tpu.matmul %153, %154, %cst_80 {dimension_numbers = #tpu.dot_dimension_numbers<[1], [0], [0], [1], [0, 0, 1, 1], [], []>} : vector<8x64xbf16>, vector<64x32xbf16>, vector<8x32xf32> -> vector<8x32xf32>
    %c0_81 = arith.constant 0 : index
    %c0_82 = arith.constant 0 : index
    %c0_83 = arith.constant 0 : index
    %156 = vector.load %arg18[%c0_81, %c0_82, %c0_83] : memref<2x1x32xf32, #tpu.memory_space<vmem>>, vector<1x1x32xf32>
    %157 = vector.shape_cast %156 : vector<1x1x32xf32> to vector<1x32xf32>
    %158 = vector.broadcast %157 : vector<1x32xf32> to vector<8x32xf32>
    %159 = arith.addf %155, %158 : vector<8x32xf32>
    %160 = arith.addf %128, %159 : vector<8x32xf32>
    %c0_84 = arith.constant 0 : index
    %c0_85 = arith.constant 0 : index
    %c0_86 = arith.constant 0 : index
    %161 = vector.load %arg19[%c0_84, %c0_85, %c0_86] : memref<2x1x32xf32, #tpu.memory_space<vmem>>, vector<1x1x32xf32>
    %162 = vector.shape_cast %161 : vector<1x1x32xf32> to vector<1x32xf32>
    %c0_87 = arith.constant 0 : index
    %c0_88 = arith.constant 0 : index
    %c0_89 = arith.constant 0 : index
    %163 = vector.load %arg20[%c0_87, %c0_88, %c0_89] : memref<2x1x32xf32, #tpu.memory_space<vmem>>, vector<1x1x32xf32>
    %164 = vector.shape_cast %163 : vector<1x1x32xf32> to vector<1x32xf32>
    %cst_90 = arith.constant dense<0.000000e+00> : vector<8xf32>
    %165 = vector.multi_reduction <add>, %160, %cst_90 [1] : vector<8x32xf32> to vector<8xf32>
    %166 = vector.shape_cast %165 : vector<8xf32> to vector<8x1xf32>
    %cst_91 = arith.constant 3.200000e+01 : f32
    %167 = vector.broadcast %cst_91 : f32 to vector<8x1xf32>
    %168 = arith.divf %166, %167 : vector<8x1xf32>
    %169 = vector.broadcast %168 : vector<8x1xf32> to vector<8x32xf32>
    %170 = arith.subf %160, %169 : vector<8x32xf32>
    %171 = arith.mulf %170, %170 : vector<8x32xf32>
    %cst_92 = arith.constant dense<0.000000e+00> : vector<8xf32>
    %172 = vector.multi_reduction <add>, %171, %cst_92 [1] : vector<8x32xf32> to vector<8xf32>
    %173 = vector.shape_cast %172 : vector<8xf32> to vector<8x1xf32>
    %cst_93 = arith.constant 3.200000e+01 : f32
    %174 = vector.broadcast %cst_93 : f32 to vector<8x1xf32>
    %175 = arith.divf %173, %174 : vector<8x1xf32>
    %176 = vector.broadcast %168 : vector<8x1xf32> to vector<8x32xf32>
    %177 = arith.subf %160, %176 : vector<8x32xf32>
    %cst_94 = arith.constant 9.99999996E-13 : f32
    %178 = vector.broadcast %cst_94 : f32 to vector<8x1xf32>
    %179 = arith.addf %175, %178 : vector<8x1xf32>
    %180 = math.rsqrt %179 : vector<8x1xf32>
    %181 = vector.broadcast %180 : vector<8x1xf32> to vector<8x32xf32>
    %182 = arith.mulf %177, %181 : vector<8x32xf32>
    %183 = vector.broadcast %162 : vector<1x32xf32> to vector<8x32xf32>
    %184 = arith.mulf %182, %183 : vector<8x32xf32>
    %185 = vector.broadcast %164 : vector<1x32xf32> to vector<8x32xf32>
    %186 = arith.addf %184, %185 : vector<8x32xf32>
    %187 = vector.shape_cast %186 : vector<8x32xf32> to vector<1x8x32xf32>
    %188 = vector.broadcast %187 : vector<1x8x32xf32> to vector<4x8x32xf32>
    %c1 = arith.constant 1 : index
    %c0_95 = arith.constant 0 : index
    %c0_96 = arith.constant 0 : index
    %c0_97 = arith.constant 0 : index
    %189 = vector.load %arg5[%c1, %c0_95, %c0_96, %c0_97] : memref<2x4x32x8xf32, #tpu.memory_space<vmem>>, vector<1x4x32x8xf32>
    %190 = vector.shape_cast %189 : vector<1x4x32x8xf32> to vector<4x32x8xf32>
    %191 = arith.truncf %188 : vector<4x8x32xf32> to vector<4x8x32xbf16>
    %192 = arith.truncf %190 : vector<4x32x8xf32> to vector<4x32x8xbf16>
    "tpu.trace_start"() <{level = 10 : i32, message = "nsh,nhd->nsd"}> : () -> ()
    %cst_98 = arith.constant dense<0.000000e+00> : vector<4x8x8xf32>
    %193 = tpu.matmul %191, %192, %cst_98 {dimension_numbers = #tpu.dot_dimension_numbers<[2], [1], [1], [2], [0, 0, 0, 1, 1, 2], [0], [0]>} : vector<4x8x32xbf16>, vector<4x32x8xbf16>, vector<4x8x8xf32> -> vector<4x8x8xf32>
    "tpu.trace_stop"() : () -> ()
    %c1_99 = arith.constant 1 : index
    %c0_100 = arith.constant 0 : index
    %c0_101 = arith.constant 0 : index
    %c0_102 = arith.constant 0 : index
    %194 = vector.load %arg6[%c1_99, %c0_100, %c0_101, %c0_102] : memref<2x4x1x8xf32, #tpu.memory_space<vmem>>, vector<1x4x1x8xf32>
    %195 = vector.shape_cast %194 : vector<1x4x1x8xf32> to vector<4x1x8xf32>
    %196 = vector.broadcast %195 : vector<4x1x8xf32> to vector<4x8x8xf32>
    %197 = arith.addf %193, %196 : vector<4x8x8xf32>
    %c1_103 = arith.constant 1 : index
    %c0_104 = arith.constant 0 : index
    %c0_105 = arith.constant 0 : index
    %c0_106 = arith.constant 0 : index
    %198 = vector.load %arg7[%c1_103, %c0_104, %c0_105, %c0_106] : memref<2x4x32x8xf32, #tpu.memory_space<vmem>>, vector<1x4x32x8xf32>
    %199 = vector.shape_cast %198 : vector<1x4x32x8xf32> to vector<4x32x8xf32>
    %200 = arith.truncf %188 : vector<4x8x32xf32> to vector<4x8x32xbf16>
    %201 = arith.truncf %199 : vector<4x32x8xf32> to vector<4x32x8xbf16>
    "tpu.trace_start"() <{level = 10 : i32, message = "nsh,nhd->nsd"}> : () -> ()
    %cst_107 = arith.constant dense<0.000000e+00> : vector<4x8x8xf32>
    %202 = tpu.matmul %200, %201, %cst_107 {dimension_numbers = #tpu.dot_dimension_numbers<[2], [1], [1], [2], [0, 0, 0, 1, 1, 2], [0], [0]>} : vector<4x8x32xbf16>, vector<4x32x8xbf16>, vector<4x8x8xf32> -> vector<4x8x8xf32>
    "tpu.trace_stop"() : () -> ()
    %c1_108 = arith.constant 1 : index
    %c0_109 = arith.constant 0 : index
    %c0_110 = arith.constant 0 : index
    %c0_111 = arith.constant 0 : index
    %203 = vector.load %arg8[%c1_108, %c0_109, %c0_110, %c0_111] : memref<2x4x1x8xf32, #tpu.memory_space<vmem>>, vector<1x4x1x8xf32>
    %204 = vector.shape_cast %203 : vector<1x4x1x8xf32> to vector<4x1x8xf32>
    %205 = vector.broadcast %204 : vector<4x1x8xf32> to vector<4x8x8xf32>
    %206 = arith.addf %202, %205 : vector<4x8x8xf32>
    %c1_112 = arith.constant 1 : index
    %c0_113 = arith.constant 0 : index
    %c0_114 = arith.constant 0 : index
    %c0_115 = arith.constant 0 : index
    %207 = vector.load %arg9[%c1_112, %c0_113, %c0_114, %c0_115] : memref<2x4x32x8xf32, #tpu.memory_space<vmem>>, vector<1x4x32x8xf32>
    %208 = vector.shape_cast %207 : vector<1x4x32x8xf32> to vector<4x32x8xf32>
    %209 = arith.truncf %188 : vector<4x8x32xf32> to vector<4x8x32xbf16>
    %210 = arith.truncf %208 : vector<4x32x8xf32> to vector<4x32x8xbf16>
    "tpu.trace_start"() <{level = 10 : i32, message = "nsh,nhd->nsd"}> : () -> ()
    %cst_116 = arith.constant dense<0.000000e+00> : vector<4x8x8xf32>
    %211 = tpu.matmul %209, %210, %cst_116 {dimension_numbers = #tpu.dot_dimension_numbers<[2], [1], [1], [2], [0, 0, 0, 1, 1, 2], [0], [0]>} : vector<4x8x32xbf16>, vector<4x32x8xbf16>, vector<4x8x8xf32> -> vector<4x8x8xf32>
    "tpu.trace_stop"() : () -> ()
    %c1_117 = arith.constant 1 : index
    %c0_118 = arith.constant 0 : index
    %c0_119 = arith.constant 0 : index
    %c0_120 = arith.constant 0 : index
    %212 = vector.load %arg10[%c1_117, %c0_118, %c0_119, %c0_120] : memref<2x4x1x8xf32, #tpu.memory_space<vmem>>, vector<1x4x1x8xf32>
    %213 = vector.shape_cast %212 : vector<1x4x1x8xf32> to vector<4x1x8xf32>
    %214 = vector.broadcast %213 : vector<4x1x8xf32> to vector<4x8x8xf32>
    %215 = arith.addf %211, %214 : vector<4x8x8xf32>
    %216 = arith.truncf %197 : vector<4x8x8xf32> to vector<4x8x8xbf16>
    %217 = arith.truncf %206 : vector<4x8x8xf32> to vector<4x8x8xbf16>
    "tpu.trace_start"() <{level = 10 : i32, message = "nqd,nkd->nqk"}> : () -> ()
    %cst_121 = arith.constant dense<0.000000e+00> : vector<4x8x8xf32>
    %218 = tpu.matmul %216, %217, %cst_121 {dimension_numbers = #tpu.dot_dimension_numbers<[2], [2], [1], [1], [0, 0, 0, 1, 1, 1], [0], [0]>} : vector<4x8x8xbf16>, vector<4x8x8xbf16>, vector<4x8x8xf32> -> vector<4x8x8xf32>
    "tpu.trace_stop"() : () -> ()
    %cst_122 = arith.constant 0.353553385 : f32
    %219 = vector.broadcast %cst_122 : f32 to vector<4x8x8xf32>
    %220 = arith.mulf %218, %219 : vector<4x8x8xf32>
    %221 = vector.shape_cast %31 : vector<1x8xf32> to vector<1x1x8xf32>
    %222 = vector.broadcast %221 : vector<1x1x8xf32> to vector<4x8x8xf32>
    %223 = arith.addf %220, %222 : vector<4x8x8xf32>
    %cst_123 = arith.constant dense<0xFF800000> : vector<4x8xf32>
    %224 = vector.multi_reduction <maximumf>, %223, %cst_123 [2] : vector<4x8x8xf32> to vector<4x8xf32>
    %225 = vector.shape_cast %224 : vector<4x8xf32> to vector<4x8x1xf32>
    %226 = vector.broadcast %225 : vector<4x8x1xf32> to vector<4x8x8xf32>
    %227 = arith.subf %223, %226 : vector<4x8x8xf32>
    %228 = math.exp %227 : vector<4x8x8xf32>
    %cst_124 = arith.constant dense<0.000000e+00> : vector<4x8xf32>
    %229 = vector.multi_reduction <add>, %228, %cst_124 [2] : vector<4x8x8xf32> to vector<4x8xf32>
    %230 = vector.shape_cast %229 : vector<4x8xf32> to vector<4x8x1xf32>
    %231 = tpu.reciprocal %230 {approx = true} : vector<4x8x1xf32> -> vector<4x8x1xf32>
    %232 = vector.broadcast %231 : vector<4x8x1xf32> to vector<4x8x8xf32>
    %233 = arith.mulf %228, %232 : vector<4x8x8xf32>
    %234 = arith.truncf %233 : vector<4x8x8xf32> to vector<4x8x8xbf16>
    %235 = arith.truncf %215 : vector<4x8x8xf32> to vector<4x8x8xbf16>
    "tpu.trace_start"() <{level = 10 : i32, message = "nqk,nkd->nqd"}> : () -> ()
    %cst_125 = arith.constant dense<0.000000e+00> : vector<4x8x8xf32>
    %236 = tpu.matmul %234, %235, %cst_125 {dimension_numbers = #tpu.dot_dimension_numbers<[2], [1], [1], [2], [0, 0, 0, 1, 1, 2], [0], [0]>} : vector<4x8x8xbf16>, vector<4x8x8xbf16>, vector<4x8x8xf32> -> vector<4x8x8xf32>
    "tpu.trace_stop"() : () -> ()
    %c1_126 = arith.constant 1 : index
    %c0_127 = arith.constant 0 : index
    %c0_128 = arith.constant 0 : index
    %c0_129 = arith.constant 0 : index
    %237 = vector.load %arg11[%c1_126, %c0_127, %c0_128, %c0_129] : memref<2x4x8x32xf32, #tpu.memory_space<vmem>>, vector<1x4x8x32xf32>
    %238 = vector.shape_cast %237 : vector<1x4x8x32xf32> to vector<4x8x32xf32>
    %239 = arith.truncf %236 : vector<4x8x8xf32> to vector<4x8x8xbf16>
    %240 = arith.truncf %238 : vector<4x8x32xf32> to vector<4x8x32xbf16>
    "tpu.trace_start"() <{level = 10 : i32, message = "nqd,ndh->nqh"}> : () -> ()
    %cst_130 = arith.constant dense<0.000000e+00> : vector<4x8x32xf32>
    %241 = tpu.matmul %239, %240, %cst_130 {dimension_numbers = #tpu.dot_dimension_numbers<[2], [1], [1], [2], [0, 0, 0, 1, 1, 2], [0], [0]>} : vector<4x8x8xbf16>, vector<4x8x32xbf16>, vector<4x8x32xf32> -> vector<4x8x32xf32>
    "tpu.trace_stop"() : () -> ()
    %242 = vector.extract_strided_slice %241 {offsets = [0, 0, 0], sizes = [1, 8, 32], strides = [1, 1, 1]} : vector<4x8x32xf32> to vector<1x8x32xf32>
    %243 = vector.shape_cast %242 : vector<1x8x32xf32> to vector<8x32xf32>
    %244 = vector.extract_strided_slice %241 {offsets = [1, 0, 0], sizes = [1, 8, 32], strides = [1, 1, 1]} : vector<4x8x32xf32> to vector<1x8x32xf32>
    %245 = vector.shape_cast %244 : vector<1x8x32xf32> to vector<8x32xf32>
    %246 = arith.addf %243, %245 : vector<8x32xf32>
    %247 = vector.extract_strided_slice %241 {offsets = [2, 0, 0], sizes = [1, 8, 32], strides = [1, 1, 1]} : vector<4x8x32xf32> to vector<1x8x32xf32>
    %248 = vector.shape_cast %247 : vector<1x8x32xf32> to vector<8x32xf32>
    %249 = arith.addf %246, %248 : vector<8x32xf32>
    %250 = vector.extract_strided_slice %241 {offsets = [3, 0, 0], sizes = [1, 8, 32], strides = [1, 1, 1]} : vector<4x8x32xf32> to vector<1x8x32xf32>
    %251 = vector.shape_cast %250 : vector<1x8x32xf32> to vector<8x32xf32>
    %252 = arith.addf %249, %251 : vector<8x32xf32>
    %c1_131 = arith.constant 1 : index
    %c0_132 = arith.constant 0 : index
    %c0_133 = arith.constant 0 : index
    %253 = vector.load %arg12[%c1_131, %c0_132, %c0_133] : memref<2x1x32xf32, #tpu.memory_space<vmem>>, vector<1x1x32xf32>
    %254 = vector.shape_cast %253 : vector<1x1x32xf32> to vector<1x32xf32>
    %255 = vector.broadcast %254 : vector<1x32xf32> to vector<8x32xf32>
    %256 = arith.addf %252, %255 : vector<8x32xf32>
    %257 = arith.addf %186, %256 : vector<8x32xf32>
    %c1_134 = arith.constant 1 : index
    %c0_135 = arith.constant 0 : index
    %c0_136 = arith.constant 0 : index
    %258 = vector.load %arg13[%c1_134, %c0_135, %c0_136] : memref<2x1x32xf32, #tpu.memory_space<vmem>>, vector<1x1x32xf32>
    %259 = vector.shape_cast %258 : vector<1x1x32xf32> to vector<1x32xf32>
    %c1_137 = arith.constant 1 : index
    %c0_138 = arith.constant 0 : index
    %c0_139 = arith.constant 0 : index
    %260 = vector.load %arg14[%c1_137, %c0_138, %c0_139] : memref<2x1x32xf32, #tpu.memory_space<vmem>>, vector<1x1x32xf32>
    %261 = vector.shape_cast %260 : vector<1x1x32xf32> to vector<1x32xf32>
    %cst_140 = arith.constant dense<0.000000e+00> : vector<8xf32>
    %262 = vector.multi_reduction <add>, %257, %cst_140 [1] : vector<8x32xf32> to vector<8xf32>
    %263 = vector.shape_cast %262 : vector<8xf32> to vector<8x1xf32>
    %cst_141 = arith.constant 3.200000e+01 : f32
    %264 = vector.broadcast %cst_141 : f32 to vector<8x1xf32>
    %265 = arith.divf %263, %264 : vector<8x1xf32>
    %266 = vector.broadcast %265 : vector<8x1xf32> to vector<8x32xf32>
    %267 = arith.subf %257, %266 : vector<8x32xf32>
    %268 = arith.mulf %267, %267 : vector<8x32xf32>
    %cst_142 = arith.constant dense<0.000000e+00> : vector<8xf32>
    %269 = vector.multi_reduction <add>, %268, %cst_142 [1] : vector<8x32xf32> to vector<8xf32>
    %270 = vector.shape_cast %269 : vector<8xf32> to vector<8x1xf32>
    %cst_143 = arith.constant 3.200000e+01 : f32
    %271 = vector.broadcast %cst_143 : f32 to vector<8x1xf32>
    %272 = arith.divf %270, %271 : vector<8x1xf32>
    %273 = vector.broadcast %265 : vector<8x1xf32> to vector<8x32xf32>
    %274 = arith.subf %257, %273 : vector<8x32xf32>
    %cst_144 = arith.constant 9.99999996E-13 : f32
    %275 = vector.broadcast %cst_144 : f32 to vector<8x1xf32>
    %276 = arith.addf %272, %275 : vector<8x1xf32>
    %277 = math.rsqrt %276 : vector<8x1xf32>
    %278 = vector.broadcast %277 : vector<8x1xf32> to vector<8x32xf32>
    %279 = arith.mulf %274, %278 : vector<8x32xf32>
    %280 = vector.broadcast %259 : vector<1x32xf32> to vector<8x32xf32>
    %281 = arith.mulf %279, %280 : vector<8x32xf32>
    %282 = vector.broadcast %261 : vector<1x32xf32> to vector<8x32xf32>
    %283 = arith.addf %281, %282 : vector<8x32xf32>
    %c1_145 = arith.constant 1 : index
    %c0_146 = arith.constant 0 : index
    %c0_147 = arith.constant 0 : index
    %284 = vector.load %arg15[%c1_145, %c0_146, %c0_147] : memref<2x32x64xf32, #tpu.memory_space<vmem>>, vector<1x32x64xf32>
    %285 = vector.shape_cast %284 : vector<1x32x64xf32> to vector<32x64xf32>
    %286 = arith.truncf %283 : vector<8x32xf32> to vector<8x32xbf16>
    %287 = arith.truncf %285 : vector<32x64xf32> to vector<32x64xbf16>
    %cst_148 = arith.constant dense<0.000000e+00> : vector<8x64xf32>
    %288 = tpu.matmul %286, %287, %cst_148 {dimension_numbers = #tpu.dot_dimension_numbers<[1], [0], [0], [1], [0, 0, 1, 1], [], []>} : vector<8x32xbf16>, vector<32x64xbf16>, vector<8x64xf32> -> vector<8x64xf32>
    %c1_149 = arith.constant 1 : index
    %c0_150 = arith.constant 0 : index
    %c0_151 = arith.constant 0 : index
    %289 = vector.load %arg16[%c1_149, %c0_150, %c0_151] : memref<2x1x64xf32, #tpu.memory_space<vmem>>, vector<1x1x64xf32>
    %290 = vector.shape_cast %289 : vector<1x1x64xf32> to vector<1x64xf32>
    %291 = vector.broadcast %290 : vector<1x64xf32> to vector<8x64xf32>
    %292 = arith.addf %288, %291 : vector<8x64xf32>
    %293 = arith.mulf %292, %292 : vector<8x64xf32>
    %294 = arith.mulf %292, %293 : vector<8x64xf32>
    %cst_152 = arith.constant 4.471500e-02 : f32
    %295 = vector.broadcast %cst_152 : f32 to vector<8x64xf32>
    %296 = arith.mulf %295, %294 : vector<8x64xf32>
    %297 = arith.addf %292, %296 : vector<8x64xf32>
    %cst_153 = arith.constant 0.797884583 : f32
    %298 = vector.broadcast %cst_153 : f32 to vector<8x64xf32>
    %299 = arith.mulf %298, %297 : vector<8x64xf32>
    %300 = math.tanh %299 : vector<8x64xf32>
    %cst_154 = arith.constant 1.000000e+00 : f32
    %301 = vector.broadcast %cst_154 : f32 to vector<8x64xf32>
    %302 = arith.addf %301, %300 : vector<8x64xf32>
    %cst_155 = arith.constant 5.000000e-01 : f32
    %303 = vector.broadcast %cst_155 : f32 to vector<8x64xf32>
    %304 = arith.mulf %303, %302 : vector<8x64xf32>
    %305 = arith.mulf %292, %304 : vector<8x64xf32>
    %c1_156 = arith.constant 1 : index
    %c0_157 = arith.constant 0 : index
    %c0_158 = arith.constant 0 : index
    %306 = vector.load %arg17[%c1_156, %c0_157, %c0_158] : memref<2x64x32xf32, #tpu.memory_space<vmem>>, vector<1x64x32xf32>
    %307 = vector.shape_cast %306 : vector<1x64x32xf32> to vector<64x32xf32>
    %308 = arith.truncf %305 : vector<8x64xf32> to vector<8x64xbf16>
    %309 = arith.truncf %307 : vector<64x32xf32> to vector<64x32xbf16>
    %cst_159 = arith.constant dense<0.000000e+00> : vector<8x32xf32>
    %310 = tpu.matmul %308, %309, %cst_159 {dimension_numbers = #tpu.dot_dimension_numbers<[1], [0], [0], [1], [0, 0, 1, 1], [], []>} : vector<8x64xbf16>, vector<64x32xbf16>, vector<8x32xf32> -> vector<8x32xf32>
    %c1_160 = arith.constant 1 : index
    %c0_161 = arith.constant 0 : index
    %c0_162 = arith.constant 0 : index
    %311 = vector.load %arg18[%c1_160, %c0_161, %c0_162] : memref<2x1x32xf32, #tpu.memory_space<vmem>>, vector<1x1x32xf32>
    %312 = vector.shape_cast %311 : vector<1x1x32xf32> to vector<1x32xf32>
    %313 = vector.broadcast %312 : vector<1x32xf32> to vector<8x32xf32>
    %314 = arith.addf %310, %313 : vector<8x32xf32>
    %315 = arith.addf %283, %314 : vector<8x32xf32>
    %c1_163 = arith.constant 1 : index
    %c0_164 = arith.constant 0 : index
    %c0_165 = arith.constant 0 : index
    %316 = vector.load %arg19[%c1_163, %c0_164, %c0_165] : memref<2x1x32xf32, #tpu.memory_space<vmem>>, vector<1x1x32xf32>
    %317 = vector.shape_cast %316 : vector<1x1x32xf32> to vector<1x32xf32>
    %c1_166 = arith.constant 1 : index
    %c0_167 = arith.constant 0 : index
    %c0_168 = arith.constant 0 : index
    %318 = vector.load %arg20[%c1_166, %c0_167, %c0_168] : memref<2x1x32xf32, #tpu.memory_space<vmem>>, vector<1x1x32xf32>
    %319 = vector.shape_cast %318 : vector<1x1x32xf32> to vector<1x32xf32>
    %cst_169 = arith.constant dense<0.000000e+00> : vector<8xf32>
    %320 = vector.multi_reduction <add>, %315, %cst_169 [1] : vector<8x32xf32> to vector<8xf32>
    %321 = vector.shape_cast %320 : vector<8xf32> to vector<8x1xf32>
    %cst_170 = arith.constant 3.200000e+01 : f32
    %322 = vector.broadcast %cst_170 : f32 to vector<8x1xf32>
    %323 = arith.divf %321, %322 : vector<8x1xf32>
    %324 = vector.broadcast %323 : vector<8x1xf32> to vector<8x32xf32>
    %325 = arith.subf %315, %324 : vector<8x32xf32>
    %326 = arith.mulf %325, %325 : vector<8x32xf32>
    %cst_171 = arith.constant dense<0.000000e+00> : vector<8xf32>
    %327 = vector.multi_reduction <add>, %326, %cst_171 [1] : vector<8x32xf32> to vector<8xf32>
    %328 = vector.shape_cast %327 : vector<8xf32> to vector<8x1xf32>
    %cst_172 = arith.constant 3.200000e+01 : f32
    %329 = vector.broadcast %cst_172 : f32 to vector<8x1xf32>
    %330 = arith.divf %328, %329 : vector<8x1xf32>
    %331 = vector.broadcast %323 : vector<8x1xf32> to vector<8x32xf32>
    %332 = arith.subf %315, %331 : vector<8x32xf32>
    %cst_173 = arith.constant 9.99999996E-13 : f32
    %333 = vector.broadcast %cst_173 : f32 to vector<8x1xf32>
    %334 = arith.addf %330, %333 : vector<8x1xf32>
    %335 = math.rsqrt %334 : vector<8x1xf32>
    %336 = vector.broadcast %335 : vector<8x1xf32> to vector<8x32xf32>
    %337 = arith.mulf %332, %336 : vector<8x32xf32>
    %338 = vector.broadcast %317 : vector<1x32xf32> to vector<8x32xf32>
    %339 = arith.mulf %337, %338 : vector<8x32xf32>
    %340 = vector.broadcast %319 : vector<1x32xf32> to vector<8x32xf32>
    %341 = arith.addf %339, %340 : vector<8x32xf32>
    %342 = vector.extract_strided_slice %341 {offsets = [0, 0], sizes = [1, 32], strides = [1, 1]} : vector<8x32xf32> to vector<1x32xf32>
    %c0_174 = arith.constant 0 : index
    %c0_175 = arith.constant 0 : index
    %343 = vector.load %arg21[%c0_174, %c0_175] : memref<32x32xf32, #tpu.memory_space<vmem>>, vector<32x32xf32>
    %344 = arith.truncf %342 : vector<1x32xf32> to vector<1x32xbf16>
    %345 = arith.truncf %343 : vector<32x32xf32> to vector<32x32xbf16>
    %cst_176 = arith.constant dense<0.000000e+00> : vector<1x32xf32>
    %346 = tpu.matmul %344, %345, %cst_176 {dimension_numbers = #tpu.dot_dimension_numbers<[1], [0], [0], [1], [0, 0, 1, 1], [], []>} : vector<1x32xbf16>, vector<32x32xbf16>, vector<1x32xf32> -> vector<1x32xf32>
    %c0_177 = arith.constant 0 : index
    %c0_178 = arith.constant 0 : index
    %347 = vector.load %arg22[%c0_177, %c0_178] : memref<1x32xf32, #tpu.memory_space<vmem>>, vector<1x32xf32>
    %348 = arith.addf %346, %347 : vector<1x32xf32>
    %349 = math.tanh %348 : vector<1x32xf32>
    %c0_179 = arith.constant 0 : index
    %c0_180 = arith.constant 0 : index
    %350 = vector.load %arg23[%c0_179, %c0_180] : memref<32x128xf32, #tpu.memory_space<vmem>>, vector<32x128xf32>
    %351 = arith.truncf %349 : vector<1x32xf32> to vector<1x32xbf16>
    %352 = arith.truncf %350 : vector<32x128xf32> to vector<32x128xbf16>
    %cst_181 = arith.constant dense<0.000000e+00> : vector<1x128xf32>
    %353 = tpu.matmul %351, %352, %cst_181 {dimension_numbers = #tpu.dot_dimension_numbers<[1], [0], [0], [1], [0, 0, 1, 1], [], []>} : vector<1x32xbf16>, vector<32x128xbf16>, vector<1x128xf32> -> vector<1x128xf32>
    %c0_182 = arith.constant 0 : index
    %c0_183 = arith.constant 0 : index
    %354 = vector.load %arg24[%c0_182, %c0_183] : memref<1x128xf32, #tpu.memory_space<vmem>>, vector<1x128xf32>
    %355 = arith.addf %353, %354 : vector<1x128xf32>
    %c0_184 = arith.constant 0 : index
    %c0_185 = arith.constant 0 : index
    %c0_186 = arith.constant 0 : index
    %356 = vector.load %arg25[%c0_184, %c0_185, %c0_186] : memref<1x1x128xf32, #tpu.memory_space<vmem>>, vector<1x1x128xf32>
    %357 = vector.shape_cast %356 : vector<1x1x128xf32> to vector<1x128xf32>
    %358 = vector.shape_cast %355 : vector<1x128xf32> to vector<1x1x128xf32>
    tpu.vector_store %arg25[%c0_184, %c0_185, %c0_186], %358 {strides = array<i32>} : memref<1x1x128xf32, #tpu.memory_space<vmem>>, vector<1x1x128xf32>,
    return
  }
  func.func @transform_0(%arg0: i32) -> (i32, i32, i32) {
    %c0_i32 = arith.constant 0 : i32
    %c0_i32_0 = arith.constant 0 : i32
    %c0_i32_1 = arith.constant 0 : i32
    return %arg0, %c0_i32, %c0_i32_0 : i32, i32, i32
  }
  func.func @transform_1(%arg0: i32) -> (i32, i32, i32) {
    %c0_i32 = arith.constant 0 : i32
    %c0_i32_0 = arith.constant 0 : i32
    %c0_i32_1 = arith.constant 0 : i32
    return %arg0, %c0_i32, %c0_i32_0 : i32, i32, i32
  }
  func.func @transform_2(%arg0: i32) -> (i32, i32) {
    %c0_i32 = arith.constant 0 : i32
    %c0_i32_0 = arith.constant 0 : i32
    %c0_i32_1 = arith.constant 0 : i32
    return %c0_i32, %c0_i32_0 : i32, i32
  }
  func.func @transform_3(%arg0: i32) -> (i32, i32) {
    %c0_i32 = arith.constant 0 : i32
    %c0_i32_0 = arith.constant 0 : i32
    %c0_i32_1 = arith.constant 0 : i32
    return %c0_i32, %c0_i32_0 : i32, i32
  }
  func.func @transform_4(%arg0: i32) -> (i32, i32, i32, i32) {
    %c0_i32 = arith.constant 0 : i32
    %c0_i32_0 = arith.constant 0 : i32
    %c0_i32_1 = arith.constant 0 : i32
    %c0_i32_2 = arith.constant 0 : i32
    %c0_i32_3 = arith.constant 0 : i32
    return %c0_i32, %c0_i32_0, %c0_i32_1, %c0_i32_2 : i32, i32, i32, i32
  }
  func.func @transform_5(%arg0: i32) -> (i32, i32, i32, i32) {
    %c0_i32 = arith.constant 0 : i32
    %c0_i32_0 = arith.constant 0 : i32
    %c0_i32_1 = arith.constant 0 : i32
    %c0_i32_2 = arith.constant 0 : i32
    %c0_i32_3 = arith.constant 0 : i32
    return %c0_i32, %c0_i32_0, %c0_i32_1, %c0_i32_2 : i32, i32, i32, i32
  }
  func.func @transform_6(%arg0: i32) -> (i32, i32, i32, i32) {
    %c0_i32 = arith.constant 0 : i32
    %c0_i32_0 = arith.constant 0 : i32
    %c0_i32_1 = arith.constant 0 : i32
    %c0_i32_2 = arith.constant 0 : i32
    %c0_i32_3 = arith.constant 0 : i32
    return %c0_i32, %c0_i32_0, %c0_i32_1, %c0_i32_2 : i32, i32, i32, i32
  }
  func.func @transform_7(%arg0: i32) -> (i32, i32, i32, i32) {
    %c0_i32 = arith.constant 0 : i32
    %c0_i32_0 = arith.constant 0 : i32
    %c0_i32_1 = arith.constant 0 : i32
    %c0_i32_2 = arith.constant 0 : i32
    %c0_i32_3 = arith.constant 0 : i32
    return %c0_i32, %c0_i32_0, %c0_i32_1, %c0_i32_2 : i32, i32, i32, i32
  }
  func.func @transform_8(%arg0: i32) -> (i32, i32, i32, i32) {
    %c0_i32 = arith.constant 0 : i32
    %c0_i32_0 = arith.constant 0 : i32
    %c0_i32_1 = arith.constant 0 : i32
    %c0_i32_2 = arith.constant 0 : i32
    %c0_i32_3 = arith.constant 0 : i32
    return %c0_i32, %c0_i32_0, %c0_i32_1, %c0_i32_2 : i32, i32, i32, i32
  }
  func.func @transform_9(%arg0: i32) -> (i32, i32, i32, i32) {
    %c0_i32 = arith.constant 0 : i32
    %c0_i32_0 = arith.constant 0 : i32
    %c0_i32_1 = arith.constant 0 : i32
    %c0_i32_2 = arith.constant 0 : i32
    %c0_i32_3 = arith.constant 0 : i32
    return %c0_i32, %c0_i32_0, %c0_i32_1, %c0_i32_2 : i32, i32, i32, i32
  }
  func.func @transform_10(%arg0: i32) -> (i32, i32, i32, i32) {
    %c0_i32 = arith.constant 0 : i32
    %c0_i32_0 = arith.constant 0 : i32
    %c0_i32_1 = arith.constant 0 : i32
    %c0_i32_2 = arith.constant 0 : i32
    %c0_i32_3 = arith.constant 0 : i32
    return %c0_i32, %c0_i32_0, %c0_i32_1, %c0_i32_2 : i32, i32, i32, i32
  }
  func.func @transform_11(%arg0: i32) -> (i32, i32, i32) {
    %c0_i32 = arith.constant 0 : i32
    %c0_i32_0 = arith.constant 0 : i32
    %c0_i32_1 = arith.constant 0 : i32
    %c0_i32_2 = arith.constant 0 : i32
    return %c0_i32, %c0_i32_0, %c0_i32_1 : i32, i32, i32
  }
  func.func @transform_12(%arg0: i32) -> (i32, i32, i32) {
    %c0_i32 = arith.constant 0 : i32
    %c0_i32_0 = arith.constant 0 : i32
    %c0_i32_1 = arith.constant 0 : i32
    %c0_i32_2 = arith.constant 0 : i32
    return %c0_i32, %c0_i32_0, %c0_i32_1 : i32, i32, i32
  }
  func.func @transform_13(%arg0: i32) -> (i32, i32, i32) {
    %c0_i32 = arith.constant 0 : i32
    %c0_i32_0 = arith.constant 0 : i32
    %c0_i32_1 = arith.constant 0 : i32
    %c0_i32_2 = arith.constant 0 : i32
    return %c0_i32, %c0_i32_0, %c0_i32_1 : i32, i32, i32
  }
  func.func @transform_14(%arg0: i32) -> (i32, i32, i32) {
    %c0_i32 = arith.constant 0 : i32
    %c0_i32_0 = arith.constant 0 : i32
    %c0_i32_1 = arith.constant 0 : i32
    %c0_i32_2 = arith.constant 0 : i32
    return %c0_i32, %c0_i32_0, %c0_i32_1 : i32, i32, i32
  }
  func.func @transform_15(%arg0: i32) -> (i32, i32, i32) {
    %c0_i32 = arith.constant 0 : i32
    %c0_i32_0 = arith.constant 0 : i32
    %c0_i32_1 = arith.constant 0 : i32
    %c0_i32_2 = arith.constant 0 : i32
    return %c0_i32, %c0_i32_0, %c0_i32_1 : i32, i32, i32
  }
  func.func @transform_16(%arg0: i32) -> (i32, i32, i32) {
    %c0_i32 = arith.constant 0 : i32
    %c0_i32_0 = arith.constant 0 : i32
    %c0_i32_1 = arith.constant 0 : i32
    %c0_i32_2 = arith.constant 0 : i32
    return %c0_i32, %c0_i32_0, %c0_i32_1 : i32, i32, i32
  }
  func.func @transform_17(%arg0: i32) -> (i32, i32, i32) {
    %c0_i32 = arith.constant 0 : i32
    %c0_i32_0 = arith.constant 0 : i32
    %c0_i32_1 = arith.constant 0 : i32
    %c0_i32_2 = arith.constant 0 : i32
    return %c0_i32, %c0_i32_0, %c0_i32_1 : i32, i32, i32
  }
  func.func @transform_18(%arg0: i32) -> (i32, i32, i32) {
    %c0_i32 = arith.constant 0 : i32
    %c0_i32_0 = arith.constant 0 : i32
    %c0_i32_1 = arith.constant 0 : i32
    %c0_i32_2 = arith.constant 0 : i32
    return %c0_i32, %c0_i32_0, %c0_i32_1 : i32, i32, i32
  }
  func.func @transform_19(%arg0: i32) -> (i32, i32, i32) {
    %c0_i32 = arith.constant 0 : i32
    %c0_i32_0 = arith.constant 0 : i32
    %c0_i32_1 = arith.constant 0 : i32
    %c0_i32_2 = arith.constant 0 : i32
    return %c0_i32, %c0_i32_0, %c0_i32_1 : i32, i32, i32
  }
  func.func @transform_20(%arg0: i32) -> (i32, i32) {
    %c0_i32 = arith.constant 0 : i32
    %c0_i32_0 = arith.constant 0 : i32
    %c0_i32_1 = arith.constant 0 : i32
    return %c0_i32, %c0_i32_0 : i32, i32
  }
  func.func @transform_21(%arg0: i32) -> (i32, i32) {
    %c0_i32 = arith.constant 0 : i32
    %c0_i32_0 = arith.constant 0 : i32
    %c0_i32_1 = arith.constant 0 : i32
    return %c0_i32, %c0_i32_0 : i32, i32
  }
  func.func @transform_22(%arg0: i32) -> (i32, i32) {
    %c0_i32 = arith.constant 0 : i32
    %c0_i32_0 = arith.constant 0 : i32
    %c0_i32_1 = arith.constant 0 : i32
    return %c0_i32, %c0_i32_0 : i32, i32
  }
  func.func @transform_23(%arg0: i32) -> (i32, i32) {
    %c0_i32 = arith.constant 0 : i32
    %c0_i32_0 = arith.constant 0 : i32
    %c0_i32_1 = arith.constant 0 : i32
    return %c0_i32, %c0_i32_0 : i32, i32
  }
  func.func @transform_24(%arg0: i32) -> (i32, i32, i32) {
    %c0_i32 = arith.constant 0 : i32
    %c0_i32_0 = arith.constant 0 : i32
    %c0_i32_1 = arith.constant 0 : i32
    return %arg0, %c0_i32, %c0_i32_0 : i32, i32, i32
  }
}

</mosaic_0001>

<llo_original>
// kernel: covid_twitter_bert_classifier_forward.1
$region0: #{covid_twitter_bert_classifier_forward.1}
  #allocation0 [shape = 'u32[]', space=smem, size = 0x4, offset = 0x4, fixed_abs, tag = 'smem constant byte address 0x4 - core index']
  #allocation1 [shape = 'u32[144,128]{1,0:T(1,128)}', space=vmem, size = 0x12000, scoped, tag = 'internal scratch']
  %s0 = inlined_call_operand.vmem [shape: f32[2,8,32], index: 0, kind: input, shape index: {}]
  %s1 = inlined_call_operand.vmem [shape: f32[2,1,8], index: 1, kind: input, shape index: {}]
  %s2 = inlined_call_operand.vmem [shape: f32[1,32], index: 2, kind: input, shape index: {}]
  %s3 = inlined_call_operand.vmem [shape: f32[1,32], index: 3, kind: input, shape index: {}]
  %s4 = inlined_call_operand.vmem [shape: f32[2,4,32,8], index: 4, kind: input, shape index: {}]
  %s5 = inlined_call_operand.vmem [shape: f32[2,4,1,8], index: 5, kind: input, shape index: {}]
  %s6 = inlined_call_operand.vmem [shape: f32[2,4,32,8], index: 6, kind: input, shape index: {}]
  %s7 = inlined_call_operand.vmem [shape: f32[2,4,1,8], index: 7, kind: input, shape index: {}]
  %s8 = inlined_call_operand.vmem [shape: f32[2,4,32,8], index: 8, kind: input, shape index: {}]
  %s9 = inlined_call_operand.vmem [shape: f32[2,4,1,8], index: 9, kind: input, shape index: {}]
  %s10 = inlined_call_operand.vmem [shape: f32[2,4,8,32], index: 10, kind: input, shape index: {}]
  %s11 = inlined_call_operand.vmem [shape: f32[2,1,32], index: 11, kind: input, shape index: {}]
  %s12 = inlined_call_operand.vmem [shape: f32[2,1,32], index: 12, kind: input, shape index: {}]
  %s13 = inlined_call_operand.vmem [shape: f32[2,1,32], index: 13, kind: input, shape index: {}]
  %s14 = inlined_call_operand.vmem [shape: f32[2,32,64], index: 14, kind: input, shape index: {}]
  %s15 = inlined_call_operand.vmem [shape: f32[2,1,64], index: 15, kind: input, shape index: {}]
  %s16 = inlined_call_operand.vmem [shape: f32[2,64,32], index: 16, kind: input, shape index: {}]
  %s17 = inlined_call_operand.vmem [shape: f32[2,1,32], index: 17, kind: input, shape index: {}]
  %s18 = inlined_call_operand.vmem [shape: f32[2,1,32], index: 18, kind: input, shape index: {}]
  %s19 = inlined_call_operand.vmem [shape: f32[2,1,32], index: 19, kind: input, shape index: {}]
  %s20 = inlined_call_operand.vmem [shape: f32[32,32], index: 20, kind: input, shape index: {}]
  %s21 = inlined_call_operand.vmem [shape: f32[1,32], index: 21, kind: input, shape index: {}]
  %s22 = inlined_call_operand.vmem [shape: f32[32,128], index: 22, kind: input, shape index: {}]
  %s23 = inlined_call_operand.vmem [shape: f32[1,128], index: 23, kind: input, shape index: {}]
  %s24 = inlined_call_operand.hbm [shape: f32[2,1,128], index: 24, kind: output, shape index: {}]
  %s25 = sld [smem:[#allocation0]]
  $region129: #{covid_twitter_bert_classifier_forward.1} parent=0
    _
  %s27 = ssub.s32 1, %s25
  %s28 = scalar_select 0, %s27, %s25
  $region1: #{covid_twitter_bert_classifier_forward.1} parent=0
    #allocation2 [shape = 'u8[1024]{0}', space=vmem, size = 0x400, scoped, tag = 'output window, operand 0']
    #allocation3 [shape = 's32[2]{0}', space=sflag, size = 0x8, scoped, tag = 'scoped memory for covid_twitter_bert_classifier_forward.1']
    %29 = vsyncpa [#allocation3], 0
    %s30 = scalar_lea.sflag [#allocation3], 1
    %31 = vsyncpa %s30, 0
    loop: start=0, step=1, limit=4
    $region2: #{covid_twitter_bert_classifier_forward.1} parent=1 // loop_pre_header
      _
    $region3: #{covid_twitter_bert_classifier_forward.1} parent=1 // loop_header
      %s33 = sphi 0, %s37
      %p34 = scmp.ge.s32.totalorder %s33, 4
      %s43 = sphi 0, %s45
      %s46 = sphi 0, %s43
      %s47 = sphi 0, %s46
      %s63 = sphi 0, %s47
      %s69 = sphi 0, %s71
      %s72 = sphi 0, %s69
      %s73 = sphi 0, %s72
      %s89 = sphi 0, %s73
      %s93 = sphi 0, %s93
      %s95 = sphi 0, %s93
      %s96 = sphi 0, %s95
      %s110 = sphi 0, %s96
      %s114 = sphi 0, %s114
      %s116 = sphi 0, %s114
      %s117 = sphi 0, %s116
      %s131 = sphi 0, %s117
      %s135 = sphi 0, %s135
      %s137 = sphi 0, %s135
      %s138 = sphi 0, %s137
      %s152 = sphi 0, %s138
      %s156 = sphi 0, %s156
      %s158 = sphi 0, %s156
      %s159 = sphi 0, %s158
      %s173 = sphi 0, %s159
      %s177 = sphi 0, %s177
      %s179 = sphi 0, %s177
      %s180 = sphi 0, %s179
      %s194 = sphi 0, %s180
      %s198 = sphi 0, %s198
      %s200 = sphi 0, %s198
      %s201 = sphi 0, %s200
      %s215 = sphi 0, %s201
      %s219 = sphi 0, %s219
      %s221 = sphi 0, %s219
      %s222 = sphi 0, %s221
      %s236 = sphi 0, %s222
      %s240 = sphi 0, %s240
      %s242 = sphi 0, %s240
      %s243 = sphi 0, %s242
      %s257 = sphi 0, %s243
      %s261 = sphi 0, %s261
      %s263 = sphi 0, %s261
      %s264 = sphi 0, %s263
      %s278 = sphi 0, %s264
      %s282 = sphi 0, %s282
      %s284 = sphi 0, %s282
      %s285 = sphi 0, %s284
      %s299 = sphi 0, %s285
      %s303 = sphi 0, %s303
      %s305 = sphi 0, %s303
      %s306 = sphi 0, %s305
      %s320 = sphi 0, %s306
      %s324 = sphi 0, %s324
      %s326 = sphi 0, %s324
      %s327 = sphi 0, %s326
      %s341 = sphi 0, %s327
      %s345 = sphi 0, %s345
      %s347 = sphi 0, %s345
      %s348 = sphi 0, %s347
      %s362 = sphi 0, %s348
      %s366 = sphi 0, %s366
      %s368 = sphi 0, %s366
      %s369 = sphi 0, %s368
      %s383 = sphi 0, %s369
      %s387 = sphi 0, %s387
      %s389 = sphi 0, %s387
      %s390 = sphi 0, %s389
      %s404 = sphi 0, %s390
      %s408 = sphi 0, %s408
      %s410 = sphi 0, %s408
      %s411 = sphi 0, %s410
      %s425 = sphi 0, %s411
      %s429 = sphi 0, %s429
      %s431 = sphi 0, %s429
      %s432 = sphi 0, %s431
      %s446 = sphi 0, %s432
      %s450 = sphi 0, %s450
      %s452 = sphi 0, %s450
      %s453 = sphi 0, %s452
      %s467 = sphi 0, %s453
      %s471 = sphi 0, %s471
      %s473 = sphi 0, %s471
      %s474 = sphi 0, %s473
      %s488 = sphi 0, %s474
      %s492 = sphi 0, %s492
      %s494 = sphi 0, %s492
      %s495 = sphi 0, %s494
      %s509 = sphi 0, %s495
      %s513 = sphi 0, %s513
      %s515 = sphi 0, %s513
      %s516 = sphi 0, %s515
      %s530 = sphi 0, %s516
      %s534 = sphi 0, %s534
      %s536 = sphi 0, %s534
      %s537 = sphi 0, %s536
      %s551 = sphi 0, %s537
      %s557 = sphi 0, %s559
      %s560 = sphi 0, %s557
      %s561 = sphi 0, %s560
      %s577 = sphi 0, %s561
    $region4: #{covid_twitter_bert_classifier_forward.1} parent=1 // loop_header_branch
      %36 = sbr.rel (%p34) target = $region8
    $region5: #{covid_twitter_bert_classifier_forward.1} parent=1 // loop_body
      %s38 = ssub.s32 %s33, 1
      %s39 = ssub.s32 %s33, 2
      %s40 = sadd.s32 %s33, 1
      %s41 = ssub.s32 %s33, %s40
      %p42 = scmp.eq.s32.totalorder %s41, 0
      %s44 = sadd.s32 %s43, 1
      %s45 = scalar_select %p42, %s43, %s44
      %p48 = pneg %p42
      %p49 = scmp.eq.s32.totalorder %s33, 1
      %p50 = por %p48, %p49
      %p51 = scmp.ne.s32.totalorder %s43, %s46
      %p52 = scmp.eq.s32.totalorder %s33, 0
      %p53 = por %p51, %p52
      %p54 = scmp.ne.s32.totalorder %s43, %s46
      %p55 = scmp.eq.s32.totalorder %s38, 1
      %p56 = por %p54, %p55
      %p57 = scmp.ne.s32.totalorder %s46, %s47
      %p58 = scmp.eq.s32.totalorder %s38, 0
      %p59 = por %p57, %p58
      %p60 = scmp.ne.s32.totalorder %s46, %s47
      %p61 = scmp.eq.s32.totalorder %s39, 1
      %p62 = por %p60, %p61
      %p64 = scmp.ne.s32.totalorder %s47, %s63
      %p65 = scmp.eq.s32.totalorder %s39, 0
      %p66 = por %p64, %p65
      %s67 = ssub.s32 %s33, %s40
      %p68 = scmp.eq.s32.totalorder %s67, 0
      %s70 = sadd.s32 %s69, 1
      %s71 = scalar_select %p68, %s69, %s70
      %p74 = pneg %p68
      %p75 = scmp.eq.s32.totalorder %s33, 1
      %p76 = por %p74, %p75
      %p77 = scmp.ne.s32.totalorder %s69, %s72
      %p78 = scmp.eq.s32.totalorder %s33, 0
      %p79 = por %p77, %p78
      %p80 = scmp.ne.s32.totalorder %s69, %s72
      %p81 = scmp.eq.s32.totalorder %s38, 1
      %p82 = por %p80, %p81
      %p83 = scmp.ne.s32.totalorder %s72, %s73
      %p84 = scmp.eq.s32.totalorder %s38, 0
      %p85 = por %p83, %p84
      %p86 = scmp.ne.s32.totalorder %s72, %s73
      %p87 = scmp.eq.s32.totalorder %s39, 1
      %p88 = por %p86, %p87
      %p90 = scmp.ne.s32.totalorder %s73, %s89
      %p91 = scmp.eq.s32.totalorder %s39, 0
      %p92 = por %p90, %p91
      %s94 = sadd.s32 %s93, 1
      %p97 = scmp.eq.s32.totalorder %s33, 1
      %p98 = scmp.ne.s32.totalorder %s93, %s95
      %p99 = scmp.eq.s32.totalorder %s33, 0
      %p100 = por %p98, %p99
      %p101 = scmp.ne.s32.totalorder %s93, %s95
      %p102 = scmp.eq.s32.totalorder %s38, 1
      %p103 = por %p101, %p102
      %p104 = scmp.ne.s32.totalorder %s95, %s96
      %p105 = scmp.eq.s32.totalorder %s38, 0
      %p106 = por %p104, %p105
      %p107 = scmp.ne.s32.totalorder %s95, %s96
      %p108 = scmp.eq.s32.totalorder %s39, 1
      %p109 = por %p107, %p108
      %p111 = scmp.ne.s32.totalorder %s96, %s110
      %p112 = scmp.eq.s32.totalorder %s39, 0
      %p113 = por %p111, %p112
      %s115 = sadd.s32 %s114, 1
      %p118 = scmp.eq.s32.totalorder %s33, 1
      %p119 = scmp.ne.s32.totalorder %s114, %s116
      %p120 = scmp.eq.s32.totalorder %s33, 0
      %p121 = por %p119, %p120
      %p122 = scmp.ne.s32.totalorder %s114, %s116
      %p123 = scmp.eq.s32.totalorder %s38, 1
      %p124 = por %p122, %p123
      %p125 = scmp.ne.s32.totalorder %s116, %s117
      %p126 = scmp.eq.s32.totalorder %s38, 0
      %p127 = por %p125, %p126
      %p128 = scmp.ne.s32.totalorder %s116, %s117
      %p129 = scmp.eq.s32.totalorder %s39, 1
      %p130 = por %p128, %p129
      %p132 = scmp.ne.s32.totalorder %s117, %s131
      %p133 = scmp.eq.s32.totalorder %s39, 0
      %p134 = por %p132, %p133
      %s136 = sadd.s32 %s135, 1
      %p139 = scmp.eq.s32.totalorder %s33, 1
      %p140 = scmp.ne.s32.totalorder %s135, %s137
      %p141 = scmp.eq.s32.totalorder %s33, 0
      %p142 = por %p140, %p141
      %p143 = scmp.ne.s32.totalorder %s135, %s137
      %p144 = scmp.eq.s32.totalorder %s38, 1
      %p145 = por %p143, %p144
      %p146 = scmp.ne.s32.totalorder %s137, %s138
      %p147 = scmp.eq.s32.totalorder %s38, 0
      %p148 = por %p146, %p147
      %p149 = scmp.ne.s32.totalorder %s137, %s138
      %p150 = scmp.eq.s32.totalorder %s39, 1
      %p151 = por %p149, %p150
      %p153 = scmp.ne.s32.totalorder %s138, %s152
      %p154 = scmp.eq.s32.totalorder %s39, 0
      %p155 = por %p153, %p154
      %s157 = sadd.s32 %s156, 1
      %p160 = scmp.eq.s32.totalorder %s33, 1
      %p161 = scmp.ne.s32.totalorder %s156, %s158
      %p162 = scmp.eq.s32.totalorder %s33, 0
      %p163 = por %p161, %p162
      %p164 = scmp.ne.s32.totalorder %s156, %s158
      %p165 = scmp.eq.s32.totalorder %s38, 1
      %p166 = por %p164, %p165
      %p167 = scmp.ne.s32.totalorder %s158, %s159
      %p168 = scmp.eq.s32.totalorder %s38, 0
      %p169 = por %p167, %p168
      %p170 = scmp.ne.s32.totalorder %s158, %s159
      %p171 = scmp.eq.s32.totalorder %s39, 1
      %p172 = por %p170, %p171
      %p174 = scmp.ne.s32.totalorder %s159, %s173
      %p175 = scmp.eq.s32.totalorder %s39, 0
      %p176 = por %p174, %p175
      %s178 = sadd.s32 %s177, 1
      %p181 = scmp.eq.s32.totalorder %s33, 1
      %p182 = scmp.ne.s32.totalorder %s177, %s179
      %p183 = scmp.eq.s32.totalorder %s33, 0
      %p184 = por %p182, %p183
      %p185 = scmp.ne.s32.totalorder %s177, %s179
      %p186 = scmp.eq.s32.totalorder %s38, 1
      %p187 = por %p185, %p186
      %p188 = scmp.ne.s32.totalorder %s179, %s180
      %p189 = scmp.eq.s32.totalorder %s38, 0
      %p190 = por %p188, %p189
      %p191 = scmp.ne.s32.totalorder %s179, %s180
      %p192 = scmp.eq.s32.totalorder %s39, 1
      %p193 = por %p191, %p192
      %p195 = scmp.ne.s32.totalorder %s180, %s194
      %p196 = scmp.eq.s32.totalorder %s39, 0
      %p197 = por %p195, %p196
      %s199 = sadd.s32 %s198, 1
      %p202 = scmp.eq.s32.totalorder %s33, 1
      %p203 = scmp.ne.s32.totalorder %s198, %s200
      %p204 = scmp.eq.s32.totalorder %s33, 0
      %p205 = por %p203, %p204
      %p206 = scmp.ne.s32.totalorder %s198, %s200
      %p207 = scmp.eq.s32.totalorder %s38, 1
      %p208 = por %p206, %p207
      %p209 = scmp.ne.s32.totalorder %s200, %s201
      %p210 = scmp.eq.s32.totalorder %s38, 0
      %p211 = por %p209, %p210
      %p212 = scmp.ne.s32.totalorder %s200, %s201
      %p213 = scmp.eq.s32.totalorder %s39, 1
      %p214 = por %p212, %p213
      %p216 = scmp.ne.s32.totalorder %s201, %s215
      %p217 = scmp.eq.s32.totalorder %s39, 0
      %p218 = por %p216, %p217
      %s220 = sadd.s32 %s219, 1
      %p223 = scmp.eq.s32.totalorder %s33, 1
      %p224 = scmp.ne.s32.totalorder %s219, %s221
      %p225 = scmp.eq.s32.totalorder %s33, 0
      %p226 = por %p224, %p225
      %p227 = scmp.ne.s32.totalorder %s219, %s221
      %p228 = scmp.eq.s32.totalorder %s38, 1
      %p229 = por %p227, %p228
      %p230 = scmp.ne.s32.totalorder %s221, %s222
      %p231 = scmp.eq.s32.totalorder %s38, 0
      %p232 = por %p230, %p231
      %p233 = scmp.ne.s32.totalorder %s221, %s222
      %p234 = scmp.eq.s32.totalorder %s39, 1
      %p235 = por %p233, %p234
      %p237 = scmp.ne.s32.totalorder %s222, %s236
      %p238 = scmp.eq.s32.totalorder %s39, 0
      %p239 = por %p237, %p238
      %s241 = sadd.s32 %s240, 1
      %p244 = scmp.eq.s32.totalorder %s33, 1
      %p245 = scmp.ne.s32.totalorder %s240, %s242
      %p246 = scmp.eq.s32.totalorder %s33, 0
      %p247 = por %p245, %p246
      %p248 = scmp.ne.s32.totalorder %s240, %s242
      %p249 = scmp.eq.s32.totalorder %s38, 1
      %p250 = por %p248, %p249
      %p251 = scmp.ne.s32.totalorder %s242, %s243
      %p252 = scmp.eq.s32.totalorder %s38, 0
      %p253 = por %p251, %p252
      %p254 = scmp.ne.s32.totalorder %s242, %s243
      %p255 = scmp.eq.s32.totalorder %s39, 1
      %p256 = por %p254, %p255
      %p258 = scmp.ne.s32.totalorder %s243, %s257
      %p259 = scmp.eq.s32.totalorder %s39, 0
      %p260 = por %p258, %p259
      %s262 = sadd.s32 %s261, 1
      %p265 = scmp.eq.s32.totalorder %s33, 1
      %p266 = scmp.ne.s32.totalorder %s261, %s263
      %p267 = scmp.eq.s32.totalorder %s33, 0
      %p268 = por %p266, %p267
      %p269 = scmp.ne.s32.totalorder %s261, %s263
      %p270 = scmp.eq.s32.totalorder %s38, 1
      %p271 = por %p269, %p270
      %p272 = scmp.ne.s32.totalorder %s263, %s264
      %p273 = scmp.eq.s32.totalorder %s38, 0
      %p274 = por %p272, %p273
      %p275 = scmp.ne.s32.totalorder %s263, %s264
      %p276 = scmp.eq.s32.totalorder %s39, 1
      %p277 = por %p275, %p276
      %p279 = scmp.ne.s32.totalorder %s264, %s278
      %p280 = scmp.eq.s32.totalorder %s39, 0
      %p281 = por %p279, %p280
      %s283 = sadd.s32 %s282, 1
      %p286 = scmp.eq.s32.totalorder %s33, 1
      %p287 = scmp.ne.s32.totalorder %s282, %s284
      %p288 = scmp.eq.s32.totalorder %s33, 0
      %p289 = por %p287, %p288
      %p290 = scmp.ne.s32.totalorder %s282, %s284
      %p291 = scmp.eq.s32.totalorder %s38, 1
      %p292 = por %p290, %p291
      %p293 = scmp.ne.s32.totalorder %s284, %s285
      %p294 = scmp.eq.s32.totalorder %s38, 0
      %p295 = por %p293, %p294
      %p296 = scmp.ne.s32.totalorder %s284, %s285
      %p297 = scmp.eq.s32.totalorder %s39, 1
      %p298 = por %p296, %p297
      %p300 = scmp.ne.s32.totalorder %s285, %s299
      %p301 = scmp.eq.s32.totalorder %s39, 0
      %p302 = por %p300, %p301
      %s304 = sadd.s32 %s303, 1
      %p307 = scmp.eq.s32.totalorder %s33, 1
      %p308 = scmp.ne.s32.totalorder %s303, %s305
      %p309 = scmp.eq.s32.totalorder %s33, 0
      %p310 = por %p308, %p309
      %p311 = scmp.ne.s32.totalorder %s303, %s305
      %p312 = scmp.eq.s32.totalorder %s38, 1
      %p313 = por %p311, %p312
      %p314 = scmp.ne.s32.totalorder %s305, %s306
      %p315 = scmp.eq.s32.totalorder %s38, 0
      %p316 = por %p314, %p315
      %p317 = scmp.ne.s32.totalorder %s305, %s306
      %p318 = scmp.eq.s32.totalorder %s39, 1
      %p319 = por %p317, %p318
      %p321 = scmp.ne.s32.totalorder %s306, %s320
      %p322 = scmp.eq.s32.totalorder %s39, 0
      %p323 = por %p321, %p322
      %s325 = sadd.s32 %s324, 1
      %p328 = scmp.eq.s32.totalorder %s33, 1
      %p329 = scmp.ne.s32.totalorder %s324, %s326
      %p330 = scmp.eq.s32.totalorder %s33, 0
      %p331 = por %p329, %p330
      %p332 = scmp.ne.s32.totalorder %s324, %s326
      %p333 = scmp.eq.s32.totalorder %s38, 1
      %p334 = por %p332, %p333
      %p335 = scmp.ne.s32.totalorder %s326, %s327
      %p336 = scmp.eq.s32.totalorder %s38, 0
      %p337 = por %p335, %p336
      %p338 = scmp.ne.s32.totalorder %s326, %s327
      %p339 = scmp.eq.s32.totalorder %s39, 1
      %p340 = por %p338, %p339
      %p342 = scmp.ne.s32.totalorder %s327, %s341
      %p343 = scmp.eq.s32.totalorder %s39, 0
      %p344 = por %p342, %p343
      %s346 = sadd.s32 %s345, 1
      %p349 = scmp.eq.s32.totalorder %s33, 1
      %p350 = scmp.ne.s32.totalorder %s345, %s347
      %p351 = scmp.eq.s32.totalorder %s33, 0
      %p352 = por %p350, %p351
      %p353 = scmp.ne.s32.totalorder %s345, %s347
      %p354 = scmp.eq.s32.totalorder %s38, 1
      %p355 = por %p353, %p354
      %p356 = scmp.ne.s32.totalorder %s347, %s348
      %p357 = scmp.eq.s32.totalorder %s38, 0
      %p358 = por %p356, %p357
      %p359 = scmp.ne.s32.totalorder %s347, %s348
      %p360 = scmp.eq.s32.totalorder %s39, 1
      %p361 = por %p359, %p360
      %p363 = scmp.ne.s32.totalorder %s348, %s362
      %p364 = scmp.eq.s32.totalorder %s39, 0
      %p365 = por %p363, %p364
      %s367 = sadd.s32 %s366, 1
      %p370 = scmp.eq.s32.totalorder %s33, 1
      %p371 = scmp.ne.s32.totalorder %s366, %s368
      %p372 = scmp.eq.s32.totalorder %s33, 0
      %p373 = por %p371, %p372
      %p374 = scmp.ne.s32.totalorder %s366, %s368
      %p375 = scmp.eq.s32.totalorder %s38, 1
      %p376 = por %p374, %p375
      %p377 = scmp.ne.s32.totalorder %s368, %s369
      %p378 = scmp.eq.s32.totalorder %s38, 0
      %p379 = por %p377, %p378
      %p380 = scmp.ne.s32.totalorder %s368, %s369
      %p381 = scmp.eq.s32.totalorder %s39, 1
      %p382 = por %p380, %p381
      %p384 = scmp.ne.s32.totalorder %s369, %s383
      %p385 = scmp.eq.s32.totalorder %s39, 0
      %p386 = por %p384, %p385
      %s388 = sadd.s32 %s387, 1
      %p391 = scmp.eq.s32.totalorder %s33, 1
      %p392 = scmp.ne.s32.totalorder %s387, %s389
      %p393 = scmp.eq.s32.totalorder %s33, 0
      %p394 = por %p392, %p393
      %p395 = scmp.ne.s32.totalorder %s387, %s389
      %p396 = scmp.eq.s32.totalorder %s38, 1
      %p397 = por %p395, %p396
      %p398 = scmp.ne.s32.totalorder %s389, %s390
      %p399 = scmp.eq.s32.totalorder %s38, 0
      %p400 = por %p398, %p399
      %p401 = scmp.ne.s32.totalorder %s389, %s390
      %p402 = scmp.eq.s32.totalorder %s39, 1
      %p403 = por %p401, %p402
      %p405 = scmp.ne.s32.totalorder %s390, %s404
      %p406 = scmp.eq.s32.totalorder %s39, 0
      %p407 = por %p405, %p406
      %s409 = sadd.s32 %s408, 1
      %p412 = scmp.eq.s32.totalorder %s33, 1
      %p413 = scmp.ne.s32.totalorder %s408, %s410
      %p414 = scmp.eq.s32.totalorder %s33, 0
      %p415 = por %p413, %p414
      %p416 = scmp.ne.s32.totalorder %s408, %s410
      %p417 = scmp.eq.s32.totalorder %s38, 1
      %p418 = por %p416, %p417
      %p419 = scmp.ne.s32.totalorder %s410, %s411
      %p420 = scmp.eq.s32.totalorder %s38, 0
      %p421 = por %p419, %p420
      %p422 = scmp.ne.s32.totalorder %s410, %s411
      %p423 = scmp.eq.s32.totalorder %s39, 1
      %p424 = por %p422, %p423
      %p426 = scmp.ne.s32.totalorder %s411, %s425
      %p427 = scmp.eq.s32.totalorder %s39, 0
      %p428 = por %p426, %p427
      %s430 = sadd.s32 %s429, 1
      %p433 = scmp.eq.s32.totalorder %s33, 1
      %p434 = scmp.ne.s32.totalorder %s429, %s431
      %p435 = scmp.eq.s32.totalorder %s33, 0
      %p436 = por %p434, %p435
      %p437 = scmp.ne.s32.totalorder %s429, %s431
      %p438 = scmp.eq.s32.totalorder %s38, 1
      %p439 = por %p437, %p438
      %p440 = scmp.ne.s32.totalorder %s431, %s432
      %p441 = scmp.eq.s32.totalorder %s38, 0
      %p442 = por %p440, %p441
      %p443 = scmp.ne.s32.totalorder %s431, %s432
      %p444 = scmp.eq.s32.totalorder %s39, 1
      %p445 = por %p443, %p444
      %p447 = scmp.ne.s32.totalorder %s432, %s446
      %p448 = scmp.eq.s32.totalorder %s39, 0
      %p449 = por %p447, %p448
      %s451 = sadd.s32 %s450, 1
      %p454 = scmp.eq.s32.totalorder %s33, 1
      %p455 = scmp.ne.s32.totalorder %s450, %s452
      %p456 = scmp.eq.s32.totalorder %s33, 0
      %p457 = por %p455, %p456
      %p458 = scmp.ne.s32.totalorder %s450, %s452
      %p459 = scmp.eq.s32.totalorder %s38, 1
      %p460 = por %p458, %p459
      %p461 = scmp.ne.s32.totalorder %s452, %s453
      %p462 = scmp.eq.s32.totalorder %s38, 0
      %p463 = por %p461, %p462
      %p464 = scmp.ne.s32.totalorder %s452, %s453
      %p465 = scmp.eq.s32.totalorder %s39, 1
      %p466 = por %p464, %p465
      %p468 = scmp.ne.s32.totalorder %s453, %s467
      %p469 = scmp.eq.s32.totalorder %s39, 0
      %p470 = por %p468, %p469
      %s472 = sadd.s32 %s471, 1
      %p475 = scmp.eq.s32.totalorder %s33, 1
      %p476 = scmp.ne.s32.totalorder %s471, %s473
      %p477 = scmp.eq.s32.totalorder %s33, 0
      %p478 = por %p476, %p477
      %p479 = scmp.ne.s32.totalorder %s471, %s473
      %p480 = scmp.eq.s32.totalorder %s38, 1
      %p481 = por %p479, %p480
      %p482 = scmp.ne.s32.totalorder %s473, %s474
      %p483 = scmp.eq.s32.totalorder %s38, 0
      %p484 = por %p482, %p483
      %p485 = scmp.ne.s32.totalorder %s473, %s474
      %p486 = scmp.eq.s32.totalorder %s39, 1
      %p487 = por %p485, %p486
      %p489 = scmp.ne.s32.totalorder %s474, %s488
      %p490 = scmp.eq.s32.totalorder %s39, 0
      %p491 = por %p489, %p490
      %s493 = sadd.s32 %s492, 1
      %p496 = scmp.eq.s32.totalorder %s33, 1
      %p497 = scmp.ne.s32.totalorder %s492, %s494
      %p498 = scmp.eq.s32.totalorder %s33, 0
      %p499 = por %p497, %p498
      %p500 = scmp.ne.s32.totalorder %s492, %s494
      %p501 = scmp.eq.s32.totalorder %s38, 1
      %p502 = por %p500, %p501
      %p503 = scmp.ne.s32.totalorder %s494, %s495
      %p504 = scmp.eq.s32.totalorder %s38, 0
      %p505 = por %p503, %p504
      %p506 = scmp.ne.s32.totalorder %s494, %s495
      %p507 = scmp.eq.s32.totalorder %s39, 1
      %p508 = por %p506, %p507
      %p510 = scmp.ne.s32.totalorder %s495, %s509
      %p511 = scmp.eq.s32.totalorder %s39, 0
      %p512 = por %p510, %p511
      %s514 = sadd.s32 %s513, 1
      %p517 = scmp.eq.s32.totalorder %s33, 1
      %p518 = scmp.ne.s32.totalorder %s513, %s515
      %p519 = scmp.eq.s32.totalorder %s33, 0
      %p520 = por %p518, %p519
      %p521 = scmp.ne.s32.totalorder %s513, %s515
      %p522 = scmp.eq.s32.totalorder %s38, 1
      %p523 = por %p521, %p522
      %p524 = scmp.ne.s32.totalorder %s515, %s516
      %p525 = scmp.eq.s32.totalorder %s38, 0
      %p526 = por %p524, %p525
      %p527 = scmp.ne.s32.totalorder %s515, %s516
      %p528 = scmp.eq.s32.totalorder %s39, 1
      %p529 = por %p527, %p528
      %p531 = scmp.ne.s32.totalorder %s516, %s530
      %p532 = scmp.eq.s32.totalorder %s39, 0
      %p533 = por %p531, %p532
      %s535 = sadd.s32 %s534, 1
      %p538 = scmp.eq.s32.totalorder %s33, 1
      %p539 = scmp.ne.s32.totalorder %s534, %s536
      %p540 = scmp.eq.s32.totalorder %s33, 0
      %p541 = por %p539, %p540
      %p542 = scmp.ne.s32.totalorder %s534, %s536
      %p543 = scmp.eq.s32.totalorder %s38, 1
      %p544 = por %p542, %p543
      %p545 = scmp.ne.s32.totalorder %s536, %s537
      %p546 = scmp.eq.s32.totalorder %s38, 0
      %p547 = por %p545, %p546
      %p548 = scmp.ne.s32.totalorder %s536, %s537
      %p549 = scmp.eq.s32.totalorder %s39, 1
      %p550 = por %p548, %p549
      %p552 = scmp.ne.s32.totalorder %s537, %s551
      %p553 = scmp.eq.s32.totalorder %s39, 0
      %p554 = por %p552, %p553
      %s555 = ssub.s32 %s33, %s40
      %p556 = scmp.eq.s32.totalorder %s555, 0
      %s558 = sadd.s32 %s557, 1
      %s559 = scalar_select %p556, %s557, %s558
      %p562 = pneg %p556
      %p563 = scmp.eq.s32.totalorder %s33, 1
      %p564 = por %p562, %p563
      %p565 = scmp.ne.s32.totalorder %s557, %s560
      %p566 = scmp.eq.s32.totalorder %s33, 0
      %p567 = por %p565, %p566
      %p568 = scmp.ne.s32.totalorder %s557, %s560
      %p569 = scmp.eq.s32.totalorder %s38, 1
      %p570 = por %p568, %p569
      %p571 = scmp.ne.s32.totalorder %s560, %s561
      %p572 = scmp.eq.s32.totalorder %s38, 0
      %p573 = por %p571, %p572
      %p574 = scmp.ne.s32.totalorder %s560, %s561
      %p575 = scmp.eq.s32.totalorder %s39, 1
      %p576 = por %p574, %p575
      %p578 = scmp.ne.s32.totalorder %s561, %s577
      %p579 = scmp.eq.s32.totalorder %s39, 0
      %p580 = por %p578, %p579
      %p581 = scmp.le.s32.totalorder 1, %s33
      %p582 = scmp.lt.s32.totalorder %s33, 3
      %p583 = pnand %p581, %p582
      %p584 = pneg %p583
      // Predicated region
      $region9: #{covid_twitter_bert_classifier_forward.1} parent=5 // pred_check
        _
      $region10: #{covid_twitter_bert_classifier_forward.1} parent=5 // pred_check_branch
        %586 = sbr.rel (%p583) target = $region12
      $region11: #{covid_twitter_bert_classifier_forward.1} parent=5 // pred_region
        %s587 = ssub.s32 %s33, 1
        // Predicated region
        $region13: #{covid_twitter_bert_classifier_forward.1} parent=11 // pred_check
          %p588 = pneg %p106
        $region14: #{covid_twitter_bert_classifier_forward.1} parent=11 // pred_check_branch
          %590 = sbr.rel (%p588) target = $region16
        $region15: #{covid_twitter_bert_classifier_forward.1} parent=11 // pred_region
          _
        $region16: #{covid_twitter_bert_classifier_forward.1} parent=11 // pred_fallthru
          _
        // Predicated region
        $region17: #{covid_twitter_bert_classifier_forward.1} parent=11 // pred_check
          %p591 = pneg %p127
        $region18: #{covid_twitter_bert_classifier_forward.1} parent=11 // pred_check_branch
          %593 = sbr.rel (%p591) target = $region20
        $region19: #{covid_twitter_bert_classifier_forward.1} parent=11 // pred_region
          _
        $region20: #{covid_twitter_bert_classifier_forward.1} parent=11 // pred_fallthru
          _
        // Predicated region
        $region21: #{covid_twitter_bert_classifier_forward.1} parent=11 // pred_check
          %p594 = pneg %p148
        $region22: #{covid_twitter_bert_classifier_forward.1} parent=11 // pred_check_branch
          %596 = sbr.rel (%p594) target = $region24
        $region23: #{covid_twitter_bert_classifier_forward.1} parent=11 // pred_region
          _
        $region24: #{covid_twitter_bert_classifier_forward.1} parent=11 // pred_fallthru
          _
        // Predicated region
        $region25: #{covid_twitter_bert_classifier_forward.1} parent=11 // pred_check
          %p597 = pneg %p169
        $region26: #{covid_twitter_bert_classifier_forward.1} parent=11 // pred_check_branch
          %599 = sbr.rel (%p597) target = $region28
        $region27: #{covid_twitter_bert_classifier_forward.1} parent=11 // pred_region
          _
        $region28: #{covid_twitter_bert_classifier_forward.1} parent=11 // pred_fallthru
          _
        // Predicated region
        $region29: #{covid_twitter_bert_classifier_forward.1} parent=11 // pred_check
          %p600 = pneg %p190
        $region30: #{covid_twitter_bert_classifier_forward.1} parent=11 // pred_check_branch
          %602 = sbr.rel (%p600) target = $region32
        $region31: #{covid_twitter_bert_classifier_forward.1} parent=11 // pred_region
          _
        $region32: #{covid_twitter_bert_classifier_forward.1} parent=11 // pred_fallthru
          _
        // Predicated region
        $region33: #{covid_twitter_bert_classifier_forward.1} parent=11 // pred_check
          %p603 = pneg %p211
        $region34: #{covid_twitter_bert_classifier_forward.1} parent=11 // pred_check_branch
          %605 = sbr.rel (%p603) target = $region36
        $region35: #{covid_twitter_bert_classifier_forward.1} parent=11 // pred_region
          _
        $region36: #{covid_twitter_bert_classifier_forward.1} parent=11 // pred_fallthru
          _
        // Predicated region
        $region37: #{covid_twitter_bert_classifier_forward.1} parent=11 // pred_check
          %p606 = pneg %p232
        $region38: #{covid_twitter_bert_classifier_forward.1} parent=11 // pred_check_branch
          %608 = sbr.rel (%p606) target = $region40
        $region39: #{covid_twitter_bert_classifier_forward.1} parent=11 // pred_region
          _
        $region40: #{covid_twitter_bert_classifier_forward.1} parent=11 // pred_fallthru
          _
        // Predicated region
        $region41: #{covid_twitter_bert_classifier_forward.1} parent=11 // pred_check
          %p609 = pneg %p253
        $region42: #{covid_twitter_bert_classifier_forward.1} parent=11 // pred_check_branch
          %611 = sbr.rel (%p609) target = $region44
        $region43: #{covid_twitter_bert_classifier_forward.1} parent=11 // pred_region
          _
        $region44: #{covid_twitter_bert_classifier_forward.1} parent=11 // pred_fallthru
          _
        // Predicated region
        $region45: #{covid_twitter_bert_classifier_forward.1} parent=11 // pred_check
          %p612 = pneg %p274
        $region46: #{covid_twitter_bert_classifier_forward.1} parent=11 // pred_check_branch
          %614 = sbr.rel (%p612) target = $region48
        $region47: #{covid_twitter_bert_classifier_forward.1} parent=11 // pred_region
          _
        $region48: #{covid_twitter_bert_classifier_forward.1} parent=11 // pred_fallthru
          _
        // Predicated region
        $region49: #{covid_twitter_bert_classifier_forward.1} parent=11 // pred_check
          %p615 = pneg %p295
        $region50: #{covid_twitter_bert_classifier_forward.1} parent=11 // pred_check_branch
          %617 = sbr.rel (%p615) target = $region52
        $region51: #{covid_twitter_bert_classifier_forward.1} parent=11 // pred_region
          _
        $region52: #{covid_twitter_bert_classifier_forward.1} parent=11 // pred_fallthru
          _
        // Predicated region
        $region53: #{covid_twitter_bert_classifier_forward.1} parent=11 // pred_check
          %p618 = pneg %p316
        $region54: #{covid_twitter_bert_classifier_forward.1} parent=11 // pred_check_branch
          %620 = sbr.rel (%p618) target = $region56
        $region55: #{covid_twitter_bert_classifier_forward.1} parent=11 // pred_region
          _
        $region56: #{covid_twitter_bert_classifier_forward.1} parent=11 // pred_fallthru
          _
        // Predicated region
        $region57: #{covid_twitter_bert_classifier_forward.1} parent=11 // pred_check
          %p621 = pneg %p337
        $region58: #{covid_twitter_bert_classifier_forward.1} parent=11 // pred_check_branch
          %623 = sbr.rel (%p621) target = $region60
        $region59: #{covid_twitter_bert_classifier_forward.1} parent=11 // pred_region
          _
        $region60: #{covid_twitter_bert_classifier_forward.1} parent=11 // pred_fallthru
          _
        // Predicated region
        $region61: #{covid_twitter_bert_classifier_forward.1} parent=11 // pred_check
          %p624 = pneg %p358
        $region62: #{covid_twitter_bert_classifier_forward.1} parent=11 // pred_check_branch
          %626 = sbr.rel (%p624) target = $region64
        $region63: #{covid_twitter_bert_classifier_forward.1} parent=11 // pred_region
          _
        $region64: #{covid_twitter_bert_classifier_forward.1} parent=11 // pred_fallthru
          _
        // Predicated region
        $region65: #{covid_twitter_bert_classifier_forward.1} parent=11 // pred_check
          %p627 = pneg %p379
        $region66: #{covid_twitter_bert_classifier_forward.1} parent=11 // pred_check_branch
          %629 = sbr.rel (%p627) target = $region68
        $region67: #{covid_twitter_bert_classifier_forward.1} parent=11 // pred_region
          _
        $region68: #{covid_twitter_bert_classifier_forward.1} parent=11 // pred_fallthru
          _
        // Predicated region
        $region69: #{covid_twitter_bert_classifier_forward.1} parent=11 // pred_check
          %p630 = pneg %p400
        $region70: #{covid_twitter_bert_classifier_forward.1} parent=11 // pred_check_branch
          %632 = sbr.rel (%p630) target = $region72
        $region71: #{covid_twitter_bert_classifier_forward.1} parent=11 // pred_region
          _
        $region72: #{covid_twitter_bert_classifier_forward.1} parent=11 // pred_fallthru
          _
        // Predicated region
        $region73: #{covid_twitter_bert_classifier_forward.1} parent=11 // pred_check
          %p633 = pneg %p421
        $region74: #{covid_twitter_bert_classifier_forward.1} parent=11 // pred_check_branch
          %635 = sbr.rel (%p633) target = $region76
        $region75: #{covid_twitter_bert_classifier_forward.1} parent=11 // pred_region
          _
        $region76: #{covid_twitter_bert_classifier_forward.1} parent=11 // pred_fallthru
          _
        // Predicated region
        $region77: #{covid_twitter_bert_classifier_forward.1} parent=11 // pred_check
          %p636 = pneg %p442
        $region78: #{covid_twitter_bert_classifier_forward.1} parent=11 // pred_check_branch
          %638 = sbr.rel (%p636) target = $region80
        $region79: #{covid_twitter_bert_classifier_forward.1} parent=11 // pred_region
          _
        $region80: #{covid_twitter_bert_classifier_forward.1} parent=11 // pred_fallthru
          _
        // Predicated region
        $region81: #{covid_twitter_bert_classifier_forward.1} parent=11 // pred_check
          %p639 = pneg %p463
        $region82: #{covid_twitter_bert_classifier_forward.1} parent=11 // pred_check_branch
          %641 = sbr.rel (%p639) target = $region84
        $region83: #{covid_twitter_bert_classifier_forward.1} parent=11 // pred_region
          _
        $region84: #{covid_twitter_bert_classifier_forward.1} parent=11 // pred_fallthru
          _
        // Predicated region
        $region85: #{covid_twitter_bert_classifier_forward.1} parent=11 // pred_check
          %p642 = pneg %p484
        $region86: #{covid_twitter_bert_classifier_forward.1} parent=11 // pred_check_branch
          %644 = sbr.rel (%p642) target = $region88
        $region87: #{covid_twitter_bert_classifier_forward.1} parent=11 // pred_region
          _
        $region88: #{covid_twitter_bert_classifier_forward.1} parent=11 // pred_fallthru
          _
        // Predicated region
        $region89: #{covid_twitter_bert_classifier_forward.1} parent=11 // pred_check
          %p645 = pneg %p505
        $region90: #{covid_twitter_bert_classifier_forward.1} parent=11 // pred_check_branch
          %647 = sbr.rel (%p645) target = $region92
        $region91: #{covid_twitter_bert_classifier_forward.1} parent=11 // pred_region
          _
        $region92: #{covid_twitter_bert_classifier_forward.1} parent=11 // pred_fallthru
          _
        // Predicated region
        $region93: #{covid_twitter_bert_classifier_forward.1} parent=11 // pred_check
          %p648 = pneg %p526
        $region94: #{covid_twitter_bert_classifier_forward.1} parent=11 // pred_check_branch
          %650 = sbr.rel (%p648) target = $region96
        $region95: #{covid_twitter_bert_classifier_forward.1} parent=11 // pred_region
          _
        $region96: #{covid_twitter_bert_classifier_forward.1} parent=11 // pred_fallthru
          _
        // Predicated region
        $region97: #{covid_twitter_bert_classifier_forward.1} parent=11 // pred_check
          %p651 = pneg %p547
        $region98: #{covid_twitter_bert_classifier_forward.1} parent=11 // pred_check_branch
          %653 = sbr.rel (%p651) target = $region100
        $region99: #{covid_twitter_bert_classifier_forward.1} parent=11 // pred_region
          _
        $region100: #{covid_twitter_bert_classifier_forward.1} parent=11 // pred_fallthru
          _
      $region12: #{covid_twitter_bert_classifier_forward.1} parent=5 // pred_fallthru
        _
      %p654 = scmp.lt.s32.totalorder %s33, 2
      // Predicated region
      $region101: #{covid_twitter_bert_classifier_forward.1} parent=5 // pred_check
        %p655 = pneg %p654
      $region102: #{covid_twitter_bert_classifier_forward.1} parent=5 // pred_check_branch
        %657 = sbr.rel (%p655) target = $region104
      $region103: #{covid_twitter_bert_classifier_forward.1} parent=5 // pred_region
        // Predicated region
        $region105: #{covid_twitter_bert_classifier_forward.1} parent=103 // pred_check
          %p658 = pneg %p53
        $region106: #{covid_twitter_bert_classifier_forward.1} parent=103 // pred_check_branch
          %660 = sbr.rel (%p658) target = $region108
        $region107: #{covid_twitter_bert_classifier_forward.1} parent=103 // pred_region
          %p661 = scmp.lt.s32.totalorder %s33, 1
          %s662 = scalar_select %p661, %s33, 1
          %s663 = smul.addr %s662, 8
          %s664 = scalar_lea.vmem %s0, %s663
        $region108: #{covid_twitter_bert_classifier_forward.1} parent=103 // pred_fallthru
          _
        // Predicated region
        $region109: #{covid_twitter_bert_classifier_forward.1} parent=103 // pred_check
          %p665 = pneg %p79
        $region110: #{covid_twitter_bert_classifier_forward.1} parent=103 // pred_check_branch
          %667 = sbr.rel (%p665) target = $region112
        $region111: #{covid_twitter_bert_classifier_forward.1} parent=103 // pred_region
          %p668 = scmp.lt.s32.totalorder %s33, 1
          %s669 = scalar_select %p668, %s33, 1
          %s670 = scalar_lea.vmem %s1, %s669
        $region112: #{covid_twitter_bert_classifier_forward.1} parent=103 // pred_fallthru
          _
      $region104: #{covid_twitter_bert_classifier_forward.1} parent=5 // pred_fallthru
        _
      %p671 = scmp.le.s32.totalorder 1, %s33
      %p672 = scmp.lt.s32.totalorder %s33, 3
      %p673 = pnand %p671, %p672
      %p674 = pneg %p673
      // Predicated region
      $region113: #{covid_twitter_bert_classifier_forward.1} parent=5 // pred_check
        _
      $region114: #{covid_twitter_bert_classifier_forward.1} parent=5 // pred_check_branch
        %676 = sbr.rel (%p673) target = $region116
      $region115: #{covid_twitter_bert_classifier_forward.1} parent=5 // pred_region
        %s677 = ssub.s32 %s33, 1
        %p678 = scmp.lt.s32.totalorder %s38, 1
        %s679 = scalar_select %p678, %s38, 1
        %s680 = smul.addr %s679, 8
        %s681 = scalar_lea.vmem %s0, %s680
        %p682 = pneg %p59
        %p683 = pneg %p56
        %p684 = scmp.lt.s32.totalorder %s38, 1
        %s685 = scalar_select %p684, %s38, 1
        %s686 = scalar_lea.vmem %s1, %s685
        %p687 = pneg %p85
        %p688 = pneg %p82
        %p689 = pneg %p106
        %p690 = pneg %p103
        %p691 = pneg %p127
        %p692 = pneg %p124
        %p693 = pneg %p148
        %p694 = pneg %p145
        %p695 = pneg %p169
        %p696 = pneg %p166
        %p697 = pneg %p190
        %p698 = pneg %p187
        %p699 = pneg %p211
        %p700 = pneg %p208
        %p701 = pneg %p232
        %p702 = pneg %p229
        %p703 = pneg %p253
        %p704 = pneg %p250
        %p705 = pneg %p274
        %p706 = pneg %p271
        %p707 = pneg %p295
        %p708 = pneg %p292
        %p709 = pneg %p316
        %p710 = pneg %p313
        %p711 = pneg %p337
        %p712 = pneg %p334
        %p713 = pneg %p358
        %p714 = pneg %p355
        %p715 = pneg %p379
        %p716 = pneg %p376
        %p717 = pneg %p400
        %p718 = pneg %p397
        %p719 = pneg %p421
        %p720 = pneg %p418
        %p721 = pneg %p442
        %p722 = pneg %p439
        %p723 = pneg %p463
        %p724 = pneg %p460
        %p725 = pneg %p484
        %p726 = pneg %p481
        %p727 = pneg %p505
        %p728 = pneg %p502
        %p729 = pneg %p526
        %p730 = pneg %p523
        %p731 = pneg %p547
        %p732 = pneg %p544
        %p733 = pneg %p573
        %p734 = pneg %p570
        %s735 = sand.u32 %s560, 1
        %s736 = scalar_lea.sflag [#allocation3], %s735
        %s737 = sand.u32 %s560, 1
        %s738 = scalar_lea.vmem [#allocation2], %s737
        %p739 = scmp.lt.s32.totalorder %s38, 1
        %s740 = scalar_select %p739, %s38, 1
        %s741 = smul.addr %s740, 8
        %s742 = scalar_lea.vmem %s0, %s741
        %p743 = scmp.lt.s32.totalorder %s38, 1
        %s744 = scalar_select %p743, %s38, 1
        %s745 = scalar_lea.vmem %s1, %s744
        %v747 = vld [vmem:[%s742] sm:$0xff]
        %v748 = vld [vmem:[%s2] sm:$0x1]
        %v749 = vld [vmem:[%s3] sm:$0x1]
        %vm750 = vcmask 261120
        %v751 = vsel %vm750, %v747, 0.0
        %752 = vadd.xlane.f32.xlu0 %v751
        %v753 = vpop.xlane.xlu0 %752
        %v754 = vrcp.pop 32.0
        %v755 = vmul.f32 %v753, %v754
        %v756 = vsub.f32 %v747, %v755
        %v757 = vmul.f32 %v756, %v756
        %v758 = vsel %vm750, %v757, 0.0
        %759 = vadd.xlane.f32.xlu0 %v758
        %v760 = vpop.xlane.xlu0 %759
        %v761 = vmul.f32 %v760, %v754
        %v762 = vadd.f32 %v761, 1e-12
        %v763 = vrsqrt.pop %v762
        %v764 = vmul.f32 %v756, %v763
        %v766 = vlaneseq
        %v767 = vshrl.u32 %v766, 7
        %v768 = vsub.s32 0, %v767
        %v769 = vrot.slane %v748, %v768
        %v771 = vmul.f32 %v764, %v769
        %v773 = vlaneseq
        %v774 = vshrl.u32 %v773, 7
        %v775 = vsub.s32 0, %v774
        %v776 = vrot.slane %v749, %v775
        %v778 = vadd.f32 %v771, %v776
        %v779 = vld [vmem:[%s745] sm:$0x1]
        %v780 = vsub.f32 1.0, %v779
        %v781 = vmul.f32 %v780, -10000.0
        %v782 = vld [vmem:[%s4] sm:$0xff]
        %v783 = vld [vmem:[%s4 + $0x8] sm:$0xff]
        %v784 = vld [vmem:[%s4 + $0x10] sm:$0xff]
        %v785 = vld [vmem:[%s4 + $0x18] sm:$0xff]
        %v786 = vld [vmem:[%s4 + $0x20] sm:$0xff]
        %v787 = vld [vmem:[%s4 + $0x28] sm:$0xff]
        %v788 = vld [vmem:[%s4 + $0x30] sm:$0xff]
        %v789 = vld [vmem:[%s4 + $0x38] sm:$0xff]
        %v790 = vld [vmem:[%s4 + $0x40] sm:$0xff]
        %v791 = vld [vmem:[%s4 + $0x48] sm:$0xff]
        %v792 = vld [vmem:[%s4 + $0x50] sm:$0xff]
        %v793 = vld [vmem:[%s4 + $0x58] sm:$0xff]
        %v794 = vld [vmem:[%s4 + $0x60] sm:$0xff]
        %v795 = vld [vmem:[%s4 + $0x68] sm:$0xff]
        %v796 = vld [vmem:[%s4 + $0x70] sm:$0xff]
        %v797 = vld [vmem:[%s4 + $0x78] sm:$0xff]
        %v798 = vpack.c.bf16 %v778, %v778
        %v799 = vpack.c.bf16 %v783, %v782
        %v800 = vpack.c.bf16 %v785, %v784
        %v801 = vpack.c.bf16 %v787, %v786
        %v802 = vpack.c.bf16 %v789, %v788
        %v803 = vpack.c.bf16 %v791, %v790
        %v804 = vpack.c.bf16 %v793, %v792
        %v805 = vpack.c.bf16 %v795, %v794
        %v806 = vpack.c.bf16 %v797, %v796
        %v807 = vld [vmem:[%s5] sm:$0x1]
        %v808 = vld [vmem:[%s5 + $0x1] sm:$0x1]
        %v809 = vld [vmem:[%s5 + $0x2] sm:$0x1]
        %v810 = vld [vmem:[%s5 + $0x3] sm:$0x1]
        %v815 = vlaneseq
        %v816 = vshrl.u32 %v815, 7
        %v817 = vsub.s32 0, %v816
        %v818 = vrot.slane %v807, %v817
        %v819 = vlaneseq
        %v820 = vshrl.u32 %v819, 7
        %v821 = vsub.s32 0, %v820
        %v822 = vrot.slane %v808, %v821
        %v823 = vlaneseq
        %v824 = vshrl.u32 %v823, 7
        %v825 = vsub.s32 0, %v824
        %v826 = vrot.slane %v809, %v825
        %v827 = vlaneseq
        %v828 = vshrl.u32 %v827, 7
        %v829 = vsub.s32 0, %v828
        %v830 = vrot.slane %v810, %v829
        %v836 = vsel %vm750, %v798, 0
        %838 = vmatprep.subr.bf16.mxu0 0
        %839 = vmatpush1.bf16.msra.mxu0 %v799
        %840 = vmatprep.subr.bf16.mxu0 0
        %841 = vmatpush1.bf16.msra.mxu0 %v800
        %842 = vmatprep.subr.bf16.mxu0 0
        %843 = vmatpush1.bf16.msra.mxu0 0
        %844 = vmatprep.subr.bf16.mxu0 0
        %845 = vmatpush1.bf16.msra.mxu0 0
        %846 = vmatprep.subr.bf16.mxu0 0
        %847 = vmatpush1.bf16.msra.mxu0 0
        %848 = vmatprep.subr.bf16.mxu0 0
        %849 = vmatpush1.bf16.msra.mxu0 0
        %850 = vmatprep.subr.bf16.mxu0 0
        %851 = vmatpush1.bf16.msra.mxu0 0
        %852 = vmatprep.subr.bf16.mxu0 0
        %853 = vmatpush1.bf16.msra.mxu0 0
        %854 = vmatprep.subr.bf16.mxu0 0
        %855 = vmatpush1.bf16.msra.mxu0 0
        %856 = vmatprep.subr.bf16.mxu0 0
        %857 = vmatpush1.bf16.msra.mxu0 0
        %858 = vmatprep.subr.bf16.mxu0 0
        %859 = vmatpush1.bf16.msra.mxu0 0
        %860 = vmatprep.subr.bf16.mxu0 0
        %861 = vmatpush1.bf16.msra.mxu0 0
        %862 = vmatprep.subr.bf16.mxu0 0
        %863 = vmatpush1.bf16.msra.mxu0 0
        %864 = vmatprep.subr.bf16.mxu0 0
        %865 = vmatpush1.bf16.msra.mxu0 0
        %866 = vmatprep.subr.bf16.mxu0 0
        %867 = vmatpush1.bf16.msra.mxu0 0
        %868 = vmatprep.subr.bf16.mxu0 0
        %869 = vmatpush1.bf16.msra.mxu0 0
        %870 = vmatprep.mubr.bf16.mxu0 0
        %871 = vmatmul.mubr.bf16.gmra.mrb[0].mxu0 %v836
        %v872 = vpop.f32.mrb[0].mxu0
        %v873 = vadd.f32 %v818, %v872
        %v874 = vpop.f32.mrb[0].mxu0
        %v875 = vpop.f32.mrb[0].mxu0
        %v876 = vpop.f32.mrb[0].mxu0
        %877 = vdwg.mxu0
        %878 = vmatprep.subr.bf16.mxu0 0
        %879 = vmatpush1.bf16.msra.mxu0 %v801
        %880 = vmatprep.subr.bf16.mxu0 0
        %881 = vmatpush1.bf16.msra.mxu0 %v802
        %882 = vmatprep.subr.bf16.mxu0 0
        %883 = vmatpush1.bf16.msra.mxu0 0
        %884 = vmatprep.subr.bf16.mxu0 0
        %885 = vmatpush1.bf16.msra.mxu0 0
        %886 = vmatprep.subr.bf16.mxu0 0
        %887 = vmatpush1.bf16.msra.mxu0 0
        %888 = vmatprep.subr.bf16.mxu0 0
        %889 = vmatpush1.bf16.msra.mxu0 0
        %890 = vmatprep.subr.bf16.mxu0 0
        %891 = vmatpush1.bf16.msra.mxu0 0
        %892 = vmatprep.subr.bf16.mxu0 0
        %893 = vmatpush1.bf16.msra.mxu0 0
        %894 = vmatprep.subr.bf16.mxu0 0
        %895 = vmatpush1.bf16.msra.mxu0 0
        %896 = vmatprep.subr.bf16.mxu0 0
        %897 = vmatpush1.bf16.msra.mxu0 0
        %898 = vmatprep.subr.bf16.mxu0 0
        %899 = vmatpush1.bf16.msra.mxu0 0
        %900 = vmatprep.subr.bf16.mxu0 0
        %901 = vmatpush1.bf16.msra.mxu0 0
        %902 = vmatprep.subr.bf16.mxu0 0
        %903 = vmatpush1.bf16.msra.mxu0 0
        %904 = vmatprep.subr.bf16.mxu0 0
        %905 = vmatpush1.bf16.msra.mxu0 0
        %906 = vmatprep.subr.bf16.mxu0 0
        %907 = vmatpush1.bf16.msra.mxu0 0
        %908 = vmatprep.subr.bf16.mxu0 0
        %909 = vmatpush1.bf16.msra.mxu0 0
        %910 = vmatprep.mubr.bf16.mxu0 0
        %911 = vmatmul.mubr.bf16.gmra.mrb[0].mxu0 %v836
        %v912 = vpop.f32.mrb[0].mxu0
        %v913 = vadd.f32 %v822, %v912
        %v914 = vpop.f32.mrb[0].mxu0
        %v915 = vpop.f32.mrb[0].mxu0
        %v916 = vpop.f32.mrb[0].mxu0
        %917 = vdwg.mxu0
        %918 = vmatprep.subr.bf16.mxu0 0
        %919 = vmatpush1.bf16.msra.mxu0 %v803
        %920 = vmatprep.subr.bf16.mxu0 0
        %921 = vmatpush1.bf16.msra.mxu0 %v804
        %922 = vmatprep.subr.bf16.mxu0 0
        %923 = vmatpush1.bf16.msra.mxu0 0
        %924 = vmatprep.subr.bf16.mxu0 0
        %925 = vmatpush1.bf16.msra.mxu0 0
        %926 = vmatprep.subr.bf16.mxu0 0
        %927 = vmatpush1.bf16.msra.mxu0 0
        %928 = vmatprep.subr.bf16.mxu0 0
        %929 = vmatpush1.bf16.msra.mxu0 0
        %930 = vmatprep.subr.bf16.mxu0 0
        %931 = vmatpush1.bf16.msra.mxu0 0
        %932 = vmatprep.subr.bf16.mxu0 0
        %933 = vmatpush1.bf16.msra.mxu0 0
        %934 = vmatprep.subr.bf16.mxu0 0
        %935 = vmatpush1.bf16.msra.mxu0 0
        %936 = vmatprep.subr.bf16.mxu0 0
        %937 = vmatpush1.bf16.msra.mxu0 0
        %938 = vmatprep.subr.bf16.mxu0 0
        %939 = vmatpush1.bf16.msra.mxu0 0
        %940 = vmatprep.subr.bf16.mxu0 0
        %941 = vmatpush1.bf16.msra.mxu0 0
        %942 = vmatprep.subr.bf16.mxu0 0
        %943 = vmatpush1.bf16.msra.mxu0 0
        %944 = vmatprep.subr.bf16.mxu0 0
        %945 = vmatpush1.bf16.msra.mxu0 0
        %946 = vmatprep.subr.bf16.mxu0 0
        %947 = vmatpush1.bf16.msra.mxu0 0
        %948 = vmatprep.subr.bf16.mxu0 0
        %949 = vmatpush1.bf16.msra.mxu0 0
        %950 = vmatprep.mubr.bf16.mxu0 0
        %951 = vmatmul.mubr.bf16.gmra.mrb[0].mxu0 %v836
        %v952 = vpop.f32.mrb[0].mxu0
        %v953 = vadd.f32 %v826, %v952
        %v954 = vpop.f32.mrb[0].mxu0
        %v955 = vpop.f32.mrb[0].mxu0
        %v956 = vpop.f32.mrb[0].mxu0
        %957 = vdwg.mxu0
        %958 = vmatprep.subr.bf16.mxu0 0
        %959 = vmatpush1.bf16.msra.mxu0 %v805
        %960 = vmatprep.subr.bf16.mxu0 0
        %961 = vmatpush1.bf16.msra.mxu0 %v806
        %962 = vmatprep.subr.bf16.mxu0 0
        %963 = vmatpush1.bf16.msra.mxu0 0
        %964 = vmatprep.subr.bf16.mxu0 0
        %965 = vmatpush1.bf16.msra.mxu0 0
        %966 = vmatprep.subr.bf16.mxu0 0
        %967 = vmatpush1.bf16.msra.mxu0 0
        %968 = vmatprep.subr.bf16.mxu0 0
        %969 = vmatpush1.bf16.msra.mxu0 0
        %970 = vmatprep.subr.bf16.mxu0 0
        %971 = vmatpush1.bf16.msra.mxu0 0
        %972 = vmatprep.subr.bf16.mxu0 0
        %973 = vmatpush1.bf16.msra.mxu0 0
        %974 = vmatprep.subr.bf16.mxu0 0
        %975 = vmatpush1.bf16.msra.mxu0 0
        %976 = vmatprep.subr.bf16.mxu0 0
        %977 = vmatpush1.bf16.msra.mxu0 0
        %978 = vmatprep.subr.bf16.mxu0 0
        %979 = vmatpush1.bf16.msra.mxu0 0
        %980 = vmatprep.subr.bf16.mxu0 0
        %981 = vmatpush1.bf16.msra.mxu0 0
        %982 = vmatprep.subr.bf16.mxu0 0
        %983 = vmatpush1.bf16.msra.mxu0 0
        %984 = vmatprep.subr.bf16.mxu0 0
        %985 = vmatpush1.bf16.msra.mxu0 0
        %986 = vmatprep.subr.bf16.mxu0 0
        %987 = vmatpush1.bf16.msra.mxu0 0
        %988 = vmatprep.subr.bf16.mxu0 0
        %989 = vmatpush1.bf16.msra.mxu0 0
        %990 = vmatprep.mubr.bf16.mxu0 0
        %991 = vmatmul.mubr.bf16.gmra.mrb[0].mxu0 %v836
        %v992 = vpop.f32.mrb[0].mxu0
        %v993 = vadd.f32 %v830, %v992
        %v994 = vpop.f32.mrb[0].mxu0
        %v995 = vpop.f32.mrb[0].mxu0
        %v996 = vpop.f32.mrb[0].mxu0
        %997 = vdwg.mxu0
        %v998 = vld [vmem:[%s6] sm:$0xff]
        %v999 = vld [vmem:[%s6 + $0x8] sm:$0xff]
        %v1000 = vld [vmem:[%s6 + $0x10] sm:$0xff]
        %v1001 = vld [vmem:[%s6 + $0x18] sm:$0xff]
        %v1002 = vld [vmem:[%s6 + $0x20] sm:$0xff]
        %v1003 = vld [vmem:[%s6 + $0x28] sm:$0xff]
        %v1004 = vld [vmem:[%s6 + $0x30] sm:$0xff]
        %v1005 = vld [vmem:[%s6 + $0x38] sm:$0xff]
        %v1006 = vld [vmem:[%s6 + $0x40] sm:$0xff]
        %v1007 = vld [vmem:[%s6 + $0x48] sm:$0xff]
        %v1008 = vld [vmem:[%s6 + $0x50] sm:$0xff]
        %v1009 = vld [vmem:[%s6 + $0x58] sm:$0xff]
        %v1010 = vld [vmem:[%s6 + $0x60] sm:$0xff]
        %v1011 = vld [vmem:[%s6 + $0x68] sm:$0xff]
        %v1012 = vld [vmem:[%s6 + $0x70] sm:$0xff]
        %v1013 = vld [vmem:[%s6 + $0x78] sm:$0xff]
        %v1014 = vpack.c.bf16 %v999, %v998
        %v1015 = vpack.c.bf16 %v1001, %v1000
        %v1016 = vpack.c.bf16 %v1003, %v1002
        %v1017 = vpack.c.bf16 %v1005, %v1004
        %v1018 = vpack.c.bf16 %v1007, %v1006
        %v1019 = vpack.c.bf16 %v1009, %v1008
        %v1020 = vpack.c.bf16 %v1011, %v1010
        %v1021 = vpack.c.bf16 %v1013, %v1012
        %v1022 = vld [vmem:[%s7] sm:$0x1]
        %v1023 = vld [vmem:[%s7 + $0x1] sm:$0x1]
        %v1024 = vld [vmem:[%s7 + $0x2] sm:$0x1]
        %v1025 = vld [vmem:[%s7 + $0x3] sm:$0x1]
        %v1030 = vlaneseq
        %v1031 = vshrl.u32 %v1030, 7
        %v1032 = vsub.s32 0, %v1031
        %v1033 = vrot.slane %v1022, %v1032
        %v1034 = vlaneseq
        %v1035 = vshrl.u32 %v1034, 7
        %v1036 = vsub.s32 0, %v1035
        %v1037 = vrot.slane %v1023, %v1036
        %v1038 = vlaneseq
        %v1039 = vshrl.u32 %v1038, 7
        %v1040 = vsub.s32 0, %v1039
        %v1041 = vrot.slane %v1024, %v1040
        %v1042 = vlaneseq
        %v1043 = vshrl.u32 %v1042, 7
        %v1044 = vsub.s32 0, %v1043
        %v1045 = vrot.slane %v1025, %v1044
        %1050 = vmatprep.subr.bf16.mxu0 0
        %1051 = vmatpush1.bf16.msra.mxu0 %v1014
        %1052 = vmatprep.subr.bf16.mxu0 0
        %1053 = vmatpush1.bf16.msra.mxu0 %v1015
        %1054 = vmatprep.subr.bf16.mxu0 0
        %1055 = vmatpush1.bf16.msra.mxu0 0
        %1056 = vmatprep.subr.bf16.mxu0 0
        %1057 = vmatpush1.bf16.msra.mxu0 0
        %1058 = vmatprep.subr.bf16.mxu0 0
        %1059 = vmatpush1.bf16.msra.mxu0 0
        %1060 = vmatprep.subr.bf16.mxu0 0
        %1061 = vmatpush1.bf16.msra.mxu0 0
        %1062 = vmatprep.subr.bf16.mxu0 0
        %1063 = vmatpush1.bf16.msra.mxu0 0
        %1064 = vmatprep.subr.bf16.mxu0 0
        %1065 = vmatpush1.bf16.msra.mxu0 0
        %1066 = vmatprep.subr.bf16.mxu0 0
        %1067 = vmatpush1.bf16.msra.mxu0 0
        %1068 = vmatprep.subr.bf16.mxu0 0
        %1069 = vmatpush1.bf16.msra.mxu0 0
        %1070 = vmatprep.subr.bf16.mxu0 0
        %1071 = vmatpush1.bf16.msra.mxu0 0
        %1072 = vmatprep.subr.bf16.mxu0 0
        %1073 = vmatpush1.bf16.msra.mxu0 0
        %1074 = vmatprep.subr.bf16.mxu0 0
        %1075 = vmatpush1.bf16.msra.mxu0 0
        %1076 = vmatprep.subr.bf16.mxu0 0
        %1077 = vmatpush1.bf16.msra.mxu0 0
        %1078 = vmatprep.subr.bf16.mxu0 0
        %1079 = vmatpush1.bf16.msra.mxu0 0
        %1080 = vmatprep.subr.bf16.mxu0 0
        %1081 = vmatpush1.bf16.msra.mxu0 0
        %1082 = vmatprep.mubr.bf16.mxu0 0
        %1083 = vmatmul.mubr.bf16.gmra.mrb[0].mxu0 %v836
        %v1084 = vpop.f32.mrb[0].mxu0
        %v1085 = vadd.f32 %v1033, %v1084
        %v1086 = vpop.f32.mrb[0].mxu0
        %v1087 = vpop.f32.mrb[0].mxu0
        %v1088 = vpop.f32.mrb[0].mxu0
        %1089 = vdwg.mxu0
        %1090 = vmatprep.subr.bf16.mxu0 0
        %1091 = vmatpush1.bf16.msra.mxu0 %v1016
        %1092 = vmatprep.subr.bf16.mxu0 0
        %1093 = vmatpush1.bf16.msra.mxu0 %v1017
        %1094 = vmatprep.subr.bf16.mxu0 0
        %1095 = vmatpush1.bf16.msra.mxu0 0
        %1096 = vmatprep.subr.bf16.mxu0 0
        %1097 = vmatpush1.bf16.msra.mxu0 0
        %1098 = vmatprep.subr.bf16.mxu0 0
        %1099 = vmatpush1.bf16.msra.mxu0 0
        %1100 = vmatprep.subr.bf16.mxu0 0
        %1101 = vmatpush1.bf16.msra.mxu0 0
        %1102 = vmatprep.subr.bf16.mxu0 0
        %1103 = vmatpush1.bf16.msra.mxu0 0
        %1104 = vmatprep.subr.bf16.mxu0 0
        %1105 = vmatpush1.bf16.msra.mxu0 0
        %1106 = vmatprep.subr.bf16.mxu0 0
        %1107 = vmatpush1.bf16.msra.mxu0 0
        %1108 = vmatprep.subr.bf16.mxu0 0
        %1109 = vmatpush1.bf16.msra.mxu0 0
        %1110 = vmatprep.subr.bf16.mxu0 0
        %1111 = vmatpush1.bf16.msra.mxu0 0
        %1112 = vmatprep.subr.bf16.mxu0 0
        %1113 = vmatpush1.bf16.msra.mxu0 0
        %1114 = vmatprep.subr.bf16.mxu0 0
        %1115 = vmatpush1.bf16.msra.mxu0 0
        %1116 = vmatprep.subr.bf16.mxu0 0
        %1117 = vmatpush1.bf16.msra.mxu0 0
        %1118 = vmatprep.subr.bf16.mxu0 0
        %1119 = vmatpush1.bf16.msra.mxu0 0
        %1120 = vmatprep.subr.bf16.mxu0 0
        %1121 = vmatpush1.bf16.msra.mxu0 0
        %1122 = vmatprep.mubr.bf16.mxu0 0
        %1123 = vmatmul.mubr.bf16.gmra.mrb[0].mxu0 %v836
        %v1124 = vpop.f32.mrb[0].mxu0
        %v1125 = vadd.f32 %v1037, %v1124
        %v1126 = vpop.f32.mrb[0].mxu0
        %v1127 = vpop.f32.mrb[0].mxu0
        %v1128 = vpop.f32.mrb[0].mxu0
        %1129 = vdwg.mxu0
        %1130 = vmatprep.subr.bf16.mxu0 0
        %1131 = vmatpush1.bf16.msra.mxu0 %v1018
        %1132 = vmatprep.subr.bf16.mxu0 0
        %1133 = vmatpush1.bf16.msra.mxu0 %v1019
        %1134 = vmatprep.subr.bf16.mxu0 0
        %1135 = vmatpush1.bf16.msra.mxu0 0
        %1136 = vmatprep.subr.bf16.mxu0 0
        %1137 = vmatpush1.bf16.msra.mxu0 0
        %1138 = vmatprep.subr.bf16.mxu0 0
        %1139 = vmatpush1.bf16.msra.mxu0 0
        %1140 = vmatprep.subr.bf16.mxu0 0
        %1141 = vmatpush1.bf16.msra.mxu0 0
        %1142 = vmatprep.subr.bf16.mxu0 0
        %1143 = vmatpush1.bf16.msra.mxu0 0
        %1144 = vmatprep.subr.bf16.mxu0 0
        %1145 = vmatpush1.bf16.msra.mxu0 0
        %1146 = vmatprep.subr.bf16.mxu0 0
        %1147 = vmatpush1.bf16.msra.mxu0 0
        %1148 = vmatprep.subr.bf16.mxu0 0
        %1149 = vmatpush1.bf16.msra.mxu0 0
        %1150 = vmatprep.subr.bf16.mxu0 0
        %1151 = vmatpush1.bf16.msra.mxu0 0
        %1152 = vmatprep.subr.bf16.mxu0 0
        %1153 = vmatpush1.bf16.msra.mxu0 0
        %1154 = vmatprep.subr.bf16.mxu0 0
        %1155 = vmatpush1.bf16.msra.mxu0 0
        %1156 = vmatprep.subr.bf16.mxu0 0
        %1157 = vmatpush1.bf16.msra.mxu0 0
        %1158 = vmatprep.subr.bf16.mxu0 0
        %1159 = vmatpush1.bf16.msra.mxu0 0
        %1160 = vmatprep.subr.bf16.mxu0 0
        %1161 = vmatpush1.bf16.msra.mxu0 0
        %1162 = vmatprep.mubr.bf16.mxu0 0
        %1163 = vmatmul.mubr.bf16.gmra.mrb[0].mxu0 %v836
        %v1164 = vpop.f32.mrb[0].mxu0
        %v1165 = vadd.f32 %v1041, %v1164
        %v1166 = vpop.f32.mrb[0].mxu0
        %v1167 = vpop.f32.mrb[0].mxu0
        %v1168 = vpop.f32.mrb[0].mxu0
        %1169 = vdwg.mxu0
        %1170 = vmatprep.subr.bf16.mxu0 0
        %1171 = vmatpush1.bf16.msra.mxu0 %v1020
        %1172 = vmatprep.subr.bf16.mxu0 0
        %1173 = vmatpush1.bf16.msra.mxu0 %v1021
        %1174 = vmatprep.subr.bf16.mxu0 0
        %1175 = vmatpush1.bf16.msra.mxu0 0
        %1176 = vmatprep.subr.bf16.mxu0 0
        %1177 = vmatpush1.bf16.msra.mxu0 0
        %1178 = vmatprep.subr.bf16.mxu0 0
        %1179 = vmatpush1.bf16.msra.mxu0 0
        %1180 = vmatprep.subr.bf16.mxu0 0
        %1181 = vmatpush1.bf16.msra.mxu0 0
        %1182 = vmatprep.subr.bf16.mxu0 0
        %1183 = vmatpush1.bf16.msra.mxu0 0
        %1184 = vmatprep.subr.bf16.mxu0 0
        %1185 = vmatpush1.bf16.msra.mxu0 0
        %1186 = vmatprep.subr.bf16.mxu0 0
        %1187 = vmatpush1.bf16.msra.mxu0 0
        %1188 = vmatprep.subr.bf16.mxu0 0
        %1189 = vmatpush1.bf16.msra.mxu0 0
        %1190 = vmatprep.subr.bf16.mxu0 0
        %1191 = vmatpush1.bf16.msra.mxu0 0
        %1192 = vmatprep.subr.bf16.mxu0 0
        %1193 = vmatpush1.bf16.msra.mxu0 0
        %1194 = vmatprep.subr.bf16.mxu0 0
        %1195 = vmatpush1.bf16.msra.mxu0 0
        %1196 = vmatprep.subr.bf16.mxu0 0
        %1197 = vmatpush1.bf16.msra.mxu0 0
        %1198 = vmatprep.subr.bf16.mxu0 0
        %1199 = vmatpush1.bf16.msra.mxu0 0
        %1200 = vmatprep.subr.bf16.mxu0 0
        %1201 = vmatpush1.bf16.msra.mxu0 0
        %1202 = vmatprep.mubr.bf16.mxu0 0
        %1203 = vmatmul.mubr.bf16.gmra.mrb[0].mxu0 %v836
        %v1204 = vpop.f32.mrb[0].mxu0
        %v1205 = vadd.f32 %v1045, %v1204
        %v1206 = vpop.f32.mrb[0].mxu0
        %v1207 = vpop.f32.mrb[0].mxu0
        %v1208 = vpop.f32.mrb[0].mxu0
        %1209 = vdwg.mxu0
        %v1210 = vld [vmem:[%s8] sm:$0xff]
        %v1211 = vld [vmem:[%s8 + $0x8] sm:$0xff]
        %v1212 = vld [vmem:[%s8 + $0x10] sm:$0xff]
        %v1213 = vld [vmem:[%s8 + $0x18] sm:$0xff]
        %v1214 = vld [vmem:[%s8 + $0x20] sm:$0xff]
        %v1215 = vld [vmem:[%s8 + $0x28] sm:$0xff]
        %v1216 = vld [vmem:[%s8 + $0x30] sm:$0xff]
        %v1217 = vld [vmem:[%s8 + $0x38] sm:$0xff]
        %v1218 = vld [vmem:[%s8 + $0x40] sm:$0xff]
        %v1219 = vld [vmem:[%s8 + $0x48] sm:$0xff]
        %v1220 = vld [vmem:[%s8 + $0x50] sm:$0xff]
        %v1221 = vld [vmem:[%s8 + $0x58] sm:$0xff]
        %v1222 = vld [vmem:[%s8 + $0x60] sm:$0xff]
        %v1223 = vld [vmem:[%s8 + $0x68] sm:$0xff]
        %v1224 = vld [vmem:[%s8 + $0x70] sm:$0xff]
        %v1225 = vld [vmem:[%s8 + $0x78] sm:$0xff]
        %v1226 = vpack.c.bf16 %v1211, %v1210
        %v1227 = vpack.c.bf16 %v1213, %v1212
        %v1228 = vpack.c.bf16 %v1215, %v1214
        %v1229 = vpack.c.bf16 %v1217, %v1216
        %v1230 = vpack.c.bf16 %v1219, %v1218
        %v1231 = vpack.c.bf16 %v1221, %v1220
        %v1232 = vpack.c.bf16 %v1223, %v1222
        %v1233 = vpack.c.bf16 %v1225, %v1224
        %v1234 = vld [vmem:[%s9] sm:$0x1]
        %v1235 = vld [vmem:[%s9 + $0x1] sm:$0x1]
        %v1236 = vld [vmem:[%s9 + $0x2] sm:$0x1]
        %v1237 = vld [vmem:[%s9 + $0x3] sm:$0x1]
        %v1242 = vlaneseq
        %v1243 = vshrl.u32 %v1242, 7
        %v1244 = vsub.s32 0, %v1243
        %v1245 = vrot.slane %v1234, %v1244
        %v1246 = vlaneseq
        %v1247 = vshrl.u32 %v1246, 7
        %v1248 = vsub.s32 0, %v1247
        %v1249 = vrot.slane %v1235, %v1248
        %v1250 = vlaneseq
        %v1251 = vshrl.u32 %v1250, 7
        %v1252 = vsub.s32 0, %v1251
        %v1253 = vrot.slane %v1236, %v1252
        %v1254 = vlaneseq
        %v1255 = vshrl.u32 %v1254, 7
        %v1256 = vsub.s32 0, %v1255
        %v1257 = vrot.slane %v1237, %v1256
        %1262 = vmatprep.subr.bf16.mxu0 0
        %1263 = vmatpush1.bf16.msra.mxu0 %v1226
        %1264 = vmatprep.subr.bf16.mxu0 0
        %1265 = vmatpush1.bf16.msra.mxu0 %v1227
        %1266 = vmatprep.subr.bf16.mxu0 0
        %1267 = vmatpush1.bf16.msra.mxu0 0
        %1268 = vmatprep.subr.bf16.mxu0 0
        %1269 = vmatpush1.bf16.msra.mxu0 0
        %1270 = vmatprep.subr.bf16.mxu0 0
        %1271 = vmatpush1.bf16.msra.mxu0 0
        %1272 = vmatprep.subr.bf16.mxu0 0
        %1273 = vmatpush1.bf16.msra.mxu0 0
        %1274 = vmatprep.subr.bf16.mxu0 0
        %1275 = vmatpush1.bf16.msra.mxu0 0
        %1276 = vmatprep.subr.bf16.mxu0 0
        %1277 = vmatpush1.bf16.msra.mxu0 0
        %1278 = vmatprep.subr.bf16.mxu0 0
        %1279 = vmatpush1.bf16.msra.mxu0 0
        %1280 = vmatprep.subr.bf16.mxu0 0
        %1281 = vmatpush1.bf16.msra.mxu0 0
        %1282 = vmatprep.subr.bf16.mxu0 0
        %1283 = vmatpush1.bf16.msra.mxu0 0
        %1284 = vmatprep.subr.bf16.mxu0 0
        %1285 = vmatpush1.bf16.msra.mxu0 0
        %1286 = vmatprep.subr.bf16.mxu0 0
        %1287 = vmatpush1.bf16.msra.mxu0 0
        %1288 = vmatprep.subr.bf16.mxu0 0
        %1289 = vmatpush1.bf16.msra.mxu0 0
        %1290 = vmatprep.subr.bf16.mxu0 0
        %1291 = vmatpush1.bf16.msra.mxu0 0
        %1292 = vmatprep.subr.bf16.mxu0 0
        %1293 = vmatpush1.bf16.msra.mxu0 0
        %1294 = vmatprep.mubr.bf16.mxu0 0
        %1295 = vmatmul.mubr.bf16.gmra.mrb[0].mxu0 %v836
        %v1296 = vpop.f32.mrb[0].mxu0
        %v1297 = vadd.f32 %v1245, %v1296
        %v1298 = vpop.f32.mrb[0].mxu0
        %v1299 = vpop.f32.mrb[0].mxu0
        %v1300 = vpop.f32.mrb[0].mxu0
        %1301 = vdwg.mxu0
        %1302 = vmatprep.subr.bf16.mxu0 0
        %1303 = vmatpush1.bf16.msra.mxu0 %v1228
        %1304 = vmatprep.subr.bf16.mxu0 0
        %1305 = vmatpush1.bf16.msra.mxu0 %v1229
        %1306 = vmatprep.subr.bf16.mxu0 0
        %1307 = vmatpush1.bf16.msra.mxu0 0
        %1308 = vmatprep.subr.bf16.mxu0 0
        %1309 = vmatpush1.bf16.msra.mxu0 0
        %1310 = vmatprep.subr.bf16.mxu0 0
        %1311 = vmatpush1.bf16.msra.mxu0 0
        %1312 = vmatprep.subr.bf16.mxu0 0
        %1313 = vmatpush1.bf16.msra.mxu0 0
        %1314 = vmatprep.subr.bf16.mxu0 0
        %1315 = vmatpush1.bf16.msra.mxu0 0
        %1316 = vmatprep.subr.bf16.mxu0 0
        %1317 = vmatpush1.bf16.msra.mxu0 0
        %1318 = vmatprep.subr.bf16.mxu0 0
        %1319 = vmatpush1.bf16.msra.mxu0 0
        %1320 = vmatprep.subr.bf16.mxu0 0
        %1321 = vmatpush1.bf16.msra.mxu0 0
        %1322 = vmatprep.subr.bf16.mxu0 0
        %1323 = vmatpush1.bf16.msra.mxu0 0
        %1324 = vmatprep.subr.bf16.mxu0 0
        %1325 = vmatpush1.bf16.msra.mxu0 0
        %1326 = vmatprep.subr.bf16.mxu0 0
        %1327 = vmatpush1.bf16.msra.mxu0 0
        %1328 = vmatprep.subr.bf16.mxu0 0
        %1329 = vmatpush1.bf16.msra.mxu0 0
        %1330 = vmatprep.subr.bf16.mxu0 0
        %1331 = vmatpush1.bf16.msra.mxu0 0
        %1332 = vmatprep.subr.bf16.mxu0 0
        %1333 = vmatpush1.bf16.msra.mxu0 0
        %1334 = vmatprep.mubr.bf16.mxu0 0
        %1335 = vmatmul.mubr.bf16.gmra.mrb[0].mxu0 %v836
        %v1336 = vpop.f32.mrb[0].mxu0
        %v1337 = vadd.f32 %v1249, %v1336
        %v1338 = vpop.f32.mrb[0].mxu0
        %v1339 = vpop.f32.mrb[0].mxu0
        %v1340 = vpop.f32.mrb[0].mxu0
        %1341 = vdwg.mxu0
        %1342 = vmatprep.subr.bf16.mxu0 0
        %1343 = vmatpush1.bf16.msra.mxu0 %v1230
        %1344 = vmatprep.subr.bf16.mxu0 0
        %1345 = vmatpush1.bf16.msra.mxu0 %v1231
        %1346 = vmatprep.subr.bf16.mxu0 0
        %1347 = vmatpush1.bf16.msra.mxu0 0
        %1348 = vmatprep.subr.bf16.mxu0 0
        %1349 = vmatpush1.bf16.msra.mxu0 0
        %1350 = vmatprep.subr.bf16.mxu0 0
        %1351 = vmatpush1.bf16.msra.mxu0 0
        %1352 = vmatprep.subr.bf16.mxu0 0
        %1353 = vmatpush1.bf16.msra.mxu0 0
        %1354 = vmatprep.subr.bf16.mxu0 0
        %1355 = vmatpush1.bf16.msra.mxu0 0
        %1356 = vmatprep.subr.bf16.mxu0 0
        %1357 = vmatpush1.bf16.msra.mxu0 0
        %1358 = vmatprep.subr.bf16.mxu0 0
        %1359 = vmatpush1.bf16.msra.mxu0 0
        %1360 = vmatprep.subr.bf16.mxu0 0
        %1361 = vmatpush1.bf16.msra.mxu0 0
        %1362 = vmatprep.subr.bf16.mxu0 0
        %1363 = vmatpush1.bf16.msra.mxu0 0
        %1364 = vmatprep.subr.bf16.mxu0 0
        %1365 = vmatpush1.bf16.msra.mxu0 0
        %1366 = vmatprep.subr.bf16.mxu0 0
        %1367 = vmatpush1.bf16.msra.mxu0 0
        %1368 = vmatprep.subr.bf16.mxu0 0
        %1369 = vmatpush1.bf16.msra.mxu0 0
        %1370 = vmatprep.subr.bf16.mxu0 0
        %1371 = vmatpush1.bf16.msra.mxu0 0
        %1372 = vmatprep.subr.bf16.mxu0 0
        %1373 = vmatpush1.bf16.msra.mxu0 0
        %1374 = vmatprep.mubr.bf16.mxu0 0
        %1375 = vmatmul.mubr.bf16.gmra.mrb[0].mxu0 %v836
        %v1376 = vpop.f32.mrb[0].mxu0
        %v1377 = vadd.f32 %v1253, %v1376
        %v1378 = vpop.f32.mrb[0].mxu0
        %v1379 = vpop.f32.mrb[0].mxu0
        %v1380 = vpop.f32.mrb[0].mxu0
        %1381 = vdwg.mxu0
        %1382 = vmatprep.subr.bf16.mxu0 0
        %1383 = vmatpush1.bf16.msra.mxu0 %v1232
        %1384 = vmatprep.subr.bf16.mxu0 0
        %1385 = vmatpush1.bf16.msra.mxu0 %v1233
        %1386 = vmatprep.subr.bf16.mxu0 0
        %1387 = vmatpush1.bf16.msra.mxu0 0
        %1388 = vmatprep.subr.bf16.mxu0 0
        %1389 = vmatpush1.bf16.msra.mxu0 0
        %1390 = vmatprep.subr.bf16.mxu0 0
        %1391 = vmatpush1.bf16.msra.mxu0 0
        %1392 = vmatprep.subr.bf16.mxu0 0
        %1393 = vmatpush1.bf16.msra.mxu0 0
        %1394 = vmatprep.subr.bf16.mxu0 0
        %1395 = vmatpush1.bf16.msra.mxu0 0
        %1396 = vmatprep.subr.bf16.mxu0 0
        %1397 = vmatpush1.bf16.msra.mxu0 0
        %1398 = vmatprep.subr.bf16.mxu0 0
        %1399 = vmatpush1.bf16.msra.mxu0 0
        %1400 = vmatprep.subr.bf16.mxu0 0
        %1401 = vmatpush1.bf16.msra.mxu0 0
        %1402 = vmatprep.subr.bf16.mxu0 0
        %1403 = vmatpush1.bf16.msra.mxu0 0
        %1404 = vmatprep.subr.bf16.mxu0 0
        %1405 = vmatpush1.bf16.msra.mxu0 0
        %1406 = vmatprep.subr.bf16.mxu0 0
        %1407 = vmatpush1.bf16.msra.mxu0 0
        %1408 = vmatprep.subr.bf16.mxu0 0
        %1409 = vmatpush1.bf16.msra.mxu0 0
        %1410 = vmatprep.subr.bf16.mxu0 0
        %1411 = vmatpush1.bf16.msra.mxu0 0
        %1412 = vmatprep.subr.bf16.mxu0 0
        %1413 = vmatpush1.bf16.msra.mxu0 0
        %1414 = vmatprep.mubr.bf16.mxu0 0
        %1415 = vmatmul.mubr.bf16.gmra.mrb[0].mxu0 %v836
        %v1416 = vpop.f32.mrb[0].mxu0
        %v1417 = vadd.f32 %v1257, %v1416
        %v1418 = vpop.f32.mrb[0].mxu0
        %v1419 = vpop.f32.mrb[0].mxu0
        %v1420 = vpop.f32.mrb[0].mxu0
        %1421 = vdwg.mxu0
        %v1422 = vpack.c.bf16 %v873, %v873
        %v1423 = vpack.c.bf16 %v913, %v913
        %v1424 = vpack.c.bf16 %v953, %v953
        %v1425 = vpack.c.bf16 %v993, %v993
        %v1426 = vpack.c.bf16 %v1085, %v1085
        %v1427 = vpack.c.bf16 %v1125, %v1125
        %v1428 = vpack.c.bf16 %v1165, %v1165
        %v1429 = vpack.c.bf16 %v1205, %v1205
        %vm1430 = vcmask 64512
        %v1432 = vsel %vm1430, %v1422, 0
        %v1435 = vsel %vm1430, %v1426, 0
        %1437 = vmatprep.subr.bf16.mxu0 0
        %1438 = vmatpush1.bf16.xpose.msra.mxu0 %v1435
        %1439 = vmatprep.subr.bf16.mxu0 0
        %1440 = vmatpush1.bf16.xpose.msra.mxu0 0
        %1441 = vmatprep.subr.bf16.mxu0 0
        %1442 = vmatpush1.bf16.xpose.msra.mxu0 0
        %1443 = vmatprep.subr.bf16.mxu0 0
        %1444 = vmatpush1.bf16.xpose.msra.mxu0 0
        %1445 = vmatprep.subr.bf16.mxu0 0
        %1446 = vmatpush1.bf16.xpose.msra.mxu0 0
        %1447 = vmatprep.subr.bf16.mxu0 0
        %1448 = vmatpush1.bf16.xpose.msra.mxu0 0
        %1449 = vmatprep.subr.bf16.mxu0 0
        %1450 = vmatpush1.bf16.xpose.msra.mxu0 0
        %1451 = vmatprep.subr.bf16.mxu0 0
        %1452 = vmatpush1.bf16.xpose.msra.mxu0 0
        %1453 = vmatprep.subr.bf16.mxu0 0
        %1454 = vmatpush1.bf16.xpose.msra.mxu0 0
        %1455 = vmatprep.subr.bf16.mxu0 0
        %1456 = vmatpush1.bf16.xpose.msra.mxu0 0
        %1457 = vmatprep.subr.bf16.mxu0 0
        %1458 = vmatpush1.bf16.xpose.msra.mxu0 0
        %1459 = vmatprep.subr.bf16.mxu0 0
        %1460 = vmatpush1.bf16.xpose.msra.mxu0 0
        %1461 = vmatprep.subr.bf16.mxu0 0
        %1462 = vmatpush1.bf16.xpose.msra.mxu0 0
        %1463 = vmatprep.subr.bf16.mxu0 0
        %1464 = vmatpush1.bf16.xpose.msra.mxu0 0
        %1465 = vmatprep.subr.bf16.mxu0 0
        %1466 = vmatpush1.bf16.xpose.msra.mxu0 0
        %1467 = vmatprep.subr.bf16.mxu0 0
        %1468 = vmatpush1.bf16.xpose.msra.mxu0 0
        %1469 = vmatprep.mubr.bf16.mxu0 0
        %1470 = vmatmul.mubr.bf16.gmra.mrb[0].mxu0 %v1432
        %v1471 = vpop.f32.mrb[0].mxu0
        %v1472 = vadd.f32 0.0, %v1471
        %v1473 = vpop.f32.mrb[0].mxu0
        %v1474 = vpop.f32.mrb[0].mxu0
        %v1475 = vpop.f32.mrb[0].mxu0
        %1476 = vdwg.mxu0
        %v1478 = vsel %vm1430, %v1423, 0
        %v1481 = vsel %vm1430, %v1427, 0
        %1483 = vmatprep.subr.bf16.mxu0 0
        %1484 = vmatpush1.bf16.xpose.msra.mxu0 %v1481
        %1485 = vmatprep.subr.bf16.mxu0 0
        %1486 = vmatpush1.bf16.xpose.msra.mxu0 0
        %1487 = vmatprep.subr.bf16.mxu0 0
        %1488 = vmatpush1.bf16.xpose.msra.mxu0 0
        %1489 = vmatprep.subr.bf16.mxu0 0
        %1490 = vmatpush1.bf16.xpose.msra.mxu0 0
        %1491 = vmatprep.subr.bf16.mxu0 0
        %1492 = vmatpush1.bf16.xpose.msra.mxu0 0
        %1493 = vmatprep.subr.bf16.mxu0 0
        %1494 = vmatpush1.bf16.xpose.msra.mxu0 0
        %1495 = vmatprep.subr.bf16.mxu0 0
        %1496 = vmatpush1.bf16.xpose.msra.mxu0 0
        %1497 = vmatprep.subr.bf16.mxu0 0
        %1498 = vmatpush1.bf16.xpose.msra.mxu0 0
        %1499 = vmatprep.subr.bf16.mxu0 0
        %1500 = vmatpush1.bf16.xpose.msra.mxu0 0
        %1501 = vmatprep.subr.bf16.mxu0 0
        %1502 = vmatpush1.bf16.xpose.msra.mxu0 0
        %1503 = vmatprep.subr.bf16.mxu0 0
        %1504 = vmatpush1.bf16.xpose.msra.mxu0 0
        %1505 = vmatprep.subr.bf16.mxu0 0
        %1506 = vmatpush1.bf16.xpose.msra.mxu0 0
        %1507 = vmatprep.subr.bf16.mxu0 0
        %1508 = vmatpush1.bf16.xpose.msra.mxu0 0
        %1509 = vmatprep.subr.bf16.mxu0 0
        %1510 = vmatpush1.bf16.xpose.msra.mxu0 0
        %1511 = vmatprep.subr.bf16.mxu0 0
        %1512 = vmatpush1.bf16.xpose.msra.mxu0 0
        %1513 = vmatprep.subr.bf16.mxu0 0
        %1514 = vmatpush1.bf16.xpose.msra.mxu0 0
        %1515 = vmatprep.mubr.bf16.mxu0 0
        %1516 = vmatmul.mubr.bf16.gmra.mrb[0].mxu0 %v1478
        %v1517 = vpop.f32.mrb[0].mxu0
        %v1518 = vadd.f32 0.0, %v1517
        %v1519 = vpop.f32.mrb[0].mxu0
        %v1520 = vpop.f32.mrb[0].mxu0
        %v1521 = vpop.f32.mrb[0].mxu0
        %1522 = vdwg.mxu0
        %v1524 = vsel %vm1430, %v1424, 0
        %v1527 = vsel %vm1430, %v1428, 0
        %1529 = vmatprep.subr.bf16.mxu0 0
        %1530 = vmatpush1.bf16.xpose.msra.mxu0 %v1527
        %1531 = vmatprep.subr.bf16.mxu0 0
        %1532 = vmatpush1.bf16.xpose.msra.mxu0 0
        %1533 = vmatprep.subr.bf16.mxu0 0
        %1534 = vmatpush1.bf16.xpose.msra.mxu0 0
        %1535 = vmatprep.subr.bf16.mxu0 0
        %1536 = vmatpush1.bf16.xpose.msra.mxu0 0
        %1537 = vmatprep.subr.bf16.mxu0 0
        %1538 = vmatpush1.bf16.xpose.msra.mxu0 0
        %1539 = vmatprep.subr.bf16.mxu0 0
        %1540 = vmatpush1.bf16.xpose.msra.mxu0 0
        %1541 = vmatprep.subr.bf16.mxu0 0
        %1542 = vmatpush1.bf16.xpose.msra.mxu0 0
        %1543 = vmatprep.subr.bf16.mxu0 0
        %1544 = vmatpush1.bf16.xpose.msra.mxu0 0
        %1545 = vmatprep.subr.bf16.mxu0 0
        %1546 = vmatpush1.bf16.xpose.msra.mxu0 0
        %1547 = vmatprep.subr.bf16.mxu0 0
        %1548 = vmatpush1.bf16.xpose.msra.mxu0 0
        %1549 = vmatprep.subr.bf16.mxu0 0
        %1550 = vmatpush1.bf16.xpose.msra.mxu0 0
        %1551 = vmatprep.subr.bf16.mxu0 0
        %1552 = vmatpush1.bf16.xpose.msra.mxu0 0
        %1553 = vmatprep.subr.bf16.mxu0 0
        %1554 = vmatpush1.bf16.xpose.msra.mxu0 0
        %1555 = vmatprep.subr.bf16.mxu0 0
        %1556 = vmatpush1.bf16.xpose.msra.mxu0 0
        %1557 = vmatprep.subr.bf16.mxu0 0
        %1558 = vmatpush1.bf16.xpose.msra.mxu0 0
        %1559 = vmatprep.subr.bf16.mxu0 0
        %1560 = vmatpush1.bf16.xpose.msra.mxu0 0
        %1561 = vmatprep.mubr.bf16.mxu0 0
        %1562 = vmatmul.mubr.bf16.gmra.mrb[0].mxu0 %v1524
        %v1563 = vpop.f32.mrb[0].mxu0
        %v1564 = vadd.f32 0.0, %v1563
        %v1565 = vpop.f32.mrb[0].mxu0
        %v1566 = vpop.f32.mrb[0].mxu0
        %v1567 = vpop.f32.mrb[0].mxu0
        %1568 = vdwg.mxu0
        %v1570 = vsel %vm1430, %v1425, 0
        %v1573 = vsel %vm1430, %v1429, 0
        %1575 = vmatprep.subr.bf16.mxu0 0
        %1576 = vmatpush1.bf16.xpose.msra.mxu0 %v1573
        %1577 = vmatprep.subr.bf16.mxu0 0
        %1578 = vmatpush1.bf16.xpose.msra.mxu0 0
        %1579 = vmatprep.subr.bf16.mxu0 0
        %1580 = vmatpush1.bf16.xpose.msra.mxu0 0
        %1581 = vmatprep.subr.bf16.mxu0 0
        %1582 = vmatpush1.bf16.xpose.msra.mxu0 0
        %1583 = vmatprep.subr.bf16.mxu0 0
        %1584 = vmatpush1.bf16.xpose.msra.mxu0 0
        %1585 = vmatprep.subr.bf16.mxu0 0
        %1586 = vmatpush1.bf16.xpose.msra.mxu0 0
        %1587 = vmatprep.subr.bf16.mxu0 0
        %1588 = vmatpush1.bf16.xpose.msra.mxu0 0
        %1589 = vmatprep.subr.bf16.mxu0 0
        %1590 = vmatpush1.bf16.xpose.msra.mxu0 0
        %1591 = vmatprep.subr.bf16.mxu0 0
        %1592 = vmatpush1.bf16.xpose.msra.mxu0 0
        %1593 = vmatprep.subr.bf16.mxu0 0
        %1594 = vmatpush1.bf16.xpose.msra.mxu0 0
        %1595 = vmatprep.subr.bf16.mxu0 0
        %1596 = vmatpush1.bf16.xpose.msra.mxu0 0
        %1597 = vmatprep.subr.bf16.mxu0 0
        %1598 = vmatpush1.bf16.xpose.msra.mxu0 0
        %1599 = vmatprep.subr.bf16.mxu0 0
        %1600 = vmatpush1.bf16.xpose.msra.mxu0 0
        %1601 = vmatprep.subr.bf16.mxu0 0
        %1602 = vmatpush1.bf16.xpose.msra.mxu0 0
        %1603 = vmatprep.subr.bf16.mxu0 0
        %1604 = vmatpush1.bf16.xpose.msra.mxu0 0
        %1605 = vmatprep.subr.bf16.mxu0 0
        %1606 = vmatpush1.bf16.xpose.msra.mxu0 0
        %1607 = vmatprep.mubr.bf16.mxu0 0
        %1608 = vmatmul.mubr.bf16.gmra.mrb[0].mxu0 %v1570
        %v1609 = vpop.f32.mrb[0].mxu0
        %v1610 = vadd.f32 0.0, %v1609
        %v1611 = vpop.f32.mrb[0].mxu0
        %v1612 = vpop.f32.mrb[0].mxu0
        %v1613 = vpop.f32.mrb[0].mxu0
        %1614 = vdwg.mxu0
        %v1615 = vmul.f32 %v1472, 0.35355338
        %v1616 = vmul.f32 %v1518, 0.35355338
        %v1617 = vmul.f32 %v1564, 0.35355338
        %v1618 = vmul.f32 %v1610, 0.35355338
        %v1620 = vlaneseq
        %v1621 = vshrl.u32 %v1620, 7
        %v1622 = vsub.s32 0, %v1621
        %v1623 = vrot.slane %v781, %v1622
        %v1625 = vadd.f32 %v1615, %v1623
        %v1626 = vadd.f32 %v1616, %v1623
        %v1627 = vadd.f32 %v1617, %v1623
        %v1628 = vadd.f32 %v1618, %v1623
        %v1629 = vsel %vm1430, %v1625, -inf
        %1630 = vmax.xlane.f32.xlu0 %v1629
        %v1631 = vpop.xlane.xlu0 %1630
        %v1632 = vsel %vm1430, %v1626, -inf
        %1633 = vmax.xlane.f32.xlu0 %v1632
        %v1634 = vpop.xlane.xlu0 %1633
        %v1635 = vsel %vm1430, %v1627, -inf
        %1636 = vmax.xlane.f32.xlu0 %v1635
        %v1637 = vpop.xlane.xlu0 %1636
        %v1638 = vsel %vm1430, %v1628, -inf
        %1639 = vmax.xlane.f32.xlu0 %v1638
        %v1640 = vpop.xlane.xlu0 %1639
        %v1641 = vsub.f32 %v1625, %v1631
        %v1642 = vsub.f32 %v1626, %v1634
        %v1643 = vsub.f32 %v1627, %v1637
        %v1644 = vsub.f32 %v1628, %v1640
        %v1645 = vmul.f32 %v1641, 1.442695
        %v1646 = vpow.pop %v1645
        %v1647 = vmul.f32 %v1642, 1.442695
        %v1648 = vpow.pop %v1647
        %v1649 = vmul.f32 %v1643, 1.442695
        %v1650 = vpow.pop %v1649
        %v1651 = vmul.f32 %v1644, 1.442695
        %v1652 = vpow.pop %v1651
        %v1653 = vsel %vm1430, %v1646, 0.0
        %1654 = vadd.xlane.f32.xlu0 %v1653
        %v1655 = vpop.xlane.xlu0 %1654
        %v1656 = vsel %vm1430, %v1648, 0.0
        %1657 = vadd.xlane.f32.xlu0 %v1656
        %v1658 = vpop.xlane.xlu0 %1657
        %v1659 = vsel %vm1430, %v1650, 0.0
        %1660 = vadd.xlane.f32.xlu0 %v1659
        %v1661 = vpop.xlane.xlu0 %1660
        %v1662 = vsel %vm1430, %v1652, 0.0
        %1663 = vadd.xlane.f32.xlu0 %v1662
        %v1664 = vpop.xlane.xlu0 %1663
        %v1665 = vrcp.pop %v1655
        %v1666 = vrcp.pop %v1658
        %v1667 = vrcp.pop %v1661
        %v1668 = vrcp.pop %v1664
        %v1669 = vmul.f32 %v1646, %v1665
        %v1670 = vmul.f32 %v1648, %v1666
        %v1671 = vmul.f32 %v1650, %v1667
        %v1672 = vmul.f32 %v1652, %v1668
        %v1673 = vpack.c.bf16 %v1669, %v1669
        %v1674 = vpack.c.bf16 %v1670, %v1670
        %v1675 = vpack.c.bf16 %v1671, %v1671
        %v1676 = vpack.c.bf16 %v1672, %v1672
        %v1677 = vpack.c.bf16 %v1297, %v1297
        %v1678 = vpack.c.bf16 %v1337, %v1337
        %v1679 = vpack.c.bf16 %v1377, %v1377
        %v1680 = vpack.c.bf16 %v1417, %v1417
        %v1682 = vsel %vm1430, %v1673, 0
        %vm1684 = vcmask 1043456
        %v1686 = vsel %vm1684, %v1677, 0
        %1688 = vmatprep.subr.bf16.mxu0 0
        %1689 = vmatpush1.bf16.msra.mxu0 %v1686
        %1690 = vmatprep.subr.bf16.mxu0 0
        %1691 = vmatpush1.bf16.msra.mxu0 0
        %1692 = vmatprep.subr.bf16.mxu0 0
        %1693 = vmatpush1.bf16.msra.mxu0 0
        %1694 = vmatprep.subr.bf16.mxu0 0
        %1695 = vmatpush1.bf16.msra.mxu0 0
        %1696 = vmatprep.subr.bf16.mxu0 0
        %1697 = vmatpush1.bf16.msra.mxu0 0
        %1698 = vmatprep.subr.bf16.mxu0 0
        %1699 = vmatpush1.bf16.msra.mxu0 0
        %1700 = vmatprep.subr.bf16.mxu0 0
        %1701 = vmatpush1.bf16.msra.mxu0 0
        %1702 = vmatprep.subr.bf16.mxu0 0
        %1703 = vmatpush1.bf16.msra.mxu0 0
        %1704 = vmatprep.subr.bf16.mxu0 0
        %1705 = vmatpush1.bf16.msra.mxu0 0
        %1706 = vmatprep.subr.bf16.mxu0 0
        %1707 = vmatpush1.bf16.msra.mxu0 0
        %1708 = vmatprep.subr.bf16.mxu0 0
        %1709 = vmatpush1.bf16.msra.mxu0 0
        %1710 = vmatprep.subr.bf16.mxu0 0
        %1711 = vmatpush1.bf16.msra.mxu0 0
        %1712 = vmatprep.subr.bf16.mxu0 0
        %1713 = vmatpush1.bf16.msra.mxu0 0
        %1714 = vmatprep.subr.bf16.mxu0 0
        %1715 = vmatpush1.bf16.msra.mxu0 0
        %1716 = vmatprep.subr.bf16.mxu0 0
        %1717 = vmatpush1.bf16.msra.mxu0 0
        %1718 = vmatprep.subr.bf16.mxu0 0
        %1719 = vmatpush1.bf16.msra.mxu0 0
        %1720 = vmatprep.mubr.bf16.mxu0 0
        %1721 = vmatmul.mubr.bf16.gmra.mrb[0].mxu0 %v1682
        %v1722 = vpop.f32.mrb[0].mxu0
        %v1723 = vadd.f32 0.0, %v1722
        %v1724 = vpop.f32.mrb[0].mxu0
        %v1725 = vpop.f32.mrb[0].mxu0
        %v1726 = vpop.f32.mrb[0].mxu0
        %1727 = vdwg.mxu0
        %v1729 = vsel %vm1430, %v1674, 0
        %v1732 = vsel %vm1684, %v1678, 0
        %1734 = vmatprep.subr.bf16.mxu0 0
        %1735 = vmatpush1.bf16.msra.mxu0 %v1732
        %1736 = vmatprep.subr.bf16.mxu0 0
        %1737 = vmatpush1.bf16.msra.mxu0 0
        %1738 = vmatprep.subr.bf16.mxu0 0
        %1739 = vmatpush1.bf16.msra.mxu0 0
        %1740 = vmatprep.subr.bf16.mxu0 0
        %1741 = vmatpush1.bf16.msra.mxu0 0
        %1742 = vmatprep.subr.bf16.mxu0 0
        %1743 = vmatpush1.bf16.msra.mxu0 0
        %1744 = vmatprep.subr.bf16.mxu0 0
        %1745 = vmatpush1.bf16.msra.mxu0 0
        %1746 = vmatprep.subr.bf16.mxu0 0
        %1747 = vmatpush1.bf16.msra.mxu0 0
        %1748 = vmatprep.subr.bf16.mxu0 0
        %1749 = vmatpush1.bf16.msra.mxu0 0
        %1750 = vmatprep.subr.bf16.mxu0 0
        %1751 = vmatpush1.bf16.msra.mxu0 0
        %1752 = vmatprep.subr.bf16.mxu0 0
        %1753 = vmatpush1.bf16.msra.mxu0 0
        %1754 = vmatprep.subr.bf16.mxu0 0
        %1755 = vmatpush1.bf16.msra.mxu0 0
        %1756 = vmatprep.subr.bf16.mxu0 0
        %1757 = vmatpush1.bf16.msra.mxu0 0
        %1758 = vmatprep.subr.bf16.mxu0 0
        %1759 = vmatpush1.bf16.msra.mxu0 0
        %1760 = vmatprep.subr.bf16.mxu0 0
        %1761 = vmatpush1.bf16.msra.mxu0 0
        %1762 = vmatprep.subr.bf16.mxu0 0
        %1763 = vmatpush1.bf16.msra.mxu0 0
        %1764 = vmatprep.subr.bf16.mxu0 0
        %1765 = vmatpush1.bf16.msra.mxu0 0
        %1766 = vmatprep.mubr.bf16.mxu0 0
        %1767 = vmatmul.mubr.bf16.gmra.mrb[0].mxu0 %v1729
        %v1768 = vpop.f32.mrb[0].mxu0
        %v1769 = vadd.f32 0.0, %v1768
        %v1770 = vpop.f32.mrb[0].mxu0
        %v1771 = vpop.f32.mrb[0].mxu0
        %v1772 = vpop.f32.mrb[0].mxu0
        %1773 = vdwg.mxu0
        %v1775 = vsel %vm1430, %v1675, 0
        %v1778 = vsel %vm1684, %v1679, 0
        %1780 = vmatprep.subr.bf16.mxu0 0
        %1781 = vmatpush1.bf16.msra.mxu0 %v1778
        %1782 = vmatprep.subr.bf16.mxu0 0
        %1783 = vmatpush1.bf16.msra.mxu0 0
        %1784 = vmatprep.subr.bf16.mxu0 0
        %1785 = vmatpush1.bf16.msra.mxu0 0
        %1786 = vmatprep.subr.bf16.mxu0 0
        %1787 = vmatpush1.bf16.msra.mxu0 0
        %1788 = vmatprep.subr.bf16.mxu0 0
        %1789 = vmatpush1.bf16.msra.mxu0 0
        %1790 = vmatprep.subr.bf16.mxu0 0
        %1791 = vmatpush1.bf16.msra.mxu0 0
        %1792 = vmatprep.subr.bf16.mxu0 0
        %1793 = vmatpush1.bf16.msra.mxu0 0
        %1794 = vmatprep.subr.bf16.mxu0 0
        %1795 = vmatpush1.bf16.msra.mxu0 0
        %1796 = vmatprep.subr.bf16.mxu0 0
        %1797 = vmatpush1.bf16.msra.mxu0 0
        %1798 = vmatprep.subr.bf16.mxu0 0
        %1799 = vmatpush1.bf16.msra.mxu0 0
        %1800 = vmatprep.subr.bf16.mxu0 0
        %1801 = vmatpush1.bf16.msra.mxu0 0
        %1802 = vmatprep.subr.bf16.mxu0 0
        %1803 = vmatpush1.bf16.msra.mxu0 0
        %1804 = vmatprep.subr.bf16.mxu0 0
        %1805 = vmatpush1.bf16.msra.mxu0 0
        %1806 = vmatprep.subr.bf16.mxu0 0
        %1807 = vmatpush1.bf16.msra.mxu0 0
        %1808 = vmatprep.subr.bf16.mxu0 0
        %1809 = vmatpush1.bf16.msra.mxu0 0
        %1810 = vmatprep.subr.bf16.mxu0 0
        %1811 = vmatpush1.bf16.msra.mxu0 0
        %1812 = vmatprep.mubr.bf16.mxu0 0
        %1813 = vmatmul.mubr.bf16.gmra.mrb[0].mxu0 %v1775
        %v1814 = vpop.f32.mrb[0].mxu0
        %v1815 = vadd.f32 0.0, %v1814
        %v1816 = vpop.f32.mrb[0].mxu0
        %v1817 = vpop.f32.mrb[0].mxu0
        %v1818 = vpop.f32.mrb[0].mxu0
        %1819 = vdwg.mxu0
        %v1821 = vsel %vm1430, %v1676, 0
        %v1824 = vsel %vm1684, %v1680, 0
        %1826 = vmatprep.subr.bf16.mxu0 0
        %1827 = vmatpush1.bf16.msra.mxu0 %v1824
        %1828 = vmatprep.subr.bf16.mxu0 0
        %1829 = vmatpush1.bf16.msra.mxu0 0
        %1830 = vmatprep.subr.bf16.mxu0 0
        %1831 = vmatpush1.bf16.msra.mxu0 0
        %1832 = vmatprep.subr.bf16.mxu0 0
        %1833 = vmatpush1.bf16.msra.mxu0 0
        %1834 = vmatprep.subr.bf16.mxu0 0
        %1835 = vmatpush1.bf16.msra.mxu0 0
        %1836 = vmatprep.subr.bf16.mxu0 0
        %1837 = vmatpush1.bf16.msra.mxu0 0
        %1838 = vmatprep.subr.bf16.mxu0 0
        %1839 = vmatpush1.bf16.msra.mxu0 0
        %1840 = vmatprep.subr.bf16.mxu0 0
        %1841 = vmatpush1.bf16.msra.mxu0 0
        %1842 = vmatprep.subr.bf16.mxu0 0
        %1843 = vmatpush1.bf16.msra.mxu0 0
        %1844 = vmatprep.subr.bf16.mxu0 0
        %1845 = vmatpush1.bf16.msra.mxu0 0
        %1846 = vmatprep.subr.bf16.mxu0 0
        %1847 = vmatpush1.bf16.msra.mxu0 0
        %1848 = vmatprep.subr.bf16.mxu0 0
        %1849 = vmatpush1.bf16.msra.mxu0 0
        %1850 = vmatprep.subr.bf16.mxu0 0
        %1851 = vmatpush1.bf16.msra.mxu0 0
        %1852 = vmatprep.subr.bf16.mxu0 0
        %1853 = vmatpush1.bf16.msra.mxu0 0
        %1854 = vmatprep.subr.bf16.mxu0 0
        %1855 = vmatpush1.bf16.msra.mxu0 0
        %1856 = vmatprep.subr.bf16.mxu0 0
        %1857 = vmatpush1.bf16.msra.mxu0 0
        %1858 = vmatprep.mubr.bf16.mxu0 0
        %1859 = vmatmul.mubr.bf16.gmra.mrb[0].mxu0 %v1821
        %v1860 = vpop.f32.mrb[0].mxu0
        %v1861 = vadd.f32 0.0, %v1860
        %v1862 = vpop.f32.mrb[0].mxu0
        %v1863 = vpop.f32.mrb[0].mxu0
        %v1864 = vpop.f32.mrb[0].mxu0
        %1865 = vdwg.mxu0
        %v1866 = vld [vmem:[%s10] sm:$0xff]
        %v1867 = vld [vmem:[%s10 + $0x8] sm:$0xff]
        %v1868 = vld [vmem:[%s10 + $0x10] sm:$0xff]
        %v1869 = vld [vmem:[%s10 + $0x18] sm:$0xff]
        %v1870 = vpack.c.bf16 %v1723, %v1723
        %v1871 = vpack.c.bf16 %v1769, %v1769
        %v1872 = vpack.c.bf16 %v1815, %v1815
        %v1873 = vpack.c.bf16 %v1861, %v1861
        %v1874 = vpack.c.bf16 %v1866, %v1866
        %v1875 = vpack.c.bf16 %v1867, %v1867
        %v1876 = vpack.c.bf16 %v1868, %v1868
        %v1877 = vpack.c.bf16 %v1869, %v1869
        %v1879 = vsel %vm1430, %v1870, 0
        %v1882 = vsel %vm1684, %v1874, 0
        %1884 = vmatprep.subr.bf16.mxu0 0
        %1885 = vmatpush1.bf16.msra.mxu0 %v1882
        %1886 = vmatprep.subr.bf16.mxu0 0
        %1887 = vmatpush1.bf16.msra.mxu0 0
        %1888 = vmatprep.subr.bf16.mxu0 0
        %1889 = vmatpush1.bf16.msra.mxu0 0
        %1890 = vmatprep.subr.bf16.mxu0 0
        %1891 = vmatpush1.bf16.msra.mxu0 0
        %1892 = vmatprep.subr.bf16.mxu0 0
        %1893 = vmatpush1.bf16.msra.mxu0 0
        %1894 = vmatprep.subr.bf16.mxu0 0
        %1895 = vmatpush1.bf16.msra.mxu0 0
        %1896 = vmatprep.subr.bf16.mxu0 0
        %1897 = vmatpush1.bf16.msra.mxu0 0
        %1898 = vmatprep.subr.bf16.mxu0 0
        %1899 = vmatpush1.bf16.msra.mxu0 0
        %1900 = vmatprep.subr.bf16.mxu0 0
        %1901 = vmatpush1.bf16.msra.mxu0 0
        %1902 = vmatprep.subr.bf16.mxu0 0
        %1903 = vmatpush1.bf16.msra.mxu0 0
        %1904 = vmatprep.subr.bf16.mxu0 0
        %1905 = vmatpush1.bf16.msra.mxu0 0
        %1906 = vmatprep.subr.bf16.mxu0 0
        %1907 = vmatpush1.bf16.msra.mxu0 0
        %1908 = vmatprep.subr.bf16.mxu0 0
        %1909 = vmatpush1.bf16.msra.mxu0 0
        %1910 = vmatprep.subr.bf16.mxu0 0
        %1911 = vmatpush1.bf16.msra.mxu0 0
        %1912 = vmatprep.subr.bf16.mxu0 0
        %1913 = vmatpush1.bf16.msra.mxu0 0
        %1914 = vmatprep.subr.bf16.mxu0 0
        %1915 = vmatpush1.bf16.msra.mxu0 0
        %1916 = vmatprep.mubr.bf16.mxu0 0
        %1917 = vmatmul.mubr.bf16.gmra.mrb[0].mxu0 %v1879
        %v1918 = vpop.f32.mrb[0].mxu0
        %v1919 = vadd.f32 0.0, %v1918
        %v1920 = vpop.f32.mrb[0].mxu0
        %v1921 = vpop.f32.mrb[0].mxu0
        %v1922 = vpop.f32.mrb[0].mxu0
        %1923 = vdwg.mxu0
        %v1925 = vsel %vm1430, %v1871, 0
        %v1928 = vsel %vm1684, %v1875, 0
        %1930 = vmatprep.subr.bf16.mxu0 0
        %1931 = vmatpush1.bf16.msra.mxu0 %v1928
        %1932 = vmatprep.subr.bf16.mxu0 0
        %1933 = vmatpush1.bf16.msra.mxu0 0
        %1934 = vmatprep.subr.bf16.mxu0 0
        %1935 = vmatpush1.bf16.msra.mxu0 0
        %1936 = vmatprep.subr.bf16.mxu0 0
        %1937 = vmatpush1.bf16.msra.mxu0 0
        %1938 = vmatprep.subr.bf16.mxu0 0
        %1939 = vmatpush1.bf16.msra.mxu0 0
        %1940 = vmatprep.subr.bf16.mxu0 0
        %1941 = vmatpush1.bf16.msra.mxu0 0
        %1942 = vmatprep.subr.bf16.mxu0 0
        %1943 = vmatpush1.bf16.msra.mxu0 0
        %1944 = vmatprep.subr.bf16.mxu0 0
        %1945 = vmatpush1.bf16.msra.mxu0 0
        %1946 = vmatprep.subr.bf16.mxu0 0
        %1947 = vmatpush1.bf16.msra.mxu0 0
        %1948 = vmatprep.subr.bf16.mxu0 0
        %1949 = vmatpush1.bf16.msra.mxu0 0
        %1950 = vmatprep.subr.bf16.mxu0 0
        %1951 = vmatpush1.bf16.msra.mxu0 0
        %1952 = vmatprep.subr.bf16.mxu0 0
        %1953 = vmatpush1.bf16.msra.mxu0 0
        %1954 = vmatprep.subr.bf16.mxu0 0
        %1955 = vmatpush1.bf16.msra.mxu0 0
        %1956 = vmatprep.subr.bf16.mxu0 0
        %1957 = vmatpush1.bf16.msra.mxu0 0
        %1958 = vmatprep.subr.bf16.mxu0 0
        %1959 = vmatpush1.bf16.msra.mxu0 0
        %1960 = vmatprep.subr.bf16.mxu0 0
        %1961 = vmatpush1.bf16.msra.mxu0 0
        %1962 = vmatprep.mubr.bf16.mxu0 0
        %1963 = vmatmul.mubr.bf16.gmra.mrb[0].mxu0 %v1925
        %v1964 = vpop.f32.mrb[0].mxu0
        %v1965 = vadd.f32 0.0, %v1964
        %v1966 = vpop.f32.mrb[0].mxu0
        %v1967 = vpop.f32.mrb[0].mxu0
        %v1968 = vpop.f32.mrb[0].mxu0
        %1969 = vdwg.mxu0
        %v1971 = vsel %vm1430, %v1872, 0
        %v1974 = vsel %vm1684, %v1876, 0
        %1976 = vmatprep.subr.bf16.mxu0 0
        %1977 = vmatpush1.bf16.msra.mxu0 %v1974
        %1978 = vmatprep.subr.bf16.mxu0 0
        %1979 = vmatpush1.bf16.msra.mxu0 0
        %1980 = vmatprep.subr.bf16.mxu0 0
        %1981 = vmatpush1.bf16.msra.mxu0 0
        %1982 = vmatprep.subr.bf16.mxu0 0
        %1983 = vmatpush1.bf16.msra.mxu0 0
        %1984 = vmatprep.subr.bf16.mxu0 0
        %1985 = vmatpush1.bf16.msra.mxu0 0
        %1986 = vmatprep.subr.bf16.mxu0 0
        %1987 = vmatpush1.bf16.msra.mxu0 0
        %1988 = vmatprep.subr.bf16.mxu0 0
        %1989 = vmatpush1.bf16.msra.mxu0 0
        %1990 = vmatprep.subr.bf16.mxu0 0
        %1991 = vmatpush1.bf16.msra.mxu0 0
        %1992 = vmatprep.subr.bf16.mxu0 0
        %1993 = vmatpush1.bf16.msra.mxu0 0
        %1994 = vmatprep.subr.bf16.mxu0 0
        %1995 = vmatpush1.bf16.msra.mxu0 0
        %1996 = vmatprep.subr.bf16.mxu0 0
        %1997 = vmatpush1.bf16.msra.mxu0 0
        %1998 = vmatprep.subr.bf16.mxu0 0
        %1999 = vmatpush1.bf16.msra.mxu0 0
        %2000 = vmatprep.subr.bf16.mxu0 0
        %2001 = vmatpush1.bf16.msra.mxu0 0
        %2002 = vmatprep.subr.bf16.mxu0 0
        %2003 = vmatpush1.bf16.msra.mxu0 0
        %2004 = vmatprep.subr.bf16.mxu0 0
        %2005 = vmatpush1.bf16.msra.mxu0 0
        %2006 = vmatprep.subr.bf16.mxu0 0
        %2007 = vmatpush1.bf16.msra.mxu0 0
        %2008 = vmatprep.mubr.bf16.mxu0 0
        %2009 = vmatmul.mubr.bf16.gmra.mrb[0].mxu0 %v1971
        %v2010 = vpop.f32.mrb[0].mxu0
        %v2011 = vadd.f32 0.0, %v2010
        %v2012 = vpop.f32.mrb[0].mxu0
        %v2013 = vpop.f32.mrb[0].mxu0
        %v2014 = vpop.f32.mrb[0].mxu0
        %2015 = vdwg.mxu0
        %v2017 = vsel %vm1430, %v1873, 0
        %v2020 = vsel %vm1684, %v1877, 0
        %2022 = vmatprep.subr.bf16.mxu0 0
        %2023 = vmatpush1.bf16.msra.mxu0 %v2020
        %2024 = vmatprep.subr.bf16.mxu0 0
        %2025 = vmatpush1.bf16.msra.mxu0 0
        %2026 = vmatprep.subr.bf16.mxu0 0
        %2027 = vmatpush1.bf16.msra.mxu0 0
        %2028 = vmatprep.subr.bf16.mxu0 0
        %2029 = vmatpush1.bf16.msra.mxu0 0
        %2030 = vmatprep.subr.bf16.mxu0 0
        %2031 = vmatpush1.bf16.msra.mxu0 0
        %2032 = vmatprep.subr.bf16.mxu0 0
        %2033 = vmatpush1.bf16.msra.mxu0 0
        %2034 = vmatprep.subr.bf16.mxu0 0
        %2035 = vmatpush1.bf16.msra.mxu0 0
        %2036 = vmatprep.subr.bf16.mxu0 0
        %2037 = vmatpush1.bf16.msra.mxu0 0
        %2038 = vmatprep.subr.bf16.mxu0 0
        %2039 = vmatpush1.bf16.msra.mxu0 0
        %2040 = vmatprep.subr.bf16.mxu0 0
        %2041 = vmatpush1.bf16.msra.mxu0 0
        %2042 = vmatprep.subr.bf16.mxu0 0
        %2043 = vmatpush1.bf16.msra.mxu0 0
        %2044 = vmatprep.subr.bf16.mxu0 0
        %2045 = vmatpush1.bf16.msra.mxu0 0
        %2046 = vmatprep.subr.bf16.mxu0 0
        %2047 = vmatpush1.bf16.msra.mxu0 0
        %2048 = vmatprep.subr.bf16.mxu0 0
        %2049 = vmatpush1.bf16.msra.mxu0 0
        %2050 = vmatprep.subr.bf16.mxu0 0
        %2051 = vmatpush1.bf16.msra.mxu0 0
        %2052 = vmatprep.subr.bf16.mxu0 0
        %2053 = vmatpush1.bf16.msra.mxu0 0
        %2054 = vmatprep.mubr.bf16.mxu0 0
        %2055 = vmatmul.mubr.bf16.gmra.mrb[0].mxu0 %v2017
        %v2056 = vpop.f32.mrb[0].mxu0
        %v2057 = vadd.f32 0.0, %v2056
        %v2058 = vpop.f32.mrb[0].mxu0
        %v2059 = vpop.f32.mrb[0].mxu0
        %v2060 = vpop.f32.mrb[0].mxu0
        %2061 = vdwg.mxu0
        %v2062 = vadd.f32 %v1919, %v1965
        %v2063 = vadd.f32 %v2062, %v2011
        %v2064 = vadd.f32 %v2063, %v2057
        %v2065 = vld [vmem:[%s11] sm:$0x1]
        %v2067 = vlaneseq
        %v2068 = vshrl.u32 %v2067, 7
        %v2069 = vsub.s32 0, %v2068
        %v2070 = vrot.slane %v2065, %v2069
        %v2072 = vadd.f32 %v2064, %v2070
        %v2073 = vadd.f32 %v778, %v2072
        %v2074 = vld [vmem:[%s12] sm:$0x1]
        %v2075 = vld [vmem:[%s13] sm:$0x1]
        %v2076 = vsel %vm750, %v2073, 0.0
        %2077 = vadd.xlane.f32.xlu0 %v2076
        %v2078 = vpop.xlane.xlu0 %2077
        %v2079 = vmul.f32 %v2078, %v754
        %v2080 = vsub.f32 %v2073, %v2079
        %v2081 = vmul.f32 %v2080, %v2080
        %v2082 = vsel %vm750, %v2081, 0.0
        %2083 = vadd.xlane.f32.xlu0 %v2082
        %v2084 = vpop.xlane.xlu0 %2083
        %v2085 = vmul.f32 %v2084, %v754
        %v2086 = vadd.f32 %v2085, 1e-12
        %v2087 = vrsqrt.pop %v2086
        %v2088 = vmul.f32 %v2080, %v2087
        %v2090 = vlaneseq
        %v2091 = vshrl.u32 %v2090, 7
        %v2092 = vsub.s32 0, %v2091
        %v2093 = vrot.slane %v2074, %v2092
        %v2095 = vmul.f32 %v2088, %v2093
        %v2097 = vlaneseq
        %v2098 = vshrl.u32 %v2097, 7
        %v2099 = vsub.s32 0, %v2098
        %v2100 = vrot.slane %v2075, %v2099
        %v2102 = vadd.f32 %v2095, %v2100
        %v2103 = vld [vmem:[%s14] sm:$0xff]
        %v2104 = vld [vmem:[%s14 + $0x8] sm:$0xff]
        %v2105 = vld [vmem:[%s14 + $0x10] sm:$0xff]
        %v2106 = vld [vmem:[%s14 + $0x18] sm:$0xff]
        %v2107 = vpack.c.bf16 %v2102, %v2102
        %v2108 = vpack.c.bf16 %v2104, %v2103
        %v2109 = vpack.c.bf16 %v2106, %v2105
        %v2110 = vld [vmem:[%s15] sm:$0x1]
        %v2112 = vlaneseq
        %v2113 = vshrl.u32 %v2112, 7
        %v2114 = vsub.s32 0, %v2113
        %v2115 = vrot.slane %v2110, %v2114
        %v2118 = vsel %vm750, %v2107, 0
        %2120 = vmatprep.subr.bf16.mxu0 0
        %2121 = vmatpush1.bf16.msra.mxu0 %v2108
        %2122 = vmatprep.subr.bf16.mxu0 0
        %2123 = vmatpush1.bf16.msra.mxu0 %v2109
        %2124 = vmatprep.subr.bf16.mxu0 0
        %2125 = vmatpush1.bf16.msra.mxu0 0
        %2126 = vmatprep.subr.bf16.mxu0 0
        %2127 = vmatpush1.bf16.msra.mxu0 0
        %2128 = vmatprep.subr.bf16.mxu0 0
        %2129 = vmatpush1.bf16.msra.mxu0 0
        %2130 = vmatprep.subr.bf16.mxu0 0
        %2131 = vmatpush1.bf16.msra.mxu0 0
        %2132 = vmatprep.subr.bf16.mxu0 0
        %2133 = vmatpush1.bf16.msra.mxu0 0
        %2134 = vmatprep.subr.bf16.mxu0 0
        %2135 = vmatpush1.bf16.msra.mxu0 0
        %2136 = vmatprep.subr.bf16.mxu0 0
        %2137 = vmatpush1.bf16.msra.mxu0 0
        %2138 = vmatprep.subr.bf16.mxu0 0
        %2139 = vmatpush1.bf16.msra.mxu0 0
        %2140 = vmatprep.subr.bf16.mxu0 0
        %2141 = vmatpush1.bf16.msra.mxu0 0
        %2142 = vmatprep.subr.bf16.mxu0 0
        %2143 = vmatpush1.bf16.msra.mxu0 0
        %2144 = vmatprep.subr.bf16.mxu0 0
        %2145 = vmatpush1.bf16.msra.mxu0 0
        %2146 = vmatprep.subr.bf16.mxu0 0
        %2147 = vmatpush1.bf16.msra.mxu0 0
        %2148 = vmatprep.subr.bf16.mxu0 0
        %2149 = vmatpush1.bf16.msra.mxu0 0
        %2150 = vmatprep.subr.bf16.mxu0 0
        %2151 = vmatpush1.bf16.msra.mxu0 0
        %2152 = vmatprep.mubr.bf16.mxu0 0
        %2153 = vmatmul.mubr.bf16.gmra.mrb[0].mxu0 %v2118
        %v2154 = vpop.f32.mrb[0].mxu0
        %v2155 = vadd.f32 %v2115, %v2154
        %v2156 = vpop.f32.mrb[0].mxu0
        %v2157 = vpop.f32.mrb[0].mxu0
        %v2158 = vpop.f32.mrb[0].mxu0
        %2159 = vdwg.mxu0
        %v2160 = vmul.f32 %v2155, %v2155
        %v2161 = vmul.f32 %v2155, %v2160
        %v2162 = vmul.f32 %v2161, 0.044715
        %v2163 = vadd.f32 %v2155, %v2162
        %v2164 = vmul.f32 %v2163, 0.7978846
        %v2165 = vtanh.pop %v2164
        %v2166 = vadd.f32 %v2165, 1.0
        %v2167 = vmul.f32 %v2166, 0.5
        %v2168 = vmul.f32 %v2155, %v2167
        %v2169 = vld [vmem:[%s16] sm:$0xff]
        %v2170 = vld [vmem:[%s16 + $0x8] sm:$0xff]
        %v2171 = vld [vmem:[%s16 + $0x10] sm:$0xff]
        %v2172 = vld [vmem:[%s16 + $0x18] sm:$0xff]
        %v2173 = vld [vmem:[%s16 + $0x20] sm:$0xff]
        %v2174 = vld [vmem:[%s16 + $0x28] sm:$0xff]
        %v2175 = vld [vmem:[%s16 + $0x30] sm:$0xff]
        %v2176 = vld [vmem:[%s16 + $0x38] sm:$0xff]
        %v2177 = vpack.c.bf16 %v2168, %v2168
        %v2178 = vpack.c.bf16 %v2170, %v2169
        %v2179 = vpack.c.bf16 %v2172, %v2171
        %v2180 = vpack.c.bf16 %v2174, %v2173
        %v2181 = vpack.c.bf16 %v2176, %v2175
        %v2182 = vld [vmem:[%s17] sm:$0x1]
        %v2184 = vlaneseq
        %v2185 = vshrl.u32 %v2184, 7
        %v2186 = vsub.s32 0, %v2185
        %v2187 = vrot.slane %v2182, %v2186
        %vm2189 = vcmask 523264
        %v2191 = vsel %vm2189, %v2177, 0
        %2193 = vmatprep.subr.bf16.mxu0 0
        %2194 = vmatpush1.bf16.msra.mxu0 %v2178
        %2195 = vmatprep.subr.bf16.mxu0 0
        %2196 = vmatpush1.bf16.msra.mxu0 %v2179
        %2197 = vmatprep.subr.bf16.mxu0 0
        %2198 = vmatpush1.bf16.msra.mxu0 %v2180
        %2199 = vmatprep.subr.bf16.mxu0 0
        %2200 = vmatpush1.bf16.msra.mxu0 %v2181
        %2201 = vmatprep.subr.bf16.mxu0 0
        %2202 = vmatpush1.bf16.msra.mxu0 0
        %2203 = vmatprep.subr.bf16.mxu0 0
        %2204 = vmatpush1.bf16.msra.mxu0 0
        %2205 = vmatprep.subr.bf16.mxu0 0
        %2206 = vmatpush1.bf16.msra.mxu0 0
        %2207 = vmatprep.subr.bf16.mxu0 0
        %2208 = vmatpush1.bf16.msra.mxu0 0
        %2209 = vmatprep.subr.bf16.mxu0 0
        %2210 = vmatpush1.bf16.msra.mxu0 0
        %2211 = vmatprep.subr.bf16.mxu0 0
        %2212 = vmatpush1.bf16.msra.mxu0 0
        %2213 = vmatprep.subr.bf16.mxu0 0
        %2214 = vmatpush1.bf16.msra.mxu0 0
        %2215 = vmatprep.subr.bf16.mxu0 0
        %2216 = vmatpush1.bf16.msra.mxu0 0
        %2217 = vmatprep.subr.bf16.mxu0 0
        %2218 = vmatpush1.bf16.msra.mxu0 0
        %2219 = vmatprep.subr.bf16.mxu0 0
        %2220 = vmatpush1.bf16.msra.mxu0 0
        %2221 = vmatprep.subr.bf16.mxu0 0
        %2222 = vmatpush1.bf16.msra.mxu0 0
        %2223 = vmatprep.subr.bf16.mxu0 0
        %2224 = vmatpush1.bf16.msra.mxu0 0
        %2225 = vmatprep.mubr.bf16.mxu0 0
        %2226 = vmatmul.mubr.bf16.gmra.mrb[0].mxu0 %v2191
        %v2227 = vpop.f32.mrb[0].mxu0
        %v2228 = vadd.f32 %v2187, %v2227
        %v2229 = vpop.f32.mrb[0].mxu0
        %v2230 = vpop.f32.mrb[0].mxu0
        %v2231 = vpop.f32.mrb[0].mxu0
        %2232 = vdwg.mxu0
        %v2233 = vadd.f32 %v2102, %v2228
        %v2234 = vld [vmem:[%s18] sm:$0x1]
        %v2235 = vld [vmem:[%s19] sm:$0x1]
        %v2236 = vsel %vm750, %v2233, 0.0
        %2237 = vadd.xlane.f32.xlu0 %v2236
        %v2238 = vpop.xlane.xlu0 %2237
        %v2239 = vmul.f32 %v2238, %v754
        %v2240 = vsub.f32 %v2233, %v2239
        %v2241 = vmul.f32 %v2240, %v2240
        %v2242 = vsel %vm750, %v2241, 0.0
        %2243 = vadd.xlane.f32.xlu0 %v2242
        %v2244 = vpop.xlane.xlu0 %2243
        %v2245 = vmul.f32 %v2244, %v754
        %v2246 = vadd.f32 %v2245, 1e-12
        %v2247 = vrsqrt.pop %v2246
        %v2248 = vmul.f32 %v2240, %v2247
        %v2250 = vlaneseq
        %v2251 = vshrl.u32 %v2250, 7
        %v2252 = vsub.s32 0, %v2251
        %v2253 = vrot.slane %v2234, %v2252
        %v2255 = vmul.f32 %v2248, %v2253
        %v2257 = vlaneseq
        %v2258 = vshrl.u32 %v2257, 7
        %v2259 = vsub.s32 0, %v2258
        %v2260 = vrot.slane %v2235, %v2259
        %v2262 = vadd.f32 %v2255, %v2260
        %s2263 = scalar_lea.vmem %s4, 128
        %v2264 = vld [vmem:[%s2263] sm:$0xff]
        %v2265 = vld [vmem:[%s2263 + $0x8] sm:$0xff]
        %v2266 = vld [vmem:[%s2263 + $0x10] sm:$0xff]
        %v2267 = vld [vmem:[%s2263 + $0x18] sm:$0xff]
        %v2268 = vld [vmem:[%s2263 + $0x20] sm:$0xff]
        %v2269 = vld [vmem:[%s2263 + $0x28] sm:$0xff]
        %v2270 = vld [vmem:[%s2263 + $0x30] sm:$0xff]
        %v2271 = vld [vmem:[%s2263 + $0x38] sm:$0xff]
        %v2272 = vld [vmem:[%s2263 + $0x40] sm:$0xff]
        %v2273 = vld [vmem:[%s2263 + $0x48] sm:$0xff]
        %v2274 = vld [vmem:[%s2263 + $0x50] sm:$0xff]
        %v2275 = vld [vmem:[%s2263 + $0x58] sm:$0xff]
        %v2276 = vld [vmem:[%s2263 + $0x60] sm:$0xff]
        %v2277 = vld [vmem:[%s2263 + $0x68] sm:$0xff]
        %v2278 = vld [vmem:[%s2263 + $0x70] sm:$0xff]
        %v2279 = vld [vmem:[%s2263 + $0x78] sm:$0xff]
        %v2280 = vpack.c.bf16 %v2262, %v2262
        %v2281 = vpack.c.bf16 %v2265, %v2264
        %v2282 = vpack.c.bf16 %v2267, %v2266
        %v2283 = vpack.c.bf16 %v2269, %v2268
        %v2284 = vpack.c.bf16 %v2271, %v2270
        %v2285 = vpack.c.bf16 %v2273, %v2272
        %v2286 = vpack.c.bf16 %v2275, %v2274
        %v2287 = vpack.c.bf16 %v2277, %v2276
        %v2288 = vpack.c.bf16 %v2279, %v2278
        %s2289 = scalar_lea.vmem %s5, 4
        %v2290 = vld [vmem:[%s2289] sm:$0x1]
        %v2291 = vld [vmem:[%s2289 + $0x1] sm:$0x1]
        %v2292 = vld [vmem:[%s2289 + $0x2] sm:$0x1]
        %v2293 = vld [vmem:[%s2289 + $0x3] sm:$0x1]
        %v2298 = vlaneseq
        %v2299 = vshrl.u32 %v2298, 7
        %v2300 = vsub.s32 0, %v2299
        %v2301 = vrot.slane %v2290, %v2300
        %v2302 = vlaneseq
        %v2303 = vshrl.u32 %v2302, 7
        %v2304 = vsub.s32 0, %v2303
        %v2305 = vrot.slane %v2291, %v2304
        %v2306 = vlaneseq
        %v2307 = vshrl.u32 %v2306, 7
        %v2308 = vsub.s32 0, %v2307
        %v2309 = vrot.slane %v2292, %v2308
        %v2310 = vlaneseq
        %v2311 = vshrl.u32 %v2310, 7
        %v2312 = vsub.s32 0, %v2311
        %v2313 = vrot.slane %v2293, %v2312
        %v2319 = vsel %vm750, %v2280, 0
        %2321 = vmatprep.subr.bf16.mxu0 0
        %2322 = vmatpush1.bf16.msra.mxu0 %v2281
        %2323 = vmatprep.subr.bf16.mxu0 0
        %2324 = vmatpush1.bf16.msra.mxu0 %v2282
        %2325 = vmatprep.subr.bf16.mxu0 0
        %2326 = vmatpush1.bf16.msra.mxu0 0
        %2327 = vmatprep.subr.bf16.mxu0 0
        %2328 = vmatpush1.bf16.msra.mxu0 0
        %2329 = vmatprep.subr.bf16.mxu0 0
        %2330 = vmatpush1.bf16.msra.mxu0 0
        %2331 = vmatprep.subr.bf16.mxu0 0
        %2332 = vmatpush1.bf16.msra.mxu0 0
        %2333 = vmatprep.subr.bf16.mxu0 0
        %2334 = vmatpush1.bf16.msra.mxu0 0
        %2335 = vmatprep.subr.bf16.mxu0 0
        %2336 = vmatpush1.bf16.msra.mxu0 0
        %2337 = vmatprep.subr.bf16.mxu0 0
        %2338 = vmatpush1.bf16.msra.mxu0 0
        %2339 = vmatprep.subr.bf16.mxu0 0
        %2340 = vmatpush1.bf16.msra.mxu0 0
        %2341 = vmatprep.subr.bf16.mxu0 0
        %2342 = vmatpush1.bf16.msra.mxu0 0
        %2343 = vmatprep.subr.bf16.mxu0 0
        %2344 = vmatpush1.bf16.msra.mxu0 0
        %2345 = vmatprep.subr.bf16.mxu0 0
        %2346 = vmatpush1.bf16.msra.mxu0 0
        %2347 = vmatprep.subr.bf16.mxu0 0
        %2348 = vmatpush1.bf16.msra.mxu0 0
        %2349 = vmatprep.subr.bf16.mxu0 0
        %2350 = vmatpush1.bf16.msra.mxu0 0
        %2351 = vmatprep.subr.bf16.mxu0 0
        %2352 = vmatpush1.bf16.msra.mxu0 0
        %2353 = vmatprep.mubr.bf16.mxu0 0
        %2354 = vmatmul.mubr.bf16.gmra.mrb[0].mxu0 %v2319
        %v2355 = vpop.f32.mrb[0].mxu0
        %v2356 = vadd.f32 %v2301, %v2355
        %v2357 = vpop.f32.mrb[0].mxu0
        %v2358 = vpop.f32.mrb[0].mxu0
        %v2359 = vpop.f32.mrb[0].mxu0
        %2360 = vdwg.mxu0
        %2361 = vmatprep.subr.bf16.mxu0 0
        %2362 = vmatpush1.bf16.msra.mxu0 %v2283
        %2363 = vmatprep.subr.bf16.mxu0 0
        %2364 = vmatpush1.bf16.msra.mxu0 %v2284
        %2365 = vmatprep.subr.bf16.mxu0 0
        %2366 = vmatpush1.bf16.msra.mxu0 0
        %2367 = vmatprep.subr.bf16.mxu0 0
        %2368 = vmatpush1.bf16.msra.mxu0 0
        %2369 = vmatprep.subr.bf16.mxu0 0
        %2370 = vmatpush1.bf16.msra.mxu0 0
        %2371 = vmatprep.subr.bf16.mxu0 0
        %2372 = vmatpush1.bf16.msra.mxu0 0
        %2373 = vmatprep.subr.bf16.mxu0 0
        %2374 = vmatpush1.bf16.msra.mxu0 0
        %2375 = vmatprep.subr.bf16.mxu0 0
        %2376 = vmatpush1.bf16.msra.mxu0 0
        %2377 = vmatprep.subr.bf16.mxu0 0
        %2378 = vmatpush1.bf16.msra.mxu0 0
        %2379 = vmatprep.subr.bf16.mxu0 0
        %2380 = vmatpush1.bf16.msra.mxu0 0
        %2381 = vmatprep.subr.bf16.mxu0 0
        %2382 = vmatpush1.bf16.msra.mxu0 0
        %2383 = vmatprep.subr.bf16.mxu0 0
        %2384 = vmatpush1.bf16.msra.mxu0 0
        %2385 = vmatprep.subr.bf16.mxu0 0
        %2386 = vmatpush1.bf16.msra.mxu0 0
        %2387 = vmatprep.subr.bf16.mxu0 0
        %2388 = vmatpush1.bf16.msra.mxu0 0
        %2389 = vmatprep.subr.bf16.mxu0 0
        %2390 = vmatpush1.bf16.msra.mxu0 0
        %2391 = vmatprep.subr.bf16.mxu0 0
        %2392 = vmatpush1.bf16.msra.mxu0 0
        %2393 = vmatprep.mubr.bf16.mxu0 0
        %2394 = vmatmul.mubr.bf16.gmra.mrb[0].mxu0 %v2319
        %v2395 = vpop.f32.mrb[0].mxu0
        %v2396 = vadd.f32 %v2305, %v2395
        %v2397 = vpop.f32.mrb[0].mxu0
        %v2398 = vpop.f32.mrb[0].mxu0
        %v2399 = vpop.f32.mrb[0].mxu0
        %2400 = vdwg.mxu0
        %2401 = vmatprep.subr.bf16.mxu0 0
        %2402 = vmatpush1.bf16.msra.mxu0 %v2285
        %2403 = vmatprep.subr.bf16.mxu0 0
        %2404 = vmatpush1.bf16.msra.mxu0 %v2286
        %2405 = vmatprep.subr.bf16.mxu0 0
        %2406 = vmatpush1.bf16.msra.mxu0 0
        %2407 = vmatprep.subr.bf16.mxu0 0
        %2408 = vmatpush1.bf16.msra.mxu0 0
        %2409 = vmatprep.subr.bf16.mxu0 0
        %2410 = vmatpush1.bf16.msra.mxu0 0
        %2411 = vmatprep.subr.bf16.mxu0 0
        %2412 = vmatpush1.bf16.msra.mxu0 0
        %2413 = vmatprep.subr.bf16.mxu0 0
        %2414 = vmatpush1.bf16.msra.mxu0 0
        %2415 = vmatprep.subr.bf16.mxu0 0
        %2416 = vmatpush1.bf16.msra.mxu0 0
        %2417 = vmatprep.subr.bf16.mxu0 0
        %2418 = vmatpush1.bf16.msra.mxu0 0
        %2419 = vmatprep.subr.bf16.mxu0 0
        %2420 = vmatpush1.bf16.msra.mxu0 0
        %2421 = vmatprep.subr.bf16.mxu0 0
        %2422 = vmatpush1.bf16.msra.mxu0 0
        %2423 = vmatprep.subr.bf16.mxu0 0
        %2424 = vmatpush1.bf16.msra.mxu0 0
        %2425 = vmatprep.subr.bf16.mxu0 0
        %2426 = vmatpush1.bf16.msra.mxu0 0
        %2427 = vmatprep.subr.bf16.mxu0 0
        %2428 = vmatpush1.bf16.msra.mxu0 0
        %2429 = vmatprep.subr.bf16.mxu0 0
        %2430 = vmatpush1.bf16.msra.mxu0 0
        %2431 = vmatprep.subr.bf16.mxu0 0
        %2432 = vmatpush1.bf16.msra.mxu0 0
        %2433 = vmatprep.mubr.bf16.mxu0 0
        %2434 = vmatmul.mubr.bf16.gmra.mrb[0].mxu0 %v2319
        %v2435 = vpop.f32.mrb[0].mxu0
        %v2436 = vadd.f32 %v2309, %v2435
        %v2437 = vpop.f32.mrb[0].mxu0
        %v2438 = vpop.f32.mrb[0].mxu0
        %v2439 = vpop.f32.mrb[0].mxu0
        %2440 = vdwg.mxu0
        %2441 = vmatprep.subr.bf16.mxu0 0
        %2442 = vmatpush1.bf16.msra.mxu0 %v2287
        %2443 = vmatprep.subr.bf16.mxu0 0
        %2444 = vmatpush1.bf16.msra.mxu0 %v2288
        %2445 = vmatprep.subr.bf16.mxu0 0
        %2446 = vmatpush1.bf16.msra.mxu0 0
        %2447 = vmatprep.subr.bf16.mxu0 0
        %2448 = vmatpush1.bf16.msra.mxu0 0
        %2449 = vmatprep.subr.bf16.mxu0 0
        %2450 = vmatpush1.bf16.msra.mxu0 0
        %2451 = vmatprep.subr.bf16.mxu0 0
        %2452 = vmatpush1.bf16.msra.mxu0 0
        %2453 = vmatprep.subr.bf16.mxu0 0
        %2454 = vmatpush1.bf16.msra.mxu0 0
        %2455 = vmatprep.subr.bf16.mxu0 0
        %2456 = vmatpush1.bf16.msra.mxu0 0
        %2457 = vmatprep.subr.bf16.mxu0 0
        %2458 = vmatpush1.bf16.msra.mxu0 0
        %2459 = vmatprep.subr.bf16.mxu0 0
        %2460 = vmatpush1.bf16.msra.mxu0 0
        %2461 = vmatprep.subr.bf16.mxu0 0
        %2462 = vmatpush1.bf16.msra.mxu0 0
        %2463 = vmatprep.subr.bf16.mxu0 0
        %2464 = vmatpush1.bf16.msra.mxu0 0
        %2465 = vmatprep.subr.bf16.mxu0 0
        %2466 = vmatpush1.bf16.msra.mxu0 0
        %2467 = vmatprep.subr.bf16.mxu0 0
        %2468 = vmatpush1.bf16.msra.mxu0 0
        %2469 = vmatprep.subr.bf16.mxu0 0
        %2470 = vmatpush1.bf16.msra.mxu0 0
        %2471 = vmatprep.subr.bf16.mxu0 0
        %2472 = vmatpush1.bf16.msra.mxu0 0
        %2473 = vmatprep.mubr.bf16.mxu0 0
        %2474 = vmatmul.mubr.bf16.gmra.mrb[0].mxu0 %v2319
        %v2475 = vpop.f32.mrb[0].mxu0
        %v2476 = vadd.f32 %v2313, %v2475
        %v2477 = vpop.f32.mrb[0].mxu0
        %v2478 = vpop.f32.mrb[0].mxu0
        %v2479 = vpop.f32.mrb[0].mxu0
        %2480 = vdwg.mxu0
        %s2481 = scalar_lea.vmem %s6, 128
        %v2482 = vld [vmem:[%s2481] sm:$0xff]
        %v2483 = vld [vmem:[%s2481 + $0x8] sm:$0xff]
        %v2484 = vld [vmem:[%s2481 + $0x10] sm:$0xff]
        %v2485 = vld [vmem:[%s2481 + $0x18] sm:$0xff]
        %v2486 = vld [vmem:[%s2481 + $0x20] sm:$0xff]
        %v2487 = vld [vmem:[%s2481 + $0x28] sm:$0xff]
        %v2488 = vld [vmem:[%s2481 + $0x30] sm:$0xff]
        %v2489 = vld [vmem:[%s2481 + $0x38] sm:$0xff]
        %v2490 = vld [vmem:[%s2481 + $0x40] sm:$0xff]
        %v2491 = vld [vmem:[%s2481 + $0x48] sm:$0xff]
        %v2492 = vld [vmem:[%s2481 + $0x50] sm:$0xff]
        %v2493 = vld [vmem:[%s2481 + $0x58] sm:$0xff]
        %v2494 = vld [vmem:[%s2481 + $0x60] sm:$0xff]
        %v2495 = vld [vmem:[%s2481 + $0x68] sm:$0xff]
        %v2496 = vld [vmem:[%s2481 + $0x70] sm:$0xff]
        %v2497 = vld [vmem:[%s2481 + $0x78] sm:$0xff]
        %v2498 = vpack.c.bf16 %v2483, %v2482
        %v2499 = vpack.c.bf16 %v2485, %v2484
        %v2500 = vpack.c.bf16 %v2487, %v2486
        %v2501 = vpack.c.bf16 %v2489, %v2488
        %v2502 = vpack.c.bf16 %v2491, %v2490
        %v2503 = vpack.c.bf16 %v2493, %v2492
        %v2504 = vpack.c.bf16 %v2495, %v2494
        %v2505 = vpack.c.bf16 %v2497, %v2496
        %s2506 = scalar_lea.vmem %s7, 4
        %v2507 = vld [vmem:[%s2506] sm:$0x1]
        %v2508 = vld [vmem:[%s2506 + $0x1] sm:$0x1]
        %v2509 = vld [vmem:[%s2506 + $0x2] sm:$0x1]
        %v2510 = vld [vmem:[%s2506 + $0x3] sm:$0x1]
        %v2515 = vlaneseq
        %v2516 = vshrl.u32 %v2515, 7
        %v2517 = vsub.s32 0, %v2516
        %v2518 = vrot.slane %v2507, %v2517
        %v2519 = vlaneseq
        %v2520 = vshrl.u32 %v2519, 7
        %v2521 = vsub.s32 0, %v2520
        %v2522 = vrot.slane %v2508, %v2521
        %v2523 = vlaneseq
        %v2524 = vshrl.u32 %v2523, 7
        %v2525 = vsub.s32 0, %v2524
        %v2526 = vrot.slane %v2509, %v2525
        %v2527 = vlaneseq
        %v2528 = vshrl.u32 %v2527, 7
        %v2529 = vsub.s32 0, %v2528
        %v2530 = vrot.slane %v2510, %v2529
        %2535 = vmatprep.subr.bf16.mxu0 0
        %2536 = vmatpush1.bf16.msra.mxu0 %v2498
        %2537 = vmatprep.subr.bf16.mxu0 0
        %2538 = vmatpush1.bf16.msra.mxu0 %v2499
        %2539 = vmatprep.subr.bf16.mxu0 0
        %2540 = vmatpush1.bf16.msra.mxu0 0
        %2541 = vmatprep.subr.bf16.mxu0 0
        %2542 = vmatpush1.bf16.msra.mxu0 0
        %2543 = vmatprep.subr.bf16.mxu0 0
        %2544 = vmatpush1.bf16.msra.mxu0 0
        %2545 = vmatprep.subr.bf16.mxu0 0
        %2546 = vmatpush1.bf16.msra.mxu0 0
        %2547 = vmatprep.subr.bf16.mxu0 0
        %2548 = vmatpush1.bf16.msra.mxu0 0
        %2549 = vmatprep.subr.bf16.mxu0 0
        %2550 = vmatpush1.bf16.msra.mxu0 0
        %2551 = vmatprep.subr.bf16.mxu0 0
        %2552 = vmatpush1.bf16.msra.mxu0 0
        %2553 = vmatprep.subr.bf16.mxu0 0
        %2554 = vmatpush1.bf16.msra.mxu0 0
        %2555 = vmatprep.subr.bf16.mxu0 0
        %2556 = vmatpush1.bf16.msra.mxu0 0
        %2557 = vmatprep.subr.bf16.mxu0 0
        %2558 = vmatpush1.bf16.msra.mxu0 0
        %2559 = vmatprep.subr.bf16.mxu0 0
        %2560 = vmatpush1.bf16.msra.mxu0 0
        %2561 = vmatprep.subr.bf16.mxu0 0
        %2562 = vmatpush1.bf16.msra.mxu0 0
        %2563 = vmatprep.subr.bf16.mxu0 0
        %2564 = vmatpush1.bf16.msra.mxu0 0
        %2565 = vmatprep.subr.bf16.mxu0 0
        %2566 = vmatpush1.bf16.msra.mxu0 0
        %2567 = vmatprep.mubr.bf16.mxu0 0
        %2568 = vmatmul.mubr.bf16.gmra.mrb[0].mxu0 %v2319
        %v2569 = vpop.f32.mrb[0].mxu0
        %v2570 = vadd.f32 %v2518, %v2569
        %v2571 = vpop.f32.mrb[0].mxu0
        %v2572 = vpop.f32.mrb[0].mxu0
        %v2573 = vpop.f32.mrb[0].mxu0
        %2574 = vdwg.mxu0
        %2575 = vmatprep.subr.bf16.mxu0 0
        %2576 = vmatpush1.bf16.msra.mxu0 %v2500
        %2577 = vmatprep.subr.bf16.mxu0 0
        %2578 = vmatpush1.bf16.msra.mxu0 %v2501
        %2579 = vmatprep.subr.bf16.mxu0 0
        %2580 = vmatpush1.bf16.msra.mxu0 0
        %2581 = vmatprep.subr.bf16.mxu0 0
        %2582 = vmatpush1.bf16.msra.mxu0 0
        %2583 = vmatprep.subr.bf16.mxu0 0
        %2584 = vmatpush1.bf16.msra.mxu0 0
        %2585 = vmatprep.subr.bf16.mxu0 0
        %2586 = vmatpush1.bf16.msra.mxu0 0
        %2587 = vmatprep.subr.bf16.mxu0 0
        %2588 = vmatpush1.bf16.msra.mxu0 0
        %2589 = vmatprep.subr.bf16.mxu0 0
        %2590 = vmatpush1.bf16.msra.mxu0 0
        %2591 = vmatprep.subr.bf16.mxu0 0
        %2592 = vmatpush1.bf16.msra.mxu0 0
        %2593 = vmatprep.subr.bf16.mxu0 0
        %2594 = vmatpush1.bf16.msra.mxu0 0
        %2595 = vmatprep.subr.bf16.mxu0 0
        %2596 = vmatpush1.bf16.msra.mxu0 0
        %2597 = vmatprep.subr.bf16.mxu0 0
        %2598 = vmatpush1.bf16.msra.mxu0 0
        %2599 = vmatprep.subr.bf16.mxu0 0
        %2600 = vmatpush1.bf16.msra.mxu0 0
        %2601 = vmatprep.subr.bf16.mxu0 0
        %2602 = vmatpush1.bf16.msra.mxu0 0
        %2603 = vmatprep.subr.bf16.mxu0 0
        %2604 = vmatpush1.bf16.msra.mxu0 0
        %2605 = vmatprep.subr.bf16.mxu0 0
        %2606 = vmatpush1.bf16.msra.mxu0 0
        %2607 = vmatprep.mubr.bf16.mxu0 0
        %2608 = vmatmul.mubr.bf16.gmra.mrb[0].mxu0 %v2319
        %v2609 = vpop.f32.mrb[0].mxu0
        %v2610 = vadd.f32 %v2522, %v2609
        %v2611 = vpop.f32.mrb[0].mxu0
        %v2612 = vpop.f32.mrb[0].mxu0
        %v2613 = vpop.f32.mrb[0].mxu0
        %2614 = vdwg.mxu0
        %2615 = vmatprep.subr.bf16.mxu0 0
        %2616 = vmatpush1.bf16.msra.mxu0 %v2502
        %2617 = vmatprep.subr.bf16.mxu0 0
        %2618 = vmatpush1.bf16.msra.mxu0 %v2503
        %2619 = vmatprep.subr.bf16.mxu0 0
        %2620 = vmatpush1.bf16.msra.mxu0 0
        %2621 = vmatprep.subr.bf16.mxu0 0
        %2622 = vmatpush1.bf16.msra.mxu0 0
        %2623 = vmatprep.subr.bf16.mxu0 0
        %2624 = vmatpush1.bf16.msra.mxu0 0
        %2625 = vmatprep.subr.bf16.mxu0 0
        %2626 = vmatpush1.bf16.msra.mxu0 0
        %2627 = vmatprep.subr.bf16.mxu0 0
        %2628 = vmatpush1.bf16.msra.mxu0 0
        %2629 = vmatprep.subr.bf16.mxu0 0
        %2630 = vmatpush1.bf16.msra.mxu0 0
        %2631 = vmatprep.subr.bf16.mxu0 0
        %2632 = vmatpush1.bf16.msra.mxu0 0
        %2633 = vmatprep.subr.bf16.mxu0 0
        %2634 = vmatpush1.bf16.msra.mxu0 0
        %2635 = vmatprep.subr.bf16.mxu0 0
        %2636 = vmatpush1.bf16.msra.mxu0 0
        %2637 = vmatprep.subr.bf16.mxu0 0
        %2638 = vmatpush1.bf16.msra.mxu0 0
        %2639 = vmatprep.subr.bf16.mxu0 0
        %2640 = vmatpush1.bf16.msra.mxu0 0
        %2641 = vmatprep.subr.bf16.mxu0 0
        %2642 = vmatpush1.bf16.msra.mxu0 0
        %2643 = vmatprep.subr.bf16.mxu0 0
        %2644 = vmatpush1.bf16.msra.mxu0 0
        %2645 = vmatprep.subr.bf16.mxu0 0
        %2646 = vmatpush1.bf16.msra.mxu0 0
        %2647 = vmatprep.mubr.bf16.mxu0 0
        %2648 = vmatmul.mubr.bf16.gmra.mrb[0].mxu0 %v2319
        %v2649 = vpop.f32.mrb[0].mxu0
        %v2650 = vadd.f32 %v2526, %v2649
        %v2651 = vpop.f32.mrb[0].mxu0
        %v2652 = vpop.f32.mrb[0].mxu0
        %v2653 = vpop.f32.mrb[0].mxu0
        %2654 = vdwg.mxu0
        %2655 = vmatprep.subr.bf16.mxu0 0
        %2656 = vmatpush1.bf16.msra.mxu0 %v2504
        %2657 = vmatprep.subr.bf16.mxu0 0
        %2658 = vmatpush1.bf16.msra.mxu0 %v2505
        %2659 = vmatprep.subr.bf16.mxu0 0
        %2660 = vmatpush1.bf16.msra.mxu0 0
        %2661 = vmatprep.subr.bf16.mxu0 0
        %2662 = vmatpush1.bf16.msra.mxu0 0
        %2663 = vmatprep.subr.bf16.mxu0 0
        %2664 = vmatpush1.bf16.msra.mxu0 0
        %2665 = vmatprep.subr.bf16.mxu0 0
        %2666 = vmatpush1.bf16.msra.mxu0 0
        %2667 = vmatprep.subr.bf16.mxu0 0
        %2668 = vmatpush1.bf16.msra.mxu0 0
        %2669 = vmatprep.subr.bf16.mxu0 0
        %2670 = vmatpush1.bf16.msra.mxu0 0
        %2671 = vmatprep.subr.bf16.mxu0 0
        %2672 = vmatpush1.bf16.msra.mxu0 0
        %2673 = vmatprep.subr.bf16.mxu0 0
        %2674 = vmatpush1.bf16.msra.mxu0 0
        %2675 = vmatprep.subr.bf16.mxu0 0
        %2676 = vmatpush1.bf16.msra.mxu0 0
        %2677 = vmatprep.subr.bf16.mxu0 0
        %2678 = vmatpush1.bf16.msra.mxu0 0
        %2679 = vmatprep.subr.bf16.mxu0 0
        %2680 = vmatpush1.bf16.msra.mxu0 0
        %2681 = vmatprep.subr.bf16.mxu0 0
        %2682 = vmatpush1.bf16.msra.mxu0 0
        %2683 = vmatprep.subr.bf16.mxu0 0
        %2684 = vmatpush1.bf16.msra.mxu0 0
        %2685 = vmatprep.subr.bf16.mxu0 0
        %2686 = vmatpush1.bf16.msra.mxu0 0
        %2687 = vmatprep.mubr.bf16.mxu0 0
        %2688 = vmatmul.mubr.bf16.gmra.mrb[0].mxu0 %v2319
        %v2689 = vpop.f32.mrb[0].mxu0
        %v2690 = vadd.f32 %v2530, %v2689
        %v2691 = vpop.f32.mrb[0].mxu0
        %v2692 = vpop.f32.mrb[0].mxu0
        %v2693 = vpop.f32.mrb[0].mxu0
        %2694 = vdwg.mxu0
        %s2695 = scalar_lea.vmem %s8, 128
        %v2696 = vld [vmem:[%s2695] sm:$0xff]
        %v2697 = vld [vmem:[%s2695 + $0x8] sm:$0xff]
        %v2698 = vld [vmem:[%s2695 + $0x10] sm:$0xff]
        %v2699 = vld [vmem:[%s2695 + $0x18] sm:$0xff]
        %v2700 = vld [vmem:[%s2695 + $0x20] sm:$0xff]
        %v2701 = vld [vmem:[%s2695 + $0x28] sm:$0xff]
        %v2702 = vld [vmem:[%s2695 + $0x30] sm:$0xff]
        %v2703 = vld [vmem:[%s2695 + $0x38] sm:$0xff]
        %v2704 = vld [vmem:[%s2695 + $0x40] sm:$0xff]
        %v2705 = vld [vmem:[%s2695 + $0x48] sm:$0xff]
        %v2706 = vld [vmem:[%s2695 + $0x50] sm:$0xff]
        %v2707 = vld [vmem:[%s2695 + $0x58] sm:$0xff]
        %v2708 = vld [vmem:[%s2695 + $0x60] sm:$0xff]
        %v2709 = vld [vmem:[%s2695 + $0x68] sm:$0xff]
        %v2710 = vld [vmem:[%s2695 + $0x70] sm:$0xff]
        %v2711 = vld [vmem:[%s2695 + $0x78] sm:$0xff]
        %v2712 = vpack.c.bf16 %v2697, %v2696
        %v2713 = vpack.c.bf16 %v2699, %v2698
        %v2714 = vpack.c.bf16 %v2701, %v2700
        %v2715 = vpack.c.bf16 %v2703, %v2702
        %v2716 = vpack.c.bf16 %v2705, %v2704
        %v2717 = vpack.c.bf16 %v2707, %v2706
        %v2718 = vpack.c.bf16 %v2709, %v2708
        %v2719 = vpack.c.bf16 %v2711, %v2710
        %s2720 = scalar_lea.vmem %s9, 4
        %v2721 = vld [vmem:[%s2720] sm:$0x1]
        %v2722 = vld [vmem:[%s2720 + $0x1] sm:$0x1]
        %v2723 = vld [vmem:[%s2720 + $0x2] sm:$0x1]
        %v2724 = vld [vmem:[%s2720 + $0x3] sm:$0x1]
        %v2729 = vlaneseq
        %v2730 = vshrl.u32 %v2729, 7
        %v2731 = vsub.s32 0, %v2730
        %v2732 = vrot.slane %v2721, %v2731
        %v2733 = vlaneseq
        %v2734 = vshrl.u32 %v2733, 7
        %v2735 = vsub.s32 0, %v2734
        %v2736 = vrot.slane %v2722, %v2735
        %v2737 = vlaneseq
        %v2738 = vshrl.u32 %v2737, 7
        %v2739 = vsub.s32 0, %v2738
        %v2740 = vrot.slane %v2723, %v2739
        %v2741 = vlaneseq
        %v2742 = vshrl.u32 %v2741, 7
        %v2743 = vsub.s32 0, %v2742
        %v2744 = vrot.slane %v2724, %v2743
        %2749 = vmatprep.subr.bf16.mxu0 0
        %2750 = vmatpush1.bf16.msra.mxu0 %v2712
        %2751 = vmatprep.subr.bf16.mxu0 0
        %2752 = vmatpush1.bf16.msra.mxu0 %v2713
        %2753 = vmatprep.subr.bf16.mxu0 0
        %2754 = vmatpush1.bf16.msra.mxu0 0
        %2755 = vmatprep.subr.bf16.mxu0 0
        %2756 = vmatpush1.bf16.msra.mxu0 0
        %2757 = vmatprep.subr.bf16.mxu0 0
        %2758 = vmatpush1.bf16.msra.mxu0 0
        %2759 = vmatprep.subr.bf16.mxu0 0
        %2760 = vmatpush1.bf16.msra.mxu0 0
        %2761 = vmatprep.subr.bf16.mxu0 0
        %2762 = vmatpush1.bf16.msra.mxu0 0
        %2763 = vmatprep.subr.bf16.mxu0 0
        %2764 = vmatpush1.bf16.msra.mxu0 0
        %2765 = vmatprep.subr.bf16.mxu0 0
        %2766 = vmatpush1.bf16.msra.mxu0 0
        %2767 = vmatprep.subr.bf16.mxu0 0
        %2768 = vmatpush1.bf16.msra.mxu0 0
        %2769 = vmatprep.subr.bf16.mxu0 0
        %2770 = vmatpush1.bf16.msra.mxu0 0
        %2771 = vmatprep.subr.bf16.mxu0 0
        %2772 = vmatpush1.bf16.msra.mxu0 0
        %2773 = vmatprep.subr.bf16.mxu0 0
        %2774 = vmatpush1.bf16.msra.mxu0 0
        %2775 = vmatprep.subr.bf16.mxu0 0
        %2776 = vmatpush1.bf16.msra.mxu0 0
        %2777 = vmatprep.subr.bf16.mxu0 0
        %2778 = vmatpush1.bf16.msra.mxu0 0
        %2779 = vmatprep.subr.bf16.mxu0 0
        %2780 = vmatpush1.bf16.msra.mxu0 0
        %2781 = vmatprep.mubr.bf16.mxu0 0
        %2782 = vmatmul.mubr.bf16.gmra.mrb[0].mxu0 %v2319
        %v2783 = vpop.f32.mrb[0].mxu0
        %v2784 = vadd.f32 %v2732, %v2783
        %v2785 = vpop.f32.mrb[0].mxu0
        %v2786 = vpop.f32.mrb[0].mxu0
        %v2787 = vpop.f32.mrb[0].mxu0
        %2788 = vdwg.mxu0
        %2789 = vmatprep.subr.bf16.mxu0 0
        %2790 = vmatpush1.bf16.msra.mxu0 %v2714
        %2791 = vmatprep.subr.bf16.mxu0 0
        %2792 = vmatpush1.bf16.msra.mxu0 %v2715
        %2793 = vmatprep.subr.bf16.mxu0 0
        %2794 = vmatpush1.bf16.msra.mxu0 0
        %2795 = vmatprep.subr.bf16.mxu0 0
        %2796 = vmatpush1.bf16.msra.mxu0 0
        %2797 = vmatprep.subr.bf16.mxu0 0
        %2798 = vmatpush1.bf16.msra.mxu0 0
        %2799 = vmatprep.subr.bf16.mxu0 0
        %2800 = vmatpush1.bf16.msra.mxu0 0
        %2801 = vmatprep.subr.bf16.mxu0 0
        %2802 = vmatpush1.bf16.msra.mxu0 0
        %2803 = vmatprep.subr.bf16.mxu0 0
        %2804 = vmatpush1.bf16.msra.mxu0 0
        %2805 = vmatprep.subr.bf16.mxu0 0
        %2806 = vmatpush1.bf16.msra.mxu0 0
        %2807 = vmatprep.subr.bf16.mxu0 0
        %2808 = vmatpush1.bf16.msra.mxu0 0
        %2809 = vmatprep.subr.bf16.mxu0 0
        %2810 = vmatpush1.bf16.msra.mxu0 0
        %2811 = vmatprep.subr.bf16.mxu0 0
        %2812 = vmatpush1.bf16.msra.mxu0 0
        %2813 = vmatprep.subr.bf16.mxu0 0
        %2814 = vmatpush1.bf16.msra.mxu0 0
        %2815 = vmatprep.subr.bf16.mxu0 0
        %2816 = vmatpush1.bf16.msra.mxu0 0
        %2817 = vmatprep.subr.bf16.mxu0 0
        %2818 = vmatpush1.bf16.msra.mxu0 0
        %2819 = vmatprep.subr.bf16.mxu0 0
        %2820 = vmatpush1.bf16.msra.mxu0 0
        %2821 = vmatprep.mubr.bf16.mxu0 0
        %2822 = vmatmul.mubr.bf16.gmra.mrb[0].mxu0 %v2319
        %v2823 = vpop.f32.mrb[0].mxu0
        %v2824 = vadd.f32 %v2736, %v2823
        %v2825 = vpop.f32.mrb[0].mxu0
        %v2826 = vpop.f32.mrb[0].mxu0
        %v2827 = vpop.f32.mrb[0].mxu0
        %2828 = vdwg.mxu0
        %2829 = vmatprep.subr.bf16.mxu0 0
        %2830 = vmatpush1.bf16.msra.mxu0 %v2716
        %2831 = vmatprep.subr.bf16.mxu0 0
        %2832 = vmatpush1.bf16.msra.mxu0 %v2717
        %2833 = vmatprep.subr.bf16.mxu0 0
        %2834 = vmatpush1.bf16.msra.mxu0 0
        %2835 = vmatprep.subr.bf16.mxu0 0
        %2836 = vmatpush1.bf16.msra.mxu0 0
        %2837 = vmatprep.subr.bf16.mxu0 0
        %2838 = vmatpush1.bf16.msra.mxu0 0
        %2839 = vmatprep.subr.bf16.mxu0 0
        %2840 = vmatpush1.bf16.msra.mxu0 0
        %2841 = vmatprep.subr.bf16.mxu0 0
        %2842 = vmatpush1.bf16.msra.mxu0 0
        %2843 = vmatprep.subr.bf16.mxu0 0
        %2844 = vmatpush1.bf16.msra.mxu0 0
        %2845 = vmatprep.subr.bf16.mxu0 0
        %2846 = vmatpush1.bf16.msra.mxu0 0
        %2847 = vmatprep.subr.bf16.mxu0 0
        %2848 = vmatpush1.bf16.msra.mxu0 0
        %2849 = vmatprep.subr.bf16.mxu0 0
        %2850 = vmatpush1.bf16.msra.mxu0 0
        %2851 = vmatprep.subr.bf16.mxu0 0
        %2852 = vmatpush1.bf16.msra.mxu0 0
        %2853 = vmatprep.subr.bf16.mxu0 0
        %2854 = vmatpush1.bf16.msra.mxu0 0
        %2855 = vmatprep.subr.bf16.mxu0 0
        %2856 = vmatpush1.bf16.msra.mxu0 0
        %2857 = vmatprep.subr.bf16.mxu0 0
        %2858 = vmatpush1.bf16.msra.mxu0 0
        %2859 = vmatprep.subr.bf16.mxu0 0
        %2860 = vmatpush1.bf16.msra.mxu0 0
        %2861 = vmatprep.mubr.bf16.mxu0 0
        %2862 = vmatmul.mubr.bf16.gmra.mrb[0].mxu0 %v2319
        %v2863 = vpop.f32.mrb[0].mxu0
        %v2864 = vadd.f32 %v2740, %v2863
        %v2865 = vpop.f32.mrb[0].mxu0
        %v2866 = vpop.f32.mrb[0].mxu0
        %v2867 = vpop.f32.mrb[0].mxu0
        %2868 = vdwg.mxu0
        %2869 = vmatprep.subr.bf16.mxu0 0
        %2870 = vmatpush1.bf16.msra.mxu0 %v2718
        %2871 = vmatprep.subr.bf16.mxu0 0
        %2872 = vmatpush1.bf16.msra.mxu0 %v2719
        %2873 = vmatprep.subr.bf16.mxu0 0
        %2874 = vmatpush1.bf16.msra.mxu0 0
        %2875 = vmatprep.subr.bf16.mxu0 0
        %2876 = vmatpush1.bf16.msra.mxu0 0
        %2877 = vmatprep.subr.bf16.mxu0 0
        %2878 = vmatpush1.bf16.msra.mxu0 0
        %2879 = vmatprep.subr.bf16.mxu0 0
        %2880 = vmatpush1.bf16.msra.mxu0 0
        %2881 = vmatprep.subr.bf16.mxu0 0
        %2882 = vmatpush1.bf16.msra.mxu0 0
        %2883 = vmatprep.subr.bf16.mxu0 0
        %2884 = vmatpush1.bf16.msra.mxu0 0
        %2885 = vmatprep.subr.bf16.mxu0 0
        %2886 = vmatpush1.bf16.msra.mxu0 0
        %2887 = vmatprep.subr.bf16.mxu0 0
        %2888 = vmatpush1.bf16.msra.mxu0 0
        %2889 = vmatprep.subr.bf16.mxu0 0
        %2890 = vmatpush1.bf16.msra.mxu0 0
        %2891 = vmatprep.subr.bf16.mxu0 0
        %2892 = vmatpush1.bf16.msra.mxu0 0
        %2893 = vmatprep.subr.bf16.mxu0 0
        %2894 = vmatpush1.bf16.msra.mxu0 0
        %2895 = vmatprep.subr.bf16.mxu0 0
        %2896 = vmatpush1.bf16.msra.mxu0 0
        %2897 = vmatprep.subr.bf16.mxu0 0
        %2898 = vmatpush1.bf16.msra.mxu0 0
        %2899 = vmatprep.subr.bf16.mxu0 0
        %2900 = vmatpush1.bf16.msra.mxu0 0
        %2901 = vmatprep.mubr.bf16.mxu0 0
        %2902 = vmatmul.mubr.bf16.gmra.mrb[0].mxu0 %v2319
        %v2903 = vpop.f32.mrb[0].mxu0
        %v2904 = vadd.f32 %v2744, %v2903
        %v2905 = vpop.f32.mrb[0].mxu0
        %v2906 = vpop.f32.mrb[0].mxu0
        %v2907 = vpop.f32.mrb[0].mxu0
        %2908 = vdwg.mxu0
        %v2909 = vpack.c.bf16 %v2356, %v2356
        %v2910 = vpack.c.bf16 %v2396, %v2396
        %v2911 = vpack.c.bf16 %v2436, %v2436
        %v2912 = vpack.c.bf16 %v2476, %v2476
        %v2913 = vpack.c.bf16 %v2570, %v2570
        %v2914 = vpack.c.bf16 %v2610, %v2610
        %v2915 = vpack.c.bf16 %v2650, %v2650
        %v2916 = vpack.c.bf16 %v2690, %v2690
        %v2918 = vsel %vm1430, %v2909, 0
        %v2921 = vsel %vm1430, %v2913, 0
        %2923 = vmatprep.subr.bf16.mxu0 0
        %2924 = vmatpush1.bf16.xpose.msra.mxu0 %v2921
        %2925 = vmatprep.subr.bf16.mxu0 0
        %2926 = vmatpush1.bf16.xpose.msra.mxu0 0
        %2927 = vmatprep.subr.bf16.mxu0 0
        %2928 = vmatpush1.bf16.xpose.msra.mxu0 0
        %2929 = vmatprep.subr.bf16.mxu0 0
        %2930 = vmatpush1.bf16.xpose.msra.mxu0 0
        %2931 = vmatprep.subr.bf16.mxu0 0
        %2932 = vmatpush1.bf16.xpose.msra.mxu0 0
        %2933 = vmatprep.subr.bf16.mxu0 0
        %2934 = vmatpush1.bf16.xpose.msra.mxu0 0
        %2935 = vmatprep.subr.bf16.mxu0 0
        %2936 = vmatpush1.bf16.xpose.msra.mxu0 0
        %2937 = vmatprep.subr.bf16.mxu0 0
        %2938 = vmatpush1.bf16.xpose.msra.mxu0 0
        %2939 = vmatprep.subr.bf16.mxu0 0
        %2940 = vmatpush1.bf16.xpose.msra.mxu0 0
        %2941 = vmatprep.subr.bf16.mxu0 0
        %2942 = vmatpush1.bf16.xpose.msra.mxu0 0
        %2943 = vmatprep.subr.bf16.mxu0 0
        %2944 = vmatpush1.bf16.xpose.msra.mxu0 0
        %2945 = vmatprep.subr.bf16.mxu0 0
        %2946 = vmatpush1.bf16.xpose.msra.mxu0 0
        %2947 = vmatprep.subr.bf16.mxu0 0
        %2948 = vmatpush1.bf16.xpose.msra.mxu0 0
        %2949 = vmatprep.subr.bf16.mxu0 0
        %2950 = vmatpush1.bf16.xpose.msra.mxu0 0
        %2951 = vmatprep.subr.bf16.mxu0 0
        %2952 = vmatpush1.bf16.xpose.msra.mxu0 0
        %2953 = vmatprep.subr.bf16.mxu0 0
        %2954 = vmatpush1.bf16.xpose.msra.mxu0 0
        %2955 = vmatprep.mubr.bf16.mxu0 0
        %2956 = vmatmul.mubr.bf16.gmra.mrb[0].mxu0 %v2918
        %v2957 = vpop.f32.mrb[0].mxu0
        %v2958 = vadd.f32 0.0, %v2957
        %v2959 = vpop.f32.mrb[0].mxu0
        %v2960 = vpop.f32.mrb[0].mxu0
        %v2961 = vpop.f32.mrb[0].mxu0
        %2962 = vdwg.mxu0
        %v2964 = vsel %vm1430, %v2910, 0
        %v2967 = vsel %vm1430, %v2914, 0
        %2969 = vmatprep.subr.bf16.mxu0 0
        %2970 = vmatpush1.bf16.xpose.msra.mxu0 %v2967
        %2971 = vmatprep.subr.bf16.mxu0 0
        %2972 = vmatpush1.bf16.xpose.msra.mxu0 0
        %2973 = vmatprep.subr.bf16.mxu0 0
        %2974 = vmatpush1.bf16.xpose.msra.mxu0 0
        %2975 = vmatprep.subr.bf16.mxu0 0
        %2976 = vmatpush1.bf16.xpose.msra.mxu0 0
        %2977 = vmatprep.subr.bf16.mxu0 0
        %2978 = vmatpush1.bf16.xpose.msra.mxu0 0
        %2979 = vmatprep.subr.bf16.mxu0 0
        %2980 = vmatpush1.bf16.xpose.msra.mxu0 0
        %2981 = vmatprep.subr.bf16.mxu0 0
        %2982 = vmatpush1.bf16.xpose.msra.mxu0 0
        %2983 = vmatprep.subr.bf16.mxu0 0
        %2984 = vmatpush1.bf16.xpose.msra.mxu0 0
        %2985 = vmatprep.subr.bf16.mxu0 0
        %2986 = vmatpush1.bf16.xpose.msra.mxu0 0
        %2987 = vmatprep.subr.bf16.mxu0 0
        %2988 = vmatpush1.bf16.xpose.msra.mxu0 0
        %2989 = vmatprep.subr.bf16.mxu0 0
        %2990 = vmatpush1.bf16.xpose.msra.mxu0 0
        %2991 = vmatprep.subr.bf16.mxu0 0
        %2992 = vmatpush1.bf16.xpose.msra.mxu0 0
        %2993 = vmatprep.subr.bf16.mxu0 0
        %2994 = vmatpush1.bf16.xpose.msra.mxu0 0
        %2995 = vmatprep.subr.bf16.mxu0 0
        %2996 = vmatpush1.bf16.xpose.msra.mxu0 0
        %2997 = vmatprep.subr.bf16.mxu0 0
        %2998 = vmatpush1.bf16.xpose.msra.mxu0 0
        %2999 = vmatprep.subr.bf16.mxu0 0
        %3000 = vmatpush1.bf16.xpose.msra.mxu0 0
        %3001 = vmatprep.mubr.bf16.mxu0 0
        %3002 = vmatmul.mubr.bf16.gmra.mrb[0].mxu0 %v2964
        %v3003 = vpop.f32.mrb[0].mxu0
        %v3004 = vadd.f32 0.0, %v3003
        %v3005 = vpop.f32.mrb[0].mxu0
        %v3006 = vpop.f32.mrb[0].mxu0
        %v3007 = vpop.f32.mrb[0].mxu0
        %3008 = vdwg.mxu0
        %v3010 = vsel %vm1430, %v2911, 0
        %v3013 = vsel %vm1430, %v2915, 0
        %3015 = vmatprep.subr.bf16.mxu0 0
        %3016 = vmatpush1.bf16.xpose.msra.mxu0 %v3013
        %3017 = vmatprep.subr.bf16.mxu0 0
        %3018 = vmatpush1.bf16.xpose.msra.mxu0 0
        %3019 = vmatprep.subr.bf16.mxu0 0
        %3020 = vmatpush1.bf16.xpose.msra.mxu0 0
        %3021 = vmatprep.subr.bf16.mxu0 0
        %3022 = vmatpush1.bf16.xpose.msra.mxu0 0
        %3023 = vmatprep.subr.bf16.mxu0 0
        %3024 = vmatpush1.bf16.xpose.msra.mxu0 0
        %3025 = vmatprep.subr.bf16.mxu0 0
        %3026 = vmatpush1.bf16.xpose.msra.mxu0 0
        %3027 = vmatprep.subr.bf16.mxu0 0
        %3028 = vmatpush1.bf16.xpose.msra.mxu0 0
        %3029 = vmatprep.subr.bf16.mxu0 0
        %3030 = vmatpush1.bf16.xpose.msra.mxu0 0
        %3031 = vmatprep.subr.bf16.mxu0 0
        %3032 = vmatpush1.bf16.xpose.msra.mxu0 0
        %3033 = vmatprep.subr.bf16.mxu0 0
        %3034 = vmatpush1.bf16.xpose.msra.mxu0 0
        %3035 = vmatprep.subr.bf16.mxu0 0
        %3036 = vmatpush1.bf16.xpose.msra.mxu0 0
        %3037 = vmatprep.subr.bf16.mxu0 0
        %3038 = vmatpush1.bf16.xpose.msra.mxu0 0
        %3039 = vmatprep.subr.bf16.mxu0 0
        %3040 = vmatpush1.bf16.xpose.msra.mxu0 0
        %3041 = vmatprep.subr.bf16.mxu0 0
        %3042 = vmatpush1.bf16.xpose.msra.mxu0 0
        %3043 = vmatprep.subr.bf16.mxu0 0
        %3044 = vmatpush1.bf16.xpose.msra.mxu0 0
        %3045 = vmatprep.subr.bf16.mxu0 0
        %3046 = vmatpush1.bf16.xpose.msra.mxu0 0
        %3047 = vmatprep.mubr.bf16.mxu0 0
        %3048 = vmatmul.mubr.bf16.gmra.mrb[0].mxu0 %v3010
        %v3049 = vpop.f32.mrb[0].mxu0
        %v3050 = vadd.f32 0.0, %v3049
        %v3051 = vpop.f32.mrb[0].mxu0
        %v3052 = vpop.f32.mrb[0].mxu0
        %v3053 = vpop.f32.mrb[0].mxu0
        %3054 = vdwg.mxu0
        %v3056 = vsel %vm1430, %v2912, 0
        %v3059 = vsel %vm1430, %v2916, 0
        %3061 = vmatprep.subr.bf16.mxu0 0
        %3062 = vmatpush1.bf16.xpose.msra.mxu0 %v3059
        %3063 = vmatprep.subr.bf16.mxu0 0
        %3064 = vmatpush1.bf16.xpose.msra.mxu0 0
        %3065 = vmatprep.subr.bf16.mxu0 0
        %3066 = vmatpush1.bf16.xpose.msra.mxu0 0
        %3067 = vmatprep.subr.bf16.mxu0 0
        %3068 = vmatpush1.bf16.xpose.msra.mxu0 0
        %3069 = vmatprep.subr.bf16.mxu0 0
        %3070 = vmatpush1.bf16.xpose.msra.mxu0 0
        %3071 = vmatprep.subr.bf16.mxu0 0
        %3072 = vmatpush1.bf16.xpose.msra.mxu0 0
        %3073 = vmatprep.subr.bf16.mxu0 0
        %3074 = vmatpush1.bf16.xpose.msra.mxu0 0
        %3075 = vmatprep.subr.bf16.mxu0 0
        %3076 = vmatpush1.bf16.xpose.msra.mxu0 0
        %3077 = vmatprep.subr.bf16.mxu0 0
        %3078 = vmatpush1.bf16.xpose.msra.mxu0 0
        %3079 = vmatprep.subr.bf16.mxu0 0
        %3080 = vmatpush1.bf16.xpose.msra.mxu0 0
        %3081 = vmatprep.subr.bf16.mxu0 0
        %3082 = vmatpush1.bf16.xpose.msra.mxu0 0
        %3083 = vmatprep.subr.bf16.mxu0 0
        %3084 = vmatpush1.bf16.xpose.msra.mxu0 0
        %3085 = vmatprep.subr.bf16.mxu0 0
        %3086 = vmatpush1.bf16.xpose.msra.mxu0 0
        %3087 = vmatprep.subr.bf16.mxu0 0
        %3088 = vmatpush1.bf16.xpose.msra.mxu0 0
        %3089 = vmatprep.subr.bf16.mxu0 0
        %3090 = vmatpush1.bf16.xpose.msra.mxu0 0
        %3091 = vmatprep.subr.bf16.mxu0 0
        %3092 = vmatpush1.bf16.xpose.msra.mxu0 0
        %3093 = vmatprep.mubr.bf16.mxu0 0
        %3094 = vmatmul.mubr.bf16.gmra.mrb[0].mxu0 %v3056
        %v3095 = vpop.f32.mrb[0].mxu0
        %v3096 = vadd.f32 0.0, %v3095
        %v3097 = vpop.f32.mrb[0].mxu0
        %v3098 = vpop.f32.mrb[0].mxu0
        %v3099 = vpop.f32.mrb[0].mxu0
        %3100 = vdwg.mxu0
        %v3101 = vmul.f32 %v2958, 0.35355338
        %v3102 = vmul.f32 %v3004, 0.35355338
        %v3103 = vmul.f32 %v3050, 0.35355338
        %v3104 = vmul.f32 %v3096, 0.35355338
        %v3105 = vadd.f32 %v3101, %v1623
        %v3106 = vadd.f32 %v3102, %v1623
        %v3107 = vadd.f32 %v3103, %v1623
        %v3108 = vadd.f32 %v3104, %v1623
        %v3109 = vsel %vm1430, %v3105, -inf
        %3110 = vmax.xlane.f32.xlu0 %v3109
        %v3111 = vpop.xlane.xlu0 %3110
        %v3112 = vsel %vm1430, %v3106, -inf
        %3113 = vmax.xlane.f32.xlu0 %v3112
        %v3114 = vpop.xlane.xlu0 %3113
        %v3115 = vsel %vm1430, %v3107, -inf
        %3116 = vmax.xlane.f32.xlu0 %v3115
        %v3117 = vpop.xlane.xlu0 %3116
        %v3118 = vsel %vm1430, %v3108, -inf
        %3119 = vmax.xlane.f32.xlu0 %v3118
        %v3120 = vpop.xlane.xlu0 %3119
        %v3121 = vsub.f32 %v3105, %v3111
        %v3122 = vsub.f32 %v3106, %v3114
        %v3123 = vsub.f32 %v3107, %v3117
        %v3124 = vsub.f32 %v3108, %v3120
        %v3125 = vmul.f32 %v3121, 1.442695
        %v3126 = vpow.pop %v3125
        %v3127 = vmul.f32 %v3122, 1.442695
        %v3128 = vpow.pop %v3127
        %v3129 = vmul.f32 %v3123, 1.442695
        %v3130 = vpow.pop %v3129
        %v3131 = vmul.f32 %v3124, 1.442695
        %v3132 = vpow.pop %v3131
        %v3133 = vsel %vm1430, %v3126, 0.0
        %3134 = vadd.xlane.f32.xlu0 %v3133
        %v3135 = vpop.xlane.xlu0 %3134
        %v3136 = vsel %vm1430, %v3128, 0.0
        %3137 = vadd.xlane.f32.xlu0 %v3136
        %v3138 = vpop.xlane.xlu0 %3137
        %v3139 = vsel %vm1430, %v3130, 0.0
        %3140 = vadd.xlane.f32.xlu0 %v3139
        %v3141 = vpop.xlane.xlu0 %3140
        %v3142 = vsel %vm1430, %v3132, 0.0
        %3143 = vadd.xlane.f32.xlu0 %v3142
        %v3144 = vpop.xlane.xlu0 %3143
        %v3145 = vrcp.pop %v3135
        %v3146 = vrcp.pop %v3138
        %v3147 = vrcp.pop %v3141
        %v3148 = vrcp.pop %v3144
        %v3149 = vmul.f32 %v3126, %v3145
        %v3150 = vmul.f32 %v3128, %v3146
        %v3151 = vmul.f32 %v3130, %v3147
        %v3152 = vmul.f32 %v3132, %v3148
        %v3153 = vpack.c.bf16 %v3149, %v3149
        %v3154 = vpack.c.bf16 %v3150, %v3150
        %v3155 = vpack.c.bf16 %v3151, %v3151
        %v3156 = vpack.c.bf16 %v3152, %v3152
        %v3157 = vpack.c.bf16 %v2784, %v2784
        %v3158 = vpack.c.bf16 %v2824, %v2824
        %v3159 = vpack.c.bf16 %v2864, %v2864
        %v3160 = vpack.c.bf16 %v2904, %v2904
        %v3162 = vsel %vm1430, %v3153, 0
        %v3165 = vsel %vm1684, %v3157, 0
        %3167 = vmatprep.subr.bf16.mxu0 0
        %3168 = vmatpush1.bf16.msra.mxu0 %v3165
        %3169 = vmatprep.subr.bf16.mxu0 0
        %3170 = vmatpush1.bf16.msra.mxu0 0
        %3171 = vmatprep.subr.bf16.mxu0 0
        %3172 = vmatpush1.bf16.msra.mxu0 0
        %3173 = vmatprep.subr.bf16.mxu0 0
        %3174 = vmatpush1.bf16.msra.mxu0 0
        %3175 = vmatprep.subr.bf16.mxu0 0
        %3176 = vmatpush1.bf16.msra.mxu0 0
        %3177 = vmatprep.subr.bf16.mxu0 0
        %3178 = vmatpush1.bf16.msra.mxu0 0
        %3179 = vmatprep.subr.bf16.mxu0 0
        %3180 = vmatpush1.bf16.msra.mxu0 0
        %3181 = vmatprep.subr.bf16.mxu0 0
        %3182 = vmatpush1.bf16.msra.mxu0 0
        %3183 = vmatprep.subr.bf16.mxu0 0
        %3184 = vmatpush1.bf16.msra.mxu0 0
        %3185 = vmatprep.subr.bf16.mxu0 0
        %3186 = vmatpush1.bf16.msra.mxu0 0
        %3187 = vmatprep.subr.bf16.mxu0 0
        %3188 = vmatpush1.bf16.msra.mxu0 0
        %3189 = vmatprep.subr.bf16.mxu0 0
        %3190 = vmatpush1.bf16.msra.mxu0 0
        %3191 = vmatprep.subr.bf16.mxu0 0
        %3192 = vmatpush1.bf16.msra.mxu0 0
        %3193 = vmatprep.subr.bf16.mxu0 0
        %3194 = vmatpush1.bf16.msra.mxu0 0
        %3195 = vmatprep.subr.bf16.mxu0 0
        %3196 = vmatpush1.bf16.msra.mxu0 0
        %3197 = vmatprep.subr.bf16.mxu0 0
        %3198 = vmatpush1.bf16.msra.mxu0 0
        %3199 = vmatprep.mubr.bf16.mxu0 0
        %3200 = vmatmul.mubr.bf16.gmra.mrb[0].mxu0 %v3162
        %v3201 = vpop.f32.mrb[0].mxu0
        %v3202 = vadd.f32 0.0, %v3201
        %v3203 = vpop.f32.mrb[0].mxu0
        %v3204 = vpop.f32.mrb[0].mxu0
        %v3205 = vpop.f32.mrb[0].mxu0
        %3206 = vdwg.mxu0
        %v3208 = vsel %vm1430, %v3154, 0
        %v3211 = vsel %vm1684, %v3158, 0
        %3213 = vmatprep.subr.bf16.mxu0 0
        %3214 = vmatpush1.bf16.msra.mxu0 %v3211
        %3215 = vmatprep.subr.bf16.mxu0 0
        %3216 = vmatpush1.bf16.msra.mxu0 0
        %3217 = vmatprep.subr.bf16.mxu0 0
        %3218 = vmatpush1.bf16.msra.mxu0 0
        %3219 = vmatprep.subr.bf16.mxu0 0
        %3220 = vmatpush1.bf16.msra.mxu0 0
        %3221 = vmatprep.subr.bf16.mxu0 0
        %3222 = vmatpush1.bf16.msra.mxu0 0
        %3223 = vmatprep.subr.bf16.mxu0 0
        %3224 = vmatpush1.bf16.msra.mxu0 0
        %3225 = vmatprep.subr.bf16.mxu0 0
        %3226 = vmatpush1.bf16.msra.mxu0 0
        %3227 = vmatprep.subr.bf16.mxu0 0
        %3228 = vmatpush1.bf16.msra.mxu0 0
        %3229 = vmatprep.subr.bf16.mxu0 0
        %3230 = vmatpush1.bf16.msra.mxu0 0
        %3231 = vmatprep.subr.bf16.mxu0 0
        %3232 = vmatpush1.bf16.msra.mxu0 0
        %3233 = vmatprep.subr.bf16.mxu0 0
        %3234 = vmatpush1.bf16.msra.mxu0 0
        %3235 = vmatprep.subr.bf16.mxu0 0
        %3236 = vmatpush1.bf16.msra.mxu0 0
        %3237 = vmatprep.subr.bf16.mxu0 0
        %3238 = vmatpush1.bf16.msra.mxu0 0
        %3239 = vmatprep.subr.bf16.mxu0 0
        %3240 = vmatpush1.bf16.msra.mxu0 0
        %3241 = vmatprep.subr.bf16.mxu0 0
        %3242 = vmatpush1.bf16.msra.mxu0 0
        %3243 = vmatprep.subr.bf16.mxu0 0
        %3244 = vmatpush1.bf16.msra.mxu0 0
        %3245 = vmatprep.mubr.bf16.mxu0 0
        %3246 = vmatmul.mubr.bf16.gmra.mrb[0].mxu0 %v3208
        %v3247 = vpop.f32.mrb[0].mxu0
        %v3248 = vadd.f32 0.0, %v3247
        %v3249 = vpop.f32.mrb[0].mxu0
        %v3250 = vpop.f32.mrb[0].mxu0
        %v3251 = vpop.f32.mrb[0].mxu0
        %3252 = vdwg.mxu0
        %v3254 = vsel %vm1430, %v3155, 0
        %v3257 = vsel %vm1684, %v3159, 0
        %3259 = vmatprep.subr.bf16.mxu0 0
        %3260 = vmatpush1.bf16.msra.mxu0 %v3257
        %3261 = vmatprep.subr.bf16.mxu0 0
        %3262 = vmatpush1.bf16.msra.mxu0 0
        %3263 = vmatprep.subr.bf16.mxu0 0
        %3264 = vmatpush1.bf16.msra.mxu0 0
        %3265 = vmatprep.subr.bf16.mxu0 0
        %3266 = vmatpush1.bf16.msra.mxu0 0
        %3267 = vmatprep.subr.bf16.mxu0 0
        %3268 = vmatpush1.bf16.msra.mxu0 0
        %3269 = vmatprep.subr.bf16.mxu0 0
        %3270 = vmatpush1.bf16.msra.mxu0 0
        %3271 = vmatprep.subr.bf16.mxu0 0
        %3272 = vmatpush1.bf16.msra.mxu0 0
        %3273 = vmatprep.subr.bf16.mxu0 0
        %3274 = vmatpush1.bf16.msra.mxu0 0
        %3275 = vmatprep.subr.bf16.mxu0 0
        %3276 = vmatpush1.bf16.msra.mxu0 0
        %3277 = vmatprep.subr.bf16.mxu0 0
        %3278 = vmatpush1.bf16.msra.mxu0 0
        %3279 = vmatprep.subr.bf16.mxu0 0
        %3280 = vmatpush1.bf16.msra.mxu0 0
        %3281 = vmatprep.subr.bf16.mxu0 0
        %3282 = vmatpush1.bf16.msra.mxu0 0
        %3283 = vmatprep.subr.bf16.mxu0 0
        %3284 = vmatpush1.bf16.msra.mxu0 0
        %3285 = vmatprep.subr.bf16.mxu0 0
        %3286 = vmatpush1.bf16.msra.mxu0 0
        %3287 = vmatprep.subr.bf16.mxu0 0
        %3288 = vmatpush1.bf16.msra.mxu0 0
        %3289 = vmatprep.subr.bf16.mxu0 0
        %3290 = vmatpush1.bf16.msra.mxu0 0
        %3291 = vmatprep.mubr.bf16.mxu0 0
        %3292 = vmatmul.mubr.bf16.gmra.mrb[0].mxu0 %v3254
        %v3293 = vpop.f32.mrb[0].mxu0
        %v3294 = vadd.f32 0.0, %v3293
        %v3295 = vpop.f32.mrb[0].mxu0
        %v3296 = vpop.f32.mrb[0].mxu0
        %v3297 = vpop.f32.mrb[0].mxu0
        %3298 = vdwg.mxu0
        %v3300 = vsel %vm1430, %v3156, 0
        %v3303 = vsel %vm1684, %v3160, 0
        %3305 = vmatprep.subr.bf16.mxu0 0
        %3306 = vmatpush1.bf16.msra.mxu0 %v3303
        %3307 = vmatprep.subr.bf16.mxu0 0
        %3308 = vmatpush1.bf16.msra.mxu0 0
        %3309 = vmatprep.subr.bf16.mxu0 0
        %3310 = vmatpush1.bf16.msra.mxu0 0
        %3311 = vmatprep.subr.bf16.mxu0 0
        %3312 = vmatpush1.bf16.msra.mxu0 0
        %3313 = vmatprep.subr.bf16.mxu0 0
        %3314 = vmatpush1.bf16.msra.mxu0 0
        %3315 = vmatprep.subr.bf16.mxu0 0
        %3316 = vmatpush1.bf16.msra.mxu0 0
        %3317 = vmatprep.subr.bf16.mxu0 0
        %3318 = vmatpush1.bf16.msra.mxu0 0
        %3319 = vmatprep.subr.bf16.mxu0 0
        %3320 = vmatpush1.bf16.msra.mxu0 0
        %3321 = vmatprep.subr.bf16.mxu0 0
        %3322 = vmatpush1.bf16.msra.mxu0 0
        %3323 = vmatprep.subr.bf16.mxu0 0
        %3324 = vmatpush1.bf16.msra.mxu0 0
        %3325 = vmatprep.subr.bf16.mxu0 0
        %3326 = vmatpush1.bf16.msra.mxu0 0
        %3327 = vmatprep.subr.bf16.mxu0 0
        %3328 = vmatpush1.bf16.msra.mxu0 0
        %3329 = vmatprep.subr.bf16.mxu0 0
        %3330 = vmatpush1.bf16.msra.mxu0 0
        %3331 = vmatprep.subr.bf16.mxu0 0
        %3332 = vmatpush1.bf16.msra.mxu0 0
        %3333 = vmatprep.subr.bf16.mxu0 0
        %3334 = vmatpush1.bf16.msra.mxu0 0
        %3335 = vmatprep.subr.bf16.mxu0 0
        %3336 = vmatpush1.bf16.msra.mxu0 0
        %3337 = vmatprep.mubr.bf16.mxu0 0
        %3338 = vmatmul.mubr.bf16.gmra.mrb[0].mxu0 %v3300
        %v3339 = vpop.f32.mrb[0].mxu0
        %v3340 = vadd.f32 0.0, %v3339
        %v3341 = vpop.f32.mrb[0].mxu0
        %v3342 = vpop.f32.mrb[0].mxu0
        %v3343 = vpop.f32.mrb[0].mxu0
        %3344 = vdwg.mxu0
        %s3345 = scalar_lea.vmem %s10, 32
        %v3346 = vld [vmem:[%s3345] sm:$0xff]
        %v3347 = vld [vmem:[%s3345 + $0x8] sm:$0xff]
        %v3348 = vld [vmem:[%s3345 + $0x10] sm:$0xff]
        %v3349 = vld [vmem:[%s3345 + $0x18] sm:$0xff]
        %v3350 = vpack.c.bf16 %v3202, %v3202
        %v3351 = vpack.c.bf16 %v3248, %v3248
        %v3352 = vpack.c.bf16 %v3294, %v3294
        %v3353 = vpack.c.bf16 %v3340, %v3340
        %v3354 = vpack.c.bf16 %v3346, %v3346
        %v3355 = vpack.c.bf16 %v3347, %v3347
        %v3356 = vpack.c.bf16 %v3348, %v3348
        %v3357 = vpack.c.bf16 %v3349, %v3349
        %v3359 = vsel %vm1430, %v3350, 0
        %v3362 = vsel %vm1684, %v3354, 0
        %3364 = vmatprep.subr.bf16.mxu0 0
        %3365 = vmatpush1.bf16.msra.mxu0 %v3362
        %3366 = vmatprep.subr.bf16.mxu0 0
        %3367 = vmatpush1.bf16.msra.mxu0 0
        %3368 = vmatprep.subr.bf16.mxu0 0
        %3369 = vmatpush1.bf16.msra.mxu0 0
        %3370 = vmatprep.subr.bf16.mxu0 0
        %3371 = vmatpush1.bf16.msra.mxu0 0
        %3372 = vmatprep.subr.bf16.mxu0 0
        %3373 = vmatpush1.bf16.msra.mxu0 0
        %3374 = vmatprep.subr.bf16.mxu0 0
        %3375 = vmatpush1.bf16.msra.mxu0 0
        %3376 = vmatprep.subr.bf16.mxu0 0
        %3377 = vmatpush1.bf16.msra.mxu0 0
        %3378 = vmatprep.subr.bf16.mxu0 0
        %3379 = vmatpush1.bf16.msra.mxu0 0
        %3380 = vmatprep.subr.bf16.mxu0 0
        %3381 = vmatpush1.bf16.msra.mxu0 0
        %3382 = vmatprep.subr.bf16.mxu0 0
        %3383 = vmatpush1.bf16.msra.mxu0 0
        %3384 = vmatprep.subr.bf16.mxu0 0
        %3385 = vmatpush1.bf16.msra.mxu0 0
        %3386 = vmatprep.subr.bf16.mxu0 0
        %3387 = vmatpush1.bf16.msra.mxu0 0
        %3388 = vmatprep.subr.bf16.mxu0 0
        %3389 = vmatpush1.bf16.msra.mxu0 0
        %3390 = vmatprep.subr.bf16.mxu0 0
        %3391 = vmatpush1.bf16.msra.mxu0 0
        %3392 = vmatprep.subr.bf16.mxu0 0
        %3393 = vmatpush1.bf16.msra.mxu0 0
        %3394 = vmatprep.subr.bf16.mxu0 0
        %3395 = vmatpush1.bf16.msra.mxu0 0
        %3396 = vmatprep.mubr.bf16.mxu0 0
        %3397 = vmatmul.mubr.bf16.gmra.mrb[0].mxu0 %v3359
        %v3398 = vpop.f32.mrb[0].mxu0
        %v3399 = vadd.f32 0.0, %v3398
        %v3400 = vpop.f32.mrb[0].mxu0
        %v3401 = vpop.f32.mrb[0].mxu0
        %v3402 = vpop.f32.mrb[0].mxu0
        %3403 = vdwg.mxu0
        %v3405 = vsel %vm1430, %v3351, 0
        %v3408 = vsel %vm1684, %v3355, 0
        %3410 = vmatprep.subr.bf16.mxu0 0
        %3411 = vmatpush1.bf16.msra.mxu0 %v3408
        %3412 = vmatprep.subr.bf16.mxu0 0
        %3413 = vmatpush1.bf16.msra.mxu0 0
        %3414 = vmatprep.subr.bf16.mxu0 0
        %3415 = vmatpush1.bf16.msra.mxu0 0
        %3416 = vmatprep.subr.bf16.mxu0 0
        %3417 = vmatpush1.bf16.msra.mxu0 0
        %3418 = vmatprep.subr.bf16.mxu0 0
        %3419 = vmatpush1.bf16.msra.mxu0 0
        %3420 = vmatprep.subr.bf16.mxu0 0
        %3421 = vmatpush1.bf16.msra.mxu0 0
        %3422 = vmatprep.subr.bf16.mxu0 0
        %3423 = vmatpush1.bf16.msra.mxu0 0
        %3424 = vmatprep.subr.bf16.mxu0 0
        %3425 = vmatpush1.bf16.msra.mxu0 0
        %3426 = vmatprep.subr.bf16.mxu0 0
        %3427 = vmatpush1.bf16.msra.mxu0 0
        %3428 = vmatprep.subr.bf16.mxu0 0
        %3429 = vmatpush1.bf16.msra.mxu0 0
        %3430 = vmatprep.subr.bf16.mxu0 0
        %3431 = vmatpush1.bf16.msra.mxu0 0
        %3432 = vmatprep.subr.bf16.mxu0 0
        %3433 = vmatpush1.bf16.msra.mxu0 0
        %3434 = vmatprep.subr.bf16.mxu0 0
        %3435 = vmatpush1.bf16.msra.mxu0 0
        %3436 = vmatprep.subr.bf16.mxu0 0
        %3437 = vmatpush1.bf16.msra.mxu0 0
        %3438 = vmatprep.subr.bf16.mxu0 0
        %3439 = vmatpush1.bf16.msra.mxu0 0
        %3440 = vmatprep.subr.bf16.mxu0 0
        %3441 = vmatpush1.bf16.msra.mxu0 0
        %3442 = vmatprep.mubr.bf16.mxu0 0
        %3443 = vmatmul.mubr.bf16.gmra.mrb[0].mxu0 %v3405
        %v3444 = vpop.f32.mrb[0].mxu0
        %v3445 = vadd.f32 0.0, %v3444
        %v3446 = vpop.f32.mrb[0].mxu0
        %v3447 = vpop.f32.mrb[0].mxu0
        %v3448 = vpop.f32.mrb[0].mxu0
        %3449 = vdwg.mxu0
        %v3451 = vsel %vm1430, %v3352, 0
        %v3454 = vsel %vm1684, %v3356, 0
        %3456 = vmatprep.subr.bf16.mxu0 0
        %3457 = vmatpush1.bf16.msra.mxu0 %v3454
        %3458 = vmatprep.subr.bf16.mxu0 0
        %3459 = vmatpush1.bf16.msra.mxu0 0
        %3460 = vmatprep.subr.bf16.mxu0 0
        %3461 = vmatpush1.bf16.msra.mxu0 0
        %3462 = vmatprep.subr.bf16.mxu0 0
        %3463 = vmatpush1.bf16.msra.mxu0 0
        %3464 = vmatprep.subr.bf16.mxu0 0
        %3465 = vmatpush1.bf16.msra.mxu0 0
        %3466 = vmatprep.subr.bf16.mxu0 0
        %3467 = vmatpush1.bf16.msra.mxu0 0
        %3468 = vmatprep.subr.bf16.mxu0 0
        %3469 = vmatpush1.bf16.msra.mxu0 0
        %3470 = vmatprep.subr.bf16.mxu0 0
        %3471 = vmatpush1.bf16.msra.mxu0 0
        %3472 = vmatprep.subr.bf16.mxu0 0
        %3473 = vmatpush1.bf16.msra.mxu0 0
        %3474 = vmatprep.subr.bf16.mxu0 0
        %3475 = vmatpush1.bf16.msra.mxu0 0
        %3476 = vmatprep.subr.bf16.mxu0 0
        %3477 = vmatpush1.bf16.msra.mxu0 0
        %3478 = vmatprep.subr.bf16.mxu0 0
        %3479 = vmatpush1.bf16.msra.mxu0 0
        %3480 = vmatprep.subr.bf16.mxu0 0
        %3481 = vmatpush1.bf16.msra.mxu0 0
        %3482 = vmatprep.subr.bf16.mxu0 0
        %3483 = vmatpush1.bf16.msra.mxu0 0
        %3484 = vmatprep.subr.bf16.mxu0 0
        %3485 = vmatpush1.bf16.msra.mxu0 0
        %3486 = vmatprep.subr.bf16.mxu0 0
        %3487 = vmatpush1.bf16.msra.mxu0 0
        %3488 = vmatprep.mubr.bf16.mxu0 0
        %3489 = vmatmul.mubr.bf16.gmra.mrb[0].mxu0 %v3451
        %v3490 = vpop.f32.mrb[0].mxu0
        %v3491 = vadd.f32 0.0, %v3490
        %v3492 = vpop.f32.mrb[0].mxu0
        %v3493 = vpop.f32.mrb[0].mxu0
        %v3494 = vpop.f32.mrb[0].mxu0
        %3495 = vdwg.mxu0
        %v3497 = vsel %vm1430, %v3353, 0
        %v3500 = vsel %vm1684, %v3357, 0
        %3502 = vmatprep.subr.bf16.mxu0 0
        %3503 = vmatpush1.bf16.msra.mxu0 %v3500
        %3504 = vmatprep.subr.bf16.mxu0 0
        %3505 = vmatpush1.bf16.msra.mxu0 0
        %3506 = vmatprep.subr.bf16.mxu0 0
        %3507 = vmatpush1.bf16.msra.mxu0 0
        %3508 = vmatprep.subr.bf16.mxu0 0
        %3509 = vmatpush1.bf16.msra.mxu0 0
        %3510 = vmatprep.subr.bf16.mxu0 0
        %3511 = vmatpush1.bf16.msra.mxu0 0
        %3512 = vmatprep.subr.bf16.mxu0 0
        %3513 = vmatpush1.bf16.msra.mxu0 0
        %3514 = vmatprep.subr.bf16.mxu0 0
        %3515 = vmatpush1.bf16.msra.mxu0 0
        %3516 = vmatprep.subr.bf16.mxu0 0
        %3517 = vmatpush1.bf16.msra.mxu0 0
        %3518 = vmatprep.subr.bf16.mxu0 0
        %3519 = vmatpush1.bf16.msra.mxu0 0
        %3520 = vmatprep.subr.bf16.mxu0 0
        %3521 = vmatpush1.bf16.msra.mxu0 0
        %3522 = vmatprep.subr.bf16.mxu0 0
        %3523 = vmatpush1.bf16.msra.mxu0 0
        %3524 = vmatprep.subr.bf16.mxu0 0
        %3525 = vmatpush1.bf16.msra.mxu0 0
        %3526 = vmatprep.subr.bf16.mxu0 0
        %3527 = vmatpush1.bf16.msra.mxu0 0
        %3528 = vmatprep.subr.bf16.mxu0 0
        %3529 = vmatpush1.bf16.msra.mxu0 0
        %3530 = vmatprep.subr.bf16.mxu0 0
        %3531 = vmatpush1.bf16.msra.mxu0 0
        %3532 = vmatprep.subr.bf16.mxu0 0
        %3533 = vmatpush1.bf16.msra.mxu0 0
        %3534 = vmatprep.mubr.bf16.mxu0 0
        %3535 = vmatmul.mubr.bf16.gmra.mrb[0].mxu0 %v3497
        %v3536 = vpop.f32.mrb[0].mxu0
        %v3537 = vadd.f32 0.0, %v3536
        %v3538 = vpop.f32.mrb[0].mxu0
        %v3539 = vpop.f32.mrb[0].mxu0
        %v3540 = vpop.f32.mrb[0].mxu0
        %3541 = vdwg.mxu0
        %v3542 = vadd.f32 %v3399, %v3445
        %v3543 = vadd.f32 %v3542, %v3491
        %v3544 = vadd.f32 %v3543, %v3537
        %s3545 = scalar_lea.vmem %s11, 1
        %v3546 = vld [vmem:[%s3545] sm:$0x1]
        %v3548 = vlaneseq
        %v3549 = vshrl.u32 %v3548, 7
        %v3550 = vsub.s32 0, %v3549
        %v3551 = vrot.slane %v3546, %v3550
        %v3553 = vadd.f32 %v3544, %v3551
        %v3554 = vadd.f32 %v2262, %v3553
        %s3555 = scalar_lea.vmem %s12, 1
        %v3556 = vld [vmem:[%s3555] sm:$0x1]
        %s3557 = scalar_lea.vmem %s13, 1
        %v3558 = vld [vmem:[%s3557] sm:$0x1]
        %v3559 = vsel %vm750, %v3554, 0.0
        %3560 = vadd.xlane.f32.xlu0 %v3559
        %v3561 = vpop.xlane.xlu0 %3560
        %v3562 = vmul.f32 %v3561, %v754
        %v3563 = vsub.f32 %v3554, %v3562
        %v3564 = vmul.f32 %v3563, %v3563
        %v3565 = vsel %vm750, %v3564, 0.0
        %3566 = vadd.xlane.f32.xlu0 %v3565
        %v3567 = vpop.xlane.xlu0 %3566
        %v3568 = vmul.f32 %v3567, %v754
        %v3569 = vadd.f32 %v3568, 1e-12
        %v3570 = vrsqrt.pop %v3569
        %v3571 = vmul.f32 %v3563, %v3570
        %v3573 = vlaneseq
        %v3574 = vshrl.u32 %v3573, 7
        %v3575 = vsub.s32 0, %v3574
        %v3576 = vrot.slane %v3556, %v3575
        %v3578 = vmul.f32 %v3571, %v3576
        %v3580 = vlaneseq
        %v3581 = vshrl.u32 %v3580, 7
        %v3582 = vsub.s32 0, %v3581
        %v3583 = vrot.slane %v3558, %v3582
        %v3585 = vadd.f32 %v3578, %v3583
        %s3586 = scalar_lea.vmem %s14, 32
        %v3587 = vld [vmem:[%s3586] sm:$0xff]
        %v3588 = vld [vmem:[%s3586 + $0x8] sm:$0xff]
        %v3589 = vld [vmem:[%s3586 + $0x10] sm:$0xff]
        %v3590 = vld [vmem:[%s3586 + $0x18] sm:$0xff]
        %v3591 = vpack.c.bf16 %v3585, %v3585
        %v3592 = vpack.c.bf16 %v3588, %v3587
        %v3593 = vpack.c.bf16 %v3590, %v3589
        %s3594 = scalar_lea.vmem %s15, 1
        %v3595 = vld [vmem:[%s3594] sm:$0x1]
        %v3597 = vlaneseq
        %v3598 = vshrl.u32 %v3597, 7
        %v3599 = vsub.s32 0, %v3598
        %v3600 = vrot.slane %v3595, %v3599
        %v3603 = vsel %vm750, %v3591, 0
        %3605 = vmatprep.subr.bf16.mxu0 0
        %3606 = vmatpush1.bf16.msra.mxu0 %v3592
        %3607 = vmatprep.subr.bf16.mxu0 0
        %3608 = vmatpush1.bf16.msra.mxu0 %v3593
        %3609 = vmatprep.subr.bf16.mxu0 0
        %3610 = vmatpush1.bf16.msra.mxu0 0
        %3611 = vmatprep.subr.bf16.mxu0 0
        %3612 = vmatpush1.bf16.msra.mxu0 0
        %3613 = vmatprep.subr.bf16.mxu0 0
        %3614 = vmatpush1.bf16.msra.mxu0 0
        %3615 = vmatprep.subr.bf16.mxu0 0
        %3616 = vmatpush1.bf16.msra.mxu0 0
        %3617 = vmatprep.subr.bf16.mxu0 0
        %3618 = vmatpush1.bf16.msra.mxu0 0
        %3619 = vmatprep.subr.bf16.mxu0 0
        %3620 = vmatpush1.bf16.msra.mxu0 0
        %3621 = vmatprep.subr.bf16.mxu0 0
        %3622 = vmatpush1.bf16.msra.mxu0 0
        %3623 = vmatprep.subr.bf16.mxu0 0
        %3624 = vmatpush1.bf16.msra.mxu0 0
        %3625 = vmatprep.subr.bf16.mxu0 0
        %3626 = vmatpush1.bf16.msra.mxu0 0
        %3627 = vmatprep.subr.bf16.mxu0 0
        %3628 = vmatpush1.bf16.msra.mxu0 0
        %3629 = vmatprep.subr.bf16.mxu0 0
        %3630 = vmatpush1.bf16.msra.mxu0 0
        %3631 = vmatprep.subr.bf16.mxu0 0
        %3632 = vmatpush1.bf16.msra.mxu0 0
        %3633 = vmatprep.subr.bf16.mxu0 0
        %3634 = vmatpush1.bf16.msra.mxu0 0
        %3635 = vmatprep.subr.bf16.mxu0 0
        %3636 = vmatpush1.bf16.msra.mxu0 0
        %3637 = vmatprep.mubr.bf16.mxu0 0
        %3638 = vmatmul.mubr.bf16.gmra.mrb[0].mxu0 %v3603
        %v3639 = vpop.f32.mrb[0].mxu0
        %v3640 = vadd.f32 %v3600, %v3639
        %v3641 = vpop.f32.mrb[0].mxu0
        %v3642 = vpop.f32.mrb[0].mxu0
        %v3643 = vpop.f32.mrb[0].mxu0
        %3644 = vdwg.mxu0
        %v3645 = vmul.f32 %v3640, %v3640
        %v3646 = vmul.f32 %v3640, %v3645
        %v3647 = vmul.f32 %v3646, 0.044715
        %v3648 = vadd.f32 %v3640, %v3647
        %v3649 = vmul.f32 %v3648, 0.7978846
        %v3650 = vtanh.pop %v3649
        %v3651 = vadd.f32 %v3650, 1.0
        %v3652 = vmul.f32 %v3651, 0.5
        %v3653 = vmul.f32 %v3640, %v3652
        %s3654 = scalar_lea.vmem %s16, 64
        %v3655 = vld [vmem:[%s3654] sm:$0xff]
        %v3656 = vld [vmem:[%s3654 + $0x8] sm:$0xff]
        %v3657 = vld [vmem:[%s3654 + $0x10] sm:$0xff]
        %v3658 = vld [vmem:[%s3654 + $0x18] sm:$0xff]
        %v3659 = vld [vmem:[%s3654 + $0x20] sm:$0xff]
        %v3660 = vld [vmem:[%s3654 + $0x28] sm:$0xff]
        %v3661 = vld [vmem:[%s3654 + $0x30] sm:$0xff]
        %v3662 = vld [vmem:[%s3654 + $0x38] sm:$0xff]
        %v3663 = vpack.c.bf16 %v3653, %v3653
        %v3664 = vpack.c.bf16 %v3656, %v3655
        %v3665 = vpack.c.bf16 %v3658, %v3657
        %v3666 = vpack.c.bf16 %v3660, %v3659
        %v3667 = vpack.c.bf16 %v3662, %v3661
        %s3668 = scalar_lea.vmem %s17, 1
        %v3669 = vld [vmem:[%s3668] sm:$0x1]
        %v3671 = vlaneseq
        %v3672 = vshrl.u32 %v3671, 7
        %v3673 = vsub.s32 0, %v3672
        %v3674 = vrot.slane %v3669, %v3673
        %v3677 = vsel %vm2189, %v3663, 0
        %3679 = vmatprep.subr.bf16.mxu0 0
        %3680 = vmatpush1.bf16.msra.mxu0 %v3664
        %3681 = vmatprep.subr.bf16.mxu0 0
        %3682 = vmatpush1.bf16.msra.mxu0 %v3665
        %3683 = vmatprep.subr.bf16.mxu0 0
        %3684 = vmatpush1.bf16.msra.mxu0 %v3666
        %3685 = vmatprep.subr.bf16.mxu0 0
        %3686 = vmatpush1.bf16.msra.mxu0 %v3667
        %3687 = vmatprep.subr.bf16.mxu0 0
        %3688 = vmatpush1.bf16.msra.mxu0 0
        %3689 = vmatprep.subr.bf16.mxu0 0
        %3690 = vmatpush1.bf16.msra.mxu0 0
        %3691 = vmatprep.subr.bf16.mxu0 0
        %3692 = vmatpush1.bf16.msra.mxu0 0
        %3693 = vmatprep.subr.bf16.mxu0 0
        %3694 = vmatpush1.bf16.msra.mxu0 0
        %3695 = vmatprep.subr.bf16.mxu0 0
        %3696 = vmatpush1.bf16.msra.mxu0 0
        %3697 = vmatprep.subr.bf16.mxu0 0
        %3698 = vmatpush1.bf16.msra.mxu0 0
        %3699 = vmatprep.subr.bf16.mxu0 0
        %3700 = vmatpush1.bf16.msra.mxu0 0
        %3701 = vmatprep.subr.bf16.mxu0 0
        %3702 = vmatpush1.bf16.msra.mxu0 0
        %3703 = vmatprep.subr.bf16.mxu0 0
        %3704 = vmatpush1.bf16.msra.mxu0 0
        %3705 = vmatprep.subr.bf16.mxu0 0
        %3706 = vmatpush1.bf16.msra.mxu0 0
        %3707 = vmatprep.subr.bf16.mxu0 0
        %3708 = vmatpush1.bf16.msra.mxu0 0
        %3709 = vmatprep.subr.bf16.mxu0 0
        %3710 = vmatpush1.bf16.msra.mxu0 0
        %3711 = vmatprep.mubr.bf16.mxu0 0
        %3712 = vmatmul.mubr.bf16.gmra.mrb[0].mxu0 %v3677
        %v3713 = vpop.f32.mrb[0].mxu0
        %v3714 = vadd.f32 %v3674, %v3713
        %v3715 = vpop.f32.mrb[0].mxu0
        %v3716 = vpop.f32.mrb[0].mxu0
        %v3717 = vpop.f32.mrb[0].mxu0
        %3718 = vdwg.mxu0
        %v3719 = vadd.f32 %v3585, %v3714
        %s3720 = scalar_lea.vmem %s18, 1
        %v3721 = vld [vmem:[%s3720] sm:$0x1]
        %s3722 = scalar_lea.vmem %s19, 1
        %v3723 = vld [vmem:[%s3722] sm:$0x1]
        %v3724 = vsel %vm750, %v3719, 0.0
        %3725 = vadd.xlane.f32.xlu0 %v3724
        %v3726 = vpop.xlane.xlu0 %3725
        %v3727 = vmul.f32 %v3726, %v754
        %v3728 = vsub.f32 %v3719, %v3727
        %v3729 = vmul.f32 %v3728, %v3728
        %v3730 = vsel %vm750, %v3729, 0.0
        %3731 = vadd.xlane.f32.xlu0 %v3730
        %v3732 = vpop.xlane.xlu0 %3731
        %v3733 = vmul.f32 %v3732, %v754
        %v3734 = vadd.f32 %v3733, 1e-12
        %v3735 = vrsqrt.pop %v3734
        %v3736 = vmul.f32 %v3728, %v3735
        %v3738 = vlaneseq
        %v3739 = vshrl.u32 %v3738, 7
        %v3740 = vsub.s32 0, %v3739
        %v3741 = vrot.slane %v3721, %v3740
        %v3743 = vmul.f32 %v3736, %v3741
        %v3745 = vlaneseq
        %v3746 = vshrl.u32 %v3745, 7
        %v3747 = vsub.s32 0, %v3746
        %v3748 = vrot.slane %v3723, %v3747
        %v3750 = vadd.f32 %v3743, %v3748
        %v3751 = vld [vmem:[%s20] sm:$0xff]
        %v3752 = vld [vmem:[%s20 + $0x8] sm:$0xff]
        %v3753 = vld [vmem:[%s20 + $0x10] sm:$0xff]
        %v3754 = vld [vmem:[%s20 + $0x18] sm:$0xff]
        %v3755 = vpack.c.bf16 %v3750, %v3750
        %v3756 = vpack.c.bf16 %v3752, %v3751
        %v3757 = vpack.c.bf16 %v3754, %v3753
        %v3758 = vld [vmem:[%s21] sm:$0x1]
        %v3760 = vsel %vm750, %v3755, 0
        %3762 = vmatprep.subr.bf16.mxu0 0
        %3763 = vmatpush1.bf16.msra.mxu0 %v3756
        %3764 = vmatprep.subr.bf16.mxu0 0
        %3765 = vmatpush1.bf16.msra.mxu0 %v3757
        %3766 = vmatprep.subr.bf16.mxu0 0
        %3767 = vmatpush1.bf16.msra.mxu0 0
        %3768 = vmatprep.subr.bf16.mxu0 0
        %3769 = vmatpush1.bf16.msra.mxu0 0
        %3770 = vmatprep.subr.bf16.mxu0 0
        %3771 = vmatpush1.bf16.msra.mxu0 0
        %3772 = vmatprep.subr.bf16.mxu0 0
        %3773 = vmatpush1.bf16.msra.mxu0 0
        %3774 = vmatprep.subr.bf16.mxu0 0
        %3775 = vmatpush1.bf16.msra.mxu0 0
        %3776 = vmatprep.subr.bf16.mxu0 0
        %3777 = vmatpush1.bf16.msra.mxu0 0
        %3778 = vmatprep.subr.bf16.mxu0 0
        %3779 = vmatpush1.bf16.msra.mxu0 0
        %3780 = vmatprep.subr.bf16.mxu0 0
        %3781 = vmatpush1.bf16.msra.mxu0 0
        %3782 = vmatprep.subr.bf16.mxu0 0
        %3783 = vmatpush1.bf16.msra.mxu0 0
        %3784 = vmatprep.subr.bf16.mxu0 0
        %3785 = vmatpush1.bf16.msra.mxu0 0
        %3786 = vmatprep.subr.bf16.mxu0 0
        %3787 = vmatpush1.bf16.msra.mxu0 0
        %3788 = vmatprep.subr.bf16.mxu0 0
        %3789 = vmatpush1.bf16.msra.mxu0 0
        %3790 = vmatprep.subr.bf16.mxu0 0
        %3791 = vmatpush1.bf16.msra.mxu0 0
        %3792 = vmatprep.subr.bf16.mxu0 0
        %3793 = vmatpush1.bf16.msra.mxu0 0
        %3794 = vmatprep.mubr.bf16.mxu0 0
        %3795 = vmatmul.mubr.bf16.gmra.mrb[0].mxu0 %v3760
        %v3796 = vpop.f32.mrb[0].mxu0
        %v3797 = vadd.f32 %v3758, %v3796
        %v3798 = vpop.f32.mrb[0].mxu0
        %v3799 = vpop.f32.mrb[0].mxu0
        %v3800 = vpop.f32.mrb[0].mxu0
        %3801 = vdwg.mxu0
        %v3802 = vtanh.pop %v3797
        %v3803 = vld [vmem:[%s22] sm:$0xff]
        %v3804 = vld [vmem:[%s22 + $0x8] sm:$0xff]
        %v3805 = vld [vmem:[%s22 + $0x10] sm:$0xff]
        %v3806 = vld [vmem:[%s22 + $0x18] sm:$0xff]
        %v3807 = vpack.c.bf16 %v3802, %v3802
        %v3808 = vpack.c.bf16 %v3804, %v3803
        %v3809 = vpack.c.bf16 %v3806, %v3805
        %v3810 = vld [vmem:[%s23] sm:$0x1]
        %v3812 = vsel %vm750, %v3807, 0
        %3814 = vmatprep.subr.bf16.mxu0 0
        %3815 = vmatpush1.bf16.msra.mxu0 %v3808
        %3816 = vmatprep.subr.bf16.mxu0 0
        %3817 = vmatpush1.bf16.msra.mxu0 %v3809
        %3818 = vmatprep.subr.bf16.mxu0 0
        %3819 = vmatpush1.bf16.msra.mxu0 0
        %3820 = vmatprep.subr.bf16.mxu0 0
        %3821 = vmatpush1.bf16.msra.mxu0 0
        %3822 = vmatprep.subr.bf16.mxu0 0
        %3823 = vmatpush1.bf16.msra.mxu0 0
        %3824 = vmatprep.subr.bf16.mxu0 0
        %3825 = vmatpush1.bf16.msra.mxu0 0
        %3826 = vmatprep.subr.bf16.mxu0 0
        %3827 = vmatpush1.bf16.msra.mxu0 0
        %3828 = vmatprep.subr.bf16.mxu0 0
        %3829 = vmatpush1.bf16.msra.mxu0 0
        %3830 = vmatprep.subr.bf16.mxu0 0
        %3831 = vmatpush1.bf16.msra.mxu0 0
        %3832 = vmatprep.subr.bf16.mxu0 0
        %3833 = vmatpush1.bf16.msra.mxu0 0
        %3834 = vmatprep.subr.bf16.mxu0 0
        %3835 = vmatpush1.bf16.msra.mxu0 0
        %3836 = vmatprep.subr.bf16.mxu0 0
        %3837 = vmatpush1.bf16.msra.mxu0 0
        %3838 = vmatprep.subr.bf16.mxu0 0
        %3839 = vmatpush1.bf16.msra.mxu0 0
        %3840 = vmatprep.subr.bf16.mxu0 0
        %3841 = vmatpush1.bf16.msra.mxu0 0
        %3842 = vmatprep.subr.bf16.mxu0 0
        %3843 = vmatpush1.bf16.msra.mxu0 0
        %3844 = vmatprep.subr.bf16.mxu0 0
        %3845 = vmatpush1.bf16.msra.mxu0 0
        %3846 = vmatprep.mubr.bf16.mxu0 0
        %3847 = vmatmul.mubr.bf16.gmra.mrb[0].mxu0 %v3812
        %v3848 = vpop.f32.mrb[0].mxu0
        %v3849 = vadd.f32 %v3810, %v3848
        %v3850 = vpop.f32.mrb[0].mxu0
        %v3851 = vpop.f32.mrb[0].mxu0
        %v3852 = vpop.f32.mrb[0].mxu0
        %3853 = vdwg.mxu0
        %3854 = vst [vmem:[%s738] sm:$0x1] %v3849
        %s3855 = sand.u32 %s560, 1
        %s3856 = scalar_lea.sflag [#allocation3], %s3855
        %s3857 = sand.u32 %s560, 1
        %s3858 = scalar_lea.vmem [#allocation2], %s3857
        // Predicated region
        $region117: #{covid_twitter_bert_classifier_forward.1} parent=115 // pred_check
          %p3859 = pneg %p570
        $region118: #{covid_twitter_bert_classifier_forward.1} parent=115 // pred_check_branch
          %3861 = sbr.rel (%p3859) target = $region120
        $region119: #{covid_twitter_bert_classifier_forward.1} parent=115 // pred_region
          %s3863 = ssub.s32 16, 16
          %3864 = vsyncadd %s3856, %s3863
          %s3865 = smul.addr %s38, 16
          %s3866 = scalar_lea.hbm %s24, %s3865
          %s3868 = sshll.u32 %s3858, 4
          %s3869 = int_to_ptr.vmem [resolvable:$true] %s3868
          %3871 = dma.vmem_to_hbm [thread:$0]  %s3869, 16, %s3866, %s3856
        $region120: #{covid_twitter_bert_classifier_forward.1} parent=115 // pred_fallthru
          _
      $region116: #{covid_twitter_bert_classifier_forward.1} parent=5 // pred_fallthru
        _
      %p3872 = scmp.le.s32.totalorder 2, %s33
      // Predicated region
      $region121: #{covid_twitter_bert_classifier_forward.1} parent=5 // pred_check
        %p3873 = pneg %p3872
      $region122: #{covid_twitter_bert_classifier_forward.1} parent=5 // pred_check_branch
        %3875 = sbr.rel (%p3873) target = $region124
      $region123: #{covid_twitter_bert_classifier_forward.1} parent=5 // pred_region
        %s3876 = ssub.s32 %s33, 2
        // Predicated region
        $region125: #{covid_twitter_bert_classifier_forward.1} parent=123 // pred_check
          %p3877 = pneg %p576
        $region126: #{covid_twitter_bert_classifier_forward.1} parent=123 // pred_check_branch
          %3879 = sbr.rel (%p3877) target = $region128
        $region127: #{covid_twitter_bert_classifier_forward.1} parent=123 // pred_region
          %s3880 = sand.u32 %s561, 1
          %s3881 = scalar_lea.sflag [#allocation3], %s3880
          %s3882 = sand.u32 %s561, 1
          %s3883 = scalar_lea.vmem [#allocation2], %s3882
          %3884 = dma.done %s3881, 16
        $region128: #{covid_twitter_bert_classifier_forward.1} parent=123 // pred_fallthru
          _
      $region124: #{covid_twitter_bert_classifier_forward.1} parent=5 // pred_fallthru
        _
    $region6: #{covid_twitter_bert_classifier_forward.1} parent=1 // loop_footer
      %s37 = sadd.s32 1, %s33
    $region7: #{covid_twitter_bert_classifier_forward.1} parent=1 // loop_footer_branch
      %32 = sbr.rel target = $region3
    $region8: #{covid_twitter_bert_classifier_forward.1} parent=1 // loop_exit
      _
    %3885 = vsyncpa [#allocation3], 1
    %s3886 = scalar_lea.sflag [#allocation3], 1
    %3887 = vsyncpa %s3886, 1

</llo_original>
